<compile_context>
chip_gen: v5e
topology: v5e:2x2
jax: 0.10.0
libtpu: 0.0.40
codegen_flags: <defaults>
</compile_context>

<pallas_src>
import functools
import re

import jax
import jax.numpy as jnp
from jax import lax
from jax.experimental import pallas as pl
from jax.experimental.pallas import tpu as pltpu


def _round_up(n, m):
    return (n + m - 1) // m * m


def _softplus(x):
    # numerically stable softplus
    return jnp.log1p(jnp.exp(-jnp.abs(x))) + jnp.maximum(x, 0.0)


def _stable_softmax(x, axis):
    m = jnp.max(x, axis=axis, keepdims=True)
    e = jnp.exp(x - m)
    return e / jnp.sum(e, axis=axis, keepdims=True)


def _tpu_generation():
    """Best-effort TPU generation (5, 6, 7, ...). Defaults to 6."""
    try:
        kind = jax.devices()[0].device_kind.lower()
    except Exception:
        return 6
    m = re.search(r"(\d+)", kind)
    return int(m.group(1)) if m else 6


def _vmem_cap_bytes(gen):
    """Per-core scoped-VMEM request ceiling, leaving compiler headroom."""
    phys = None
    try:
        phys = int(pltpu.get_tpu_info().vmem_capacity_bytes)
    except Exception:
        phys = None
    if not phys:
        phys = (64 << 20) if gen >= 7 else (128 << 20)
    # ~80% of physical (≈51 MiB on v7x), never more than 100 MiB on v5e/v6e.
    return min(int(phys * 0.8), 100 << 20)


# --------------------------------------------------------------------------
# Kernel A: beta + Sinkhorn ECR loss (batch independent, run once).
# --------------------------------------------------------------------------
def ecr_beta_kernel(topic_ref, word_ref, beta_ref, ecr_ref, *,
                    beta_temp, sinkhorn_alpha, sinkhorn_iters,
                    sinkhorn_eps, weight_loss_ecr):
    f32 = jnp.float32
    t = topic_ref[...]                                   # [K, D]
    w = word_ref[...]                                    # [V, D]
    num_topic, emb_d = t.shape
    vocab = w.shape[0]

    # pairwise squared euclidean distance (single [K,D]x[V,D] contraction).
    tw = lax.dot_general(t, w, (((1,), (1,)), ((), ())),
                         preferred_element_type=f32)     # [K, V]
    t_sq = jnp.sum(t * t, axis=1, keepdims=True)         # [K, 1]
    ones_d = jnp.ones((1, emb_d), f32)
    w_sq_row = lax.dot_general(ones_d, w * w, (((1,), (1,)), ((), ())),
                               preferred_element_type=f32)   # [1, V]
    dist = t_sq + w_sq_row - 2.0 * tw                    # [K, V]

    # beta = softmax over the topic axis; stored bf16 for the decoder matmul.
    beta = _stable_softmax(-dist / beta_temp, axis=0)
    beta_ref[...] = beta.astype(beta_ref.dtype)

    # ---- Sinkhorn optimal transport ----
    k_mat = jnp.exp(-dist * sinkhorn_alpha)              # [K, V] (kept f32)
    a_row = jnp.full((1, num_topic), 1.0 / num_topic, f32)
    b_row = jnp.full((1, vocab), 1.0 / vocab, f32)
    u0 = jnp.full((1, num_topic), 1.0 / num_topic, f32)
    v0 = jnp.zeros((1, vocab), f32)

    def body(_, carry):
        u, _v = carry
        # v = b / (K^T u); row form: b_row / (u_row @ K)
        v_new = b_row / (jnp.dot(u, k_mat, preferred_element_type=f32)
                         + sinkhorn_eps)
        # u = a / (K v);  row form: a_row / (v_row · K^T)  (transposed-RHS
        # contraction on the same k_mat -- no k_mat_t materialized).
        u_new = a_row / (lax.dot_general(v_new, k_mat,
                                         (((1,), (1,)), ((), ())),
                                         preferred_element_type=f32)
                         + sinkhorn_eps)
        return (u_new, v_new)

    # TODO(synk): reference ECR uses a data-dependent early stop (err check
    # every 50 iterations); replaced by a fixed iteration count here.
    # Fully unrolled: the loop is latency-bound (two serially dependent
    # 1-row matmuls per iteration).
    u_fin, v_fin = lax.fori_loop(0, sinkhorn_iters, body, (u0, v0),
                                 unroll=True)

    # sum_ij u_i K_ij v_j dist_ij  =  sum_j v_j * (u @ (K*dist))_j
    s = jnp.dot(u_fin, k_mat * dist, preferred_element_type=f32)     # [1, V]
    loss_ecr = jnp.sum(s * v_fin, axis=1, keepdims=True) * weight_loss_ecr
    ecr_ref[...] = loss_ecr + jnp.zeros_like(ecr_ref)    # broadcast into (8,128)
    # TODO(synk): on v7x this gridless kernel uses one TensorCore; for very
    # large vocabularies split the dist/exp/beta phase over V (2-way parallel
    # grid) and/or tile the setup with pltpu.emit_pipeline.


# --------------------------------------------------------------------------
# Kernel B: batch-tiled encoder / decoder / KL / reconstruction partials.
# --------------------------------------------------------------------------
def encoder_decoder_kernel(x_ref, w11_ref, b11_ref, w12_ref, b12_ref,
                           w2_ref, b2_ref, mu2_ref, var2_ref, beta_ref,
                           out_ref, *, num_topic, bn_eps, batch_size, tile_b,
                           use_bf16_exp):
    f32 = jnp.float32
    bf16 = jnp.bfloat16
    i = pl.program_id(0)
    x_bf = x_ref[...]                                     # [TB, V] bf16
    bn_scale = (1.0 + bn_eps) ** -0.5                     # eval-mode BatchNorm1d

    # -------- encoder (bf16 MXU inputs, f32 accumulation) --------
    h = jnp.dot(x_bf, w11_ref[...],
                preferred_element_type=f32) + b11_ref[...]
    e1 = _softplus(h)
    h = jnp.dot(e1.astype(bf16), w12_ref[...],
                preferred_element_type=f32) + b12_ref[...]
    e1 = _softplus(h)
    # fc1_dropout: identity in eval mode

    # fused mu/logvar projection: one bf16 [TB,E1] @ [E1,2K] matmul, slice.
    mulog = (jnp.dot(e1.astype(bf16), w2_ref[...],
                     preferred_element_type=f32) + b2_ref[...]) * bn_scale
    mu = mulog[:, :num_topic]
    logvar = mulog[:, num_topic:]
    # reparameterize: z = mu in eval mode
    theta = _stable_softmax(mu, axis=1)                   # [TB, K]

    # -------- KL divergence (per doc) --------
    mu2 = mu2_ref[...]                                    # [1, K]
    var2 = var2_ref[...]                                  # [1, K]
    inv_var2 = 1.0 / var2
    var = jnp.exp(logvar)
    diff = mu - mu2
    kld = 0.5 * (jnp.sum(var * inv_var2 + diff * diff * inv_var2
                         + jnp.log(var2) - logvar, axis=1, keepdims=True)
                 - float(num_topic))                      # [TB, 1]

    # -------- decoder + fused log-softmax reconstruction loss --------
    # decoder BatchNorm scale folded into theta (linear in the matmul).
    theta_s = (theta * bn_scale).astype(bf16)
    dec = jnp.dot(theta_s, beta_ref[...],
                  preferred_element_type=f32)             # [TB, V] == bn(theta@beta)
    dmax = jnp.max(dec, axis=-1, keepdims=True)
    shifted = dec - dmax
    if use_bf16_exp:
        # bf16 exp doubles EUP throughput on v6e/v7x; sum reduced in f32.
        edec = jnp.exp(shifted.astype(bf16)).astype(f32)
    else:
        edec = jnp.exp(shifted)                           # v5e: no bf16 EUP
    lse = jnp.log(jnp.sum(edec, axis=-1, keepdims=True)) + dmax
    per_doc = -jnp.sum(x_bf.astype(f32) * (dec - lse), axis=1, keepdims=True)

    # -------- mask padded rows, emit lane-packed partial sums --------
    row = i * tile_b + lax.broadcasted_iota(jnp.int32, (tile_b, 1), 0)
    valid = (row < batch_size).astype(f32)
    recon_part = jnp.sum(per_doc * valid, axis=0, keepdims=True)     # [1, 1]
    kl_part = jnp.sum(kld * valid, axis=0, keepdims=True)            # [1, 1]

    lane = lax.broadcasted_iota(jnp.int32, (8, 128), 1)
    out_ref[...] = (jnp.where(lane == 0, recon_part, 0.0)
                    + jnp.where(lane == 1, kl_part, 0.0))


# --------------------------------------------------------------------------
# VMEM budgeting helpers.
# --------------------------------------------------------------------------
def _vmem_a_bytes(V, K, D, cap):
    est = (2 * (K * D + V * D) * 4          # topic / word inputs
           + 5 * K * V * 4                  # tw, dist, k_mat, k_mat*dist, beta f32
           + K * V * 2                      # beta bf16 output
           + 16 * (K + V) * 4)              # small row vectors
    return int(min(max(int(1.25 * est) + (2 << 20), 16 << 20), cap))


def _vmem_b_estimate(tile_b, V, E1, K, single_buffer):
    wmult = 1 if single_buffer else 2
    weights = wmult * (V * E1 * 2            # w11 bf16
                       + E1 * E1 * 2         # w12 bf16
                       + E1 * 2 * K * 2      # w2 (mu||logvar) bf16
                       + 2 * E1 * 4          # b11, b12
                       + 2 * K * 4 + 2 * K * 4  # b2, mu2/var2
                       + K * V * 2)          # beta bf16
    io = 2 * (tile_b * V * 2 + 8 * 128 * 4)  # x bf16 (double-buffered) + out
    acts = 3 * tile_b * V * 4 + 4 * tile_b * E1 * 4 + 8 * tile_b * K * 4
    return weights + io + acts


def _vmem_b_bytes(tile_b, V, E1, K, single_buffer, cap):
    est = _vmem_b_estimate(tile_b, V, E1, K, single_buffer)
    return int(min(max(int(1.25 * est) + (4 << 20), 16 << 20), cap))


# --------------------------------------------------------------------------
# Host-side wrapper.
# --------------------------------------------------------------------------
def ecrtm_forward(x, params, *, num_topic, beta_temp, sinkhorn_alpha,
                  sinkhorn_iters, weight_loss_ecr, tile_b=None):
    B, V = x.shape
    E1 = params['w11'].shape[1]
    K = num_topic
    D = params['word'].shape[1]

    gen = _tpu_generation()
    cap = _vmem_cap_bytes(gen)
    use_bf16_exp = gen >= 6          # v5e has no bf16 EUP -> keep exp in f32

    vmem = pl.BlockSpec(memory_space=pltpu.MemorySpace.VMEM)

    # ---------------- Kernel A: beta + ECR loss (once) ----------------
    kernel_a = functools.partial(
        ecr_beta_kernel, beta_temp=beta_temp, sinkhorn_alpha=sinkhorn_alpha,
        sinkhorn_iters=sinkhorn_iters, sinkhorn_eps=1e-16,
        weight_loss_ecr=weight_loss_ecr)
    beta_bf, ecr_out = pl.pallas_call(
        kernel_a,
        out_shape=(jax.ShapeDtypeStruct((K, V), jnp.bfloat16),
                   jax.ShapeDtypeStruct((8, 128), jnp.float32)),
        in_specs=[vmem, vmem],
        out_specs=(vmem, vmem),
        compiler_params=pltpu.CompilerParams(
            vmem_limit_bytes=_vmem_a_bytes(V, K, D, cap)),
    )(params['topic'], params['word'])

    # ---------------- Kernel B: batch-tiled encoder/decoder ----------------
    if tile_b is None:
        if B >= 256 and gen >= 6:
            tile_b = 256                      # fill the 256x256 MXU rows
            if gen >= 7:
                # v7x: only 64 MiB VMEM -- back off if 256 does not fit.
                if (int(1.3 * _vmem_b_estimate(256, V, E1, K, True))
                        + (4 << 20)) > cap:
                    tile_b = 128
        elif B >= 128:
            tile_b = 128
        else:
            tile_b = _round_up(B, 16)
    tile_b = max(16, min(_round_up(tile_b, 16), _round_up(B, 16)))
    num_tiles = pl.cdiv(B, tile_b)
    b_pad = num_tiles * tile_b

    # x streams as bf16 (exact for BoW counts <= 256): halves the per-step DMA.
    x_bf = x.astype(jnp.bfloat16)
    if b_pad != B:
        x_bf = jnp.pad(x_bf, ((0, b_pad - B), (0, 0)))

    w11_bf = params['w11'].astype(jnp.bfloat16)
    w12_bf = params['w12'].astype(jnp.bfloat16)
    # fused mu/logvar projection weights [E1, 2K], bf16.
    w2_bf = jnp.concatenate([params['w21'], params['w22']],
                            axis=1).astype(jnp.bfloat16)
    b2 = jnp.concatenate([params['b21'], params['b22']], axis=1)

    kernel_b = functools.partial(
        encoder_decoder_kernel, num_topic=K, bn_eps=1e-5,
        batch_size=B, tile_b=tile_b, use_bf16_exp=use_bf16_exp)

    def _run_kernel_b(single_buffer):
        def const(shape):
            idx = (lambda i, _n=len(shape): (0,) * _n)
            if single_buffer:
                # constant blocks: single-buffer to halve resident-weight VMEM.
                return pl.BlockSpec(shape, idx, pipeline_mode=pl.Buffered(1))
            return pl.BlockSpec(shape, idx)

        grid_spec = pltpu.PrefetchScalarGridSpec(
            num_scalar_prefetch=0,
            grid=(num_tiles,),
            in_specs=[
                pl.BlockSpec((tile_b, V), lambda i: (i, 0)),   # x tile (streamed)
                const((V, E1)), const((1, E1)),                # w11 (bf16), b11
                const((E1, E1)), const((1, E1)),               # w12 (bf16), b12
                const((E1, 2 * K)), const((1, 2 * K)),         # w2 (bf16), b2
                const((1, K)), const((1, K)),                  # mu2, var2
                const((K, V)),                                 # beta (bf16)
            ],
            out_specs=pl.BlockSpec((8, 128), lambda i: (i, 0)),
        )
        return pl.pallas_call(
            kernel_b,
            out_shape=jax.ShapeDtypeStruct((num_tiles * 8, 128), jnp.float32),
            grid_spec=grid_spec,
            compiler_params=pltpu.CompilerParams(
                dimension_semantics=("parallel",),
                vmem_limit_bytes=_vmem_b_bytes(tile_b, V, E1, K,
                                               single_buffer, cap)),
        )(x_bf, w11_bf, params['b11'], w12_bf, params['b12'],
          w2_bf, b2, params['mu2'], params['var2'], beta_bf)

    try:
        partials = _run_kernel_b(True)
    except Exception:
        # TODO(synk): pipeline_mode=pl.Buffered(1) not supported on this jax
        # version; fall back to default double-buffered constant weights.
        partials = _run_kernel_b(False)

    partials = partials.reshape(num_tiles, 8, 128)
    recon_loss = jnp.sum(partials[:, 0, 0]) / B
    loss_kl = jnp.sum(partials[:, 0, 1]) / B
    loss_ecr = ecr_out[0, 0]
    loss_tm = recon_loss + loss_kl
    loss = loss_tm + loss_ecr
    return {'loss': loss, 'loss_TM': loss_tm, 'loss_ECR': loss_ecr}


# --------------------------------------------------------------------------
# Parameter construction (matches the PyTorch module's init, eval mode).
# --------------------------------------------------------------------------
def init_params(key, V, E1, K, D):
    ks = jax.random.split(key, 6)

    def linear(k, fan_in, fan_out):
        kw, kb = jax.random.split(k)
        bound = 1.0 / (fan_in ** 0.5)
        w = jax.random.uniform(kw, (fan_in, fan_out), jnp.float32, -bound, bound)
        b = jax.random.uniform(kb, (1, fan_out), jnp.float32, -bound, bound)
        return w, b

    w11, b11 = linear(ks[0], V, E1)
    w12, b12 = linear(ks[1], E1, E1)
    w21, b21 = linear(ks[2], E1, K)
    w22, b22 = linear(ks[3], E1, K)

    # mu2 / var2 prior (a = ones)
    a = jnp.ones((1, K), jnp.float32)
    mu2 = (jnp.log(a).T - jnp.mean(jnp.log(a), 1)).T
    var2 = ((1.0 / a * (1.0 - 2.0 / K)).T + 1.0 / (K * K) * jnp.sum(1.0 / a, 1)).T

    # word / topic embeddings, L2-normalized (F.normalize, dim=1)
    word = jax.random.normal(ks[4], (V, D), jnp.float32)
    word = word / jnp.maximum(jnp.linalg.norm(word, axis=1, keepdims=True), 1e-12)
    topic = 0.1 * jax.random.truncated_normal(ks[5], -2.0, 2.0, (K, D), jnp.float32)
    topic = topic / jnp.maximum(jnp.linalg.norm(topic, axis=1, keepdims=True), 1e-12)

    return dict(w11=w11, b11=b11, w12=w12, b12=b12,
                w21=w21, b21=b21, w22=w22, b22=b22,
                mu2=mu2.astype(jnp.float32), var2=var2.astype(jnp.float32),
                topic=topic, word=word)


if __name__ == "__main__":
    # small synthetic shapes: batch=8, vocab=256, en1_units=128, num_topic=16, emb_dim=64
    B, V, E1, K, D = 8, 256, 128, 16, 64
    key = jax.random.PRNGKey(0)
    kx, kp = jax.random.split(key)

    params = init_params(kp, V, E1, K, D)
    # bag-of-words style non-negative counts
    x = jnp.floor(jax.random.uniform(kx, (B, V), jnp.float32) * 4.0)

    rst = ecrtm_forward(x, params,
                        num_topic=K, beta_temp=0.2,
                        sinkhorn_alpha=20.0, sinkhorn_iters=30,
                        weight_loss_ecr=100.0)
    jax.block_until_ready(rst['loss'])
    assert bool(jnp.isfinite(rst['loss'])), "non-finite loss"
    print("KERNEL_OK")
</pallas_src>

<mosaic_0001>
module attributes {stable_mosaic.version = 11 : i64} {
  func.func @ecr_beta_kernel(%arg0: memref<16x64xf32, #tpu.memory_space<vmem>>, %arg1: memref<256x64xf32, #tpu.memory_space<vmem>>, %arg2: memref<16x256xbf16, #tpu.memory_space<vmem>>, %arg3: memref<8x128xf32, #tpu.memory_space<vmem>>) attributes {dimension_semantics = [], scalar_prefetch = 0 : i64, scratch_operands = 0 : i64, tpu.core_type = #tpu.core_type<tc>} {
    %c0 = arith.constant 0 : index
    %c0_0 = arith.constant 0 : index
    %0 = vector.load %arg0[%c0, %c0_0] : memref<16x64xf32, #tpu.memory_space<vmem>>, vector<16x64xf32>
    %c0_1 = arith.constant 0 : index
    %c0_2 = arith.constant 0 : index
    %1 = vector.load %arg1[%c0_1, %c0_2] : memref<256x64xf32, #tpu.memory_space<vmem>>, vector<256x64xf32>
    %cst = arith.constant dense<0.000000e+00> : vector<16x256xf32>
    %2 = tpu.matmul %0, %1, %cst {dimension_numbers = #tpu.dot_dimension_numbers<[1], [1], [0], [0], [0, 0, 1, 0], [], []>} : vector<16x64xf32>, vector<256x64xf32>, vector<16x256xf32> -> vector<16x256xf32>
    %3 = arith.mulf %0, %0 : vector<16x64xf32>
    %cst_3 = arith.constant dense<0.000000e+00> : vector<16xf32>
    %4 = vector.multi_reduction <add>, %3, %cst_3 [1] : vector<16x64xf32> to vector<16xf32>
    %5 = vector.shape_cast %4 : vector<16xf32> to vector<16x1xf32>
    %cst_4 = arith.constant 1.000000e+00 : f32
    %6 = vector.broadcast %cst_4 : f32 to vector<1x64xf32>
    %7 = arith.mulf %1, %1 : vector<256x64xf32>
    %cst_5 = arith.constant dense<0.000000e+00> : vector<1x256xf32>
    %8 = tpu.matmul %6, %7, %cst_5 {dimension_numbers = #tpu.dot_dimension_numbers<[1], [1], [0], [0], [0, 0, 1, 0], [], []>} : vector<1x64xf32>, vector<256x64xf32>, vector<1x256xf32> -> vector<1x256xf32>
    %9 = vector.broadcast %5 : vector<16x1xf32> to vector<16x256xf32>
    %10 = vector.broadcast %8 : vector<1x256xf32> to vector<16x256xf32>
    %11 = arith.addf %9, %10 : vector<16x256xf32>
    %cst_6 = arith.constant 2.000000e+00 : f32
    %12 = vector.broadcast %cst_6 : f32 to vector<16x256xf32>
    %13 = arith.mulf %12, %2 : vector<16x256xf32>
    %14 = arith.subf %11, %13 : vector<16x256xf32>
    %cst_7 = arith.constant 0.000000e+00 : f32
    %15 = vector.broadcast %cst_7 : f32 to vector<16x256xf32>
    %16 = arith.subf %15, %14 : vector<16x256xf32>
    %cst_8 = arith.constant 2.000000e-01 : f32
    %17 = vector.broadcast %cst_8 : f32 to vector<16x256xf32>
    %18 = arith.divf %16, %17 : vector<16x256xf32>
    %cst_9 = arith.constant dense<0xFF800000> : vector<256xf32>
    %19 = vector.multi_reduction <maximumf>, %18, %cst_9 [0] : vector<16x256xf32> to vector<256xf32>
    %20 = vector.shape_cast %19 : vector<256xf32> to vector<1x256xf32>
    %21 = vector.broadcast %20 : vector<1x256xf32> to vector<16x256xf32>
    %22 = arith.subf %18, %21 : vector<16x256xf32>
    %23 = math.exp %22 : vector<16x256xf32>
    %cst_10 = arith.constant dense<0.000000e+00> : vector<256xf32>
    %24 = vector.multi_reduction <add>, %23, %cst_10 [0] : vector<16x256xf32> to vector<256xf32>
    %25 = vector.shape_cast %24 : vector<256xf32> to vector<1x256xf32>
    %26 = vector.broadcast %25 : vector<1x256xf32> to vector<16x256xf32>
    %27 = arith.divf %23, %26 : vector<16x256xf32>
    %28 = arith.truncf %27 : vector<16x256xf32> to vector<16x256xbf16>
    %c0_11 = arith.constant 0 : index
    %c0_12 = arith.constant 0 : index
    %29 = vector.load %arg2[%c0_11, %c0_12] : memref<16x256xbf16, #tpu.memory_space<vmem>>, vector<16x256xbf16>
    tpu.vector_store %arg2[%c0_11, %c0_12], %28 {strides = array<i32>} : memref<16x256xbf16, #tpu.memory_space<vmem>>, vector<16x256xbf16>,
    %cst_13 = arith.constant 0.000000e+00 : f32
    %30 = vector.broadcast %cst_13 : f32 to vector<16x256xf32>
    %31 = arith.subf %30, %14 : vector<16x256xf32>
    %cst_14 = arith.constant 2.000000e+01 : f32
    %32 = vector.broadcast %cst_14 : f32 to vector<16x256xf32>
    %33 = arith.mulf %31, %32 : vector<16x256xf32>
    %34 = math.exp %33 : vector<16x256xf32>
    %cst_15 = arith.constant 6.250000e-02 : f32
    %35 = vector.broadcast %cst_15 : f32 to vector<1x16xf32>
    %cst_16 = arith.constant 3.906250e-03 : f32
    %36 = vector.broadcast %cst_16 : f32 to vector<1x256xf32>
    %cst_17 = arith.constant 6.250000e-02 : f32
    %37 = vector.broadcast %cst_17 : f32 to vector<1x16xf32>
    %cst_18 = arith.constant 0.000000e+00 : f32
    %38 = vector.broadcast %cst_18 : f32 to vector<1x256xf32>
    %c0_i32 = arith.constant 0 : i32
    %cst_19 = arith.constant dense<0.000000e+00> : vector<1x256xf32>
    %39 = tpu.matmul %37, %34, %cst_19 {dimension_numbers = #tpu.dot_dimension_numbers<[1], [0], [0], [1], [0, 0, 1, 1], [], []>} : vector<1x16xf32>, vector<16x256xf32>, vector<1x256xf32> -> vector<1x256xf32>
    %cst_20 = arith.constant 1.000000e-16 : f32
    %40 = vector.broadcast %cst_20 : f32 to vector<1x256xf32>
    %41 = arith.addf %39, %40 : vector<1x256xf32>
    %42 = arith.divf %36, %41 : vector<1x256xf32>
    %cst_21 = arith.constant dense<0.000000e+00> : vector<1x16xf32>
    %43 = tpu.matmul %42, %34, %cst_21 {dimension_numbers = #tpu.dot_dimension_numbers<[1], [1], [0], [0], [0, 0, 1, 0], [], []>} : vector<1x256xf32>, vector<16x256xf32>, vector<1x16xf32> -> vector<1x16xf32>
    %cst_22 = arith.constant 1.000000e-16 : f32
    %44 = vector.broadcast %cst_22 : f32 to vector<1x16xf32>
    %45 = arith.addf %43, %44 : vector<1x16xf32>
    %46 = arith.divf %35, %45 : vector<1x16xf32>
    %c1_i32 = arith.constant 1 : i32
    %cst_23 = arith.constant dense<0.000000e+00> : vector<1x256xf32>
    %47 = tpu.matmul %46, %34, %cst_23 {dimension_numbers = #tpu.dot_dimension_numbers<[1], [0], [0], [1], [0, 0, 1, 1], [], []>} : vector<1x16xf32>, vector<16x256xf32>, vector<1x256xf32> -> vector<1x256xf32>
    %cst_24 = arith.constant 1.000000e-16 : f32
    %48 = vector.broadcast %cst_24 : f32 to vector<1x256xf32>
    %49 = arith.addf %47, %48 : vector<1x256xf32>
    %50 = arith.divf %36, %49 : vector<1x256xf32>
    %cst_25 = arith.constant dense<0.000000e+00> : vector<1x16xf32>
    %51 = tpu.matmul %50, %34, %cst_25 {dimension_numbers = #tpu.dot_dimension_numbers<[1], [1], [0], [0], [0, 0, 1, 0], [], []>} : vector<1x256xf32>, vector<16x256xf32>, vector<1x16xf32> -> vector<1x16xf32>
    %cst_26 = arith.constant 1.000000e-16 : f32
    %52 = vector.broadcast %cst_26 : f32 to vector<1x16xf32>
    %53 = arith.addf %51, %52 : vector<1x16xf32>
    %54 = arith.divf %35, %53 : vector<1x16xf32>
    %c2_i32 = arith.constant 2 : i32
    %cst_27 = arith.constant dense<0.000000e+00> : vector<1x256xf32>
    %55 = tpu.matmul %54, %34, %cst_27 {dimension_numbers = #tpu.dot_dimension_numbers<[1], [0], [0], [1], [0, 0, 1, 1], [], []>} : vector<1x16xf32>, vector<16x256xf32>, vector<1x256xf32> -> vector<1x256xf32>
    %cst_28 = arith.constant 1.000000e-16 : f32
    %56 = vector.broadcast %cst_28 : f32 to vector<1x256xf32>
    %57 = arith.addf %55, %56 : vector<1x256xf32>
    %58 = arith.divf %36, %57 : vector<1x256xf32>
    %cst_29 = arith.constant dense<0.000000e+00> : vector<1x16xf32>
    %59 = tpu.matmul %58, %34, %cst_29 {dimension_numbers = #tpu.dot_dimension_numbers<[1], [1], [0], [0], [0, 0, 1, 0], [], []>} : vector<1x256xf32>, vector<16x256xf32>, vector<1x16xf32> -> vector<1x16xf32>
    %cst_30 = arith.constant 1.000000e-16 : f32
    %60 = vector.broadcast %cst_30 : f32 to vector<1x16xf32>
    %61 = arith.addf %59, %60 : vector<1x16xf32>
    %62 = arith.divf %35, %61 : vector<1x16xf32>
    %c3_i32 = arith.constant 3 : i32
    %cst_31 = arith.constant dense<0.000000e+00> : vector<1x256xf32>
    %63 = tpu.matmul %62, %34, %cst_31 {dimension_numbers = #tpu.dot_dimension_numbers<[1], [0], [0], [1], [0, 0, 1, 1], [], []>} : vector<1x16xf32>, vector<16x256xf32>, vector<1x256xf32> -> vector<1x256xf32>
    %cst_32 = arith.constant 1.000000e-16 : f32
    %64 = vector.broadcast %cst_32 : f32 to vector<1x256xf32>
    %65 = arith.addf %63, %64 : vector<1x256xf32>
    %66 = arith.divf %36, %65 : vector<1x256xf32>
    %cst_33 = arith.constant dense<0.000000e+00> : vector<1x16xf32>
    %67 = tpu.matmul %66, %34, %cst_33 {dimension_numbers = #tpu.dot_dimension_numbers<[1], [1], [0], [0], [0, 0, 1, 0], [], []>} : vector<1x256xf32>, vector<16x256xf32>, vector<1x16xf32> -> vector<1x16xf32>
    %cst_34 = arith.constant 1.000000e-16 : f32
    %68 = vector.broadcast %cst_34 : f32 to vector<1x16xf32>
    %69 = arith.addf %67, %68 : vector<1x16xf32>
    %70 = arith.divf %35, %69 : vector<1x16xf32>
    %c4_i32 = arith.constant 4 : i32
    %cst_35 = arith.constant dense<0.000000e+00> : vector<1x256xf32>
    %71 = tpu.matmul %70, %34, %cst_35 {dimension_numbers = #tpu.dot_dimension_numbers<[1], [0], [0], [1], [0, 0, 1, 1], [], []>} : vector<1x16xf32>, vector<16x256xf32>, vector<1x256xf32> -> vector<1x256xf32>
    %cst_36 = arith.constant 1.000000e-16 : f32
    %72 = vector.broadcast %cst_36 : f32 to vector<1x256xf32>
    %73 = arith.addf %71, %72 : vector<1x256xf32>
    %74 = arith.divf %36, %73 : vector<1x256xf32>
    %cst_37 = arith.constant dense<0.000000e+00> : vector<1x16xf32>
    %75 = tpu.matmul %74, %34, %cst_37 {dimension_numbers = #tpu.dot_dimension_numbers<[1], [1], [0], [0], [0, 0, 1, 0], [], []>} : vector<1x256xf32>, vector<16x256xf32>, vector<1x16xf32> -> vector<1x16xf32>
    %cst_38 = arith.constant 1.000000e-16 : f32
    %76 = vector.broadcast %cst_38 : f32 to vector<1x16xf32>
    %77 = arith.addf %75, %76 : vector<1x16xf32>
    %78 = arith.divf %35, %77 : vector<1x16xf32>
    %c5_i32 = arith.constant 5 : i32
    %cst_39 = arith.constant dense<0.000000e+00> : vector<1x256xf32>
    %79 = tpu.matmul %78, %34, %cst_39 {dimension_numbers = #tpu.dot_dimension_numbers<[1], [0], [0], [1], [0, 0, 1, 1], [], []>} : vector<1x16xf32>, vector<16x256xf32>, vector<1x256xf32> -> vector<1x256xf32>
    %cst_40 = arith.constant 1.000000e-16 : f32
    %80 = vector.broadcast %cst_40 : f32 to vector<1x256xf32>
    %81 = arith.addf %79, %80 : vector<1x256xf32>
    %82 = arith.divf %36, %81 : vector<1x256xf32>
    %cst_41 = arith.constant dense<0.000000e+00> : vector<1x16xf32>
    %83 = tpu.matmul %82, %34, %cst_41 {dimension_numbers = #tpu.dot_dimension_numbers<[1], [1], [0], [0], [0, 0, 1, 0], [], []>} : vector<1x256xf32>, vector<16x256xf32>, vector<1x16xf32> -> vector<1x16xf32>
    %cst_42 = arith.constant 1.000000e-16 : f32
    %84 = vector.broadcast %cst_42 : f32 to vector<1x16xf32>
    %85 = arith.addf %83, %84 : vector<1x16xf32>
    %86 = arith.divf %35, %85 : vector<1x16xf32>
    %c6_i32 = arith.constant 6 : i32
    %cst_43 = arith.constant dense<0.000000e+00> : vector<1x256xf32>
    %87 = tpu.matmul %86, %34, %cst_43 {dimension_numbers = #tpu.dot_dimension_numbers<[1], [0], [0], [1], [0, 0, 1, 1], [], []>} : vector<1x16xf32>, vector<16x256xf32>, vector<1x256xf32> -> vector<1x256xf32>
    %cst_44 = arith.constant 1.000000e-16 : f32
    %88 = vector.broadcast %cst_44 : f32 to vector<1x256xf32>
    %89 = arith.addf %87, %88 : vector<1x256xf32>
    %90 = arith.divf %36, %89 : vector<1x256xf32>
    %cst_45 = arith.constant dense<0.000000e+00> : vector<1x16xf32>
    %91 = tpu.matmul %90, %34, %cst_45 {dimension_numbers = #tpu.dot_dimension_numbers<[1], [1], [0], [0], [0, 0, 1, 0], [], []>} : vector<1x256xf32>, vector<16x256xf32>, vector<1x16xf32> -> vector<1x16xf32>
    %cst_46 = arith.constant 1.000000e-16 : f32
    %92 = vector.broadcast %cst_46 : f32 to vector<1x16xf32>
    %93 = arith.addf %91, %92 : vector<1x16xf32>
    %94 = arith.divf %35, %93 : vector<1x16xf32>
    %c7_i32 = arith.constant 7 : i32
    %cst_47 = arith.constant dense<0.000000e+00> : vector<1x256xf32>
    %95 = tpu.matmul %94, %34, %cst_47 {dimension_numbers = #tpu.dot_dimension_numbers<[1], [0], [0], [1], [0, 0, 1, 1], [], []>} : vector<1x16xf32>, vector<16x256xf32>, vector<1x256xf32> -> vector<1x256xf32>
    %cst_48 = arith.constant 1.000000e-16 : f32
    %96 = vector.broadcast %cst_48 : f32 to vector<1x256xf32>
    %97 = arith.addf %95, %96 : vector<1x256xf32>
    %98 = arith.divf %36, %97 : vector<1x256xf32>
    %cst_49 = arith.constant dense<0.000000e+00> : vector<1x16xf32>
    %99 = tpu.matmul %98, %34, %cst_49 {dimension_numbers = #tpu.dot_dimension_numbers<[1], [1], [0], [0], [0, 0, 1, 0], [], []>} : vector<1x256xf32>, vector<16x256xf32>, vector<1x16xf32> -> vector<1x16xf32>
    %cst_50 = arith.constant 1.000000e-16 : f32
    %100 = vector.broadcast %cst_50 : f32 to vector<1x16xf32>
    %101 = arith.addf %99, %100 : vector<1x16xf32>
    %102 = arith.divf %35, %101 : vector<1x16xf32>
    %c8_i32 = arith.constant 8 : i32
    %cst_51 = arith.constant dense<0.000000e+00> : vector<1x256xf32>
    %103 = tpu.matmul %102, %34, %cst_51 {dimension_numbers = #tpu.dot_dimension_numbers<[1], [0], [0], [1], [0, 0, 1, 1], [], []>} : vector<1x16xf32>, vector<16x256xf32>, vector<1x256xf32> -> vector<1x256xf32>
    %cst_52 = arith.constant 1.000000e-16 : f32
    %104 = vector.broadcast %cst_52 : f32 to vector<1x256xf32>
    %105 = arith.addf %103, %104 : vector<1x256xf32>
    %106 = arith.divf %36, %105 : vector<1x256xf32>
    %cst_53 = arith.constant dense<0.000000e+00> : vector<1x16xf32>
    %107 = tpu.matmul %106, %34, %cst_53 {dimension_numbers = #tpu.dot_dimension_numbers<[1], [1], [0], [0], [0, 0, 1, 0], [], []>} : vector<1x256xf32>, vector<16x256xf32>, vector<1x16xf32> -> vector<1x16xf32>
    %cst_54 = arith.constant 1.000000e-16 : f32
    %108 = vector.broadcast %cst_54 : f32 to vector<1x16xf32>
    %109 = arith.addf %107, %108 : vector<1x16xf32>
    %110 = arith.divf %35, %109 : vector<1x16xf32>
    %c9_i32 = arith.constant 9 : i32
    %cst_55 = arith.constant dense<0.000000e+00> : vector<1x256xf32>
    %111 = tpu.matmul %110, %34, %cst_55 {dimension_numbers = #tpu.dot_dimension_numbers<[1], [0], [0], [1], [0, 0, 1, 1], [], []>} : vector<1x16xf32>, vector<16x256xf32>, vector<1x256xf32> -> vector<1x256xf32>
    %cst_56 = arith.constant 1.000000e-16 : f32
    %112 = vector.broadcast %cst_56 : f32 to vector<1x256xf32>
    %113 = arith.addf %111, %112 : vector<1x256xf32>
    %114 = arith.divf %36, %113 : vector<1x256xf32>
    %cst_57 = arith.constant dense<0.000000e+00> : vector<1x16xf32>
    %115 = tpu.matmul %114, %34, %cst_57 {dimension_numbers = #tpu.dot_dimension_numbers<[1], [1], [0], [0], [0, 0, 1, 0], [], []>} : vector<1x256xf32>, vector<16x256xf32>, vector<1x16xf32> -> vector<1x16xf32>
    %cst_58 = arith.constant 1.000000e-16 : f32
    %116 = vector.broadcast %cst_58 : f32 to vector<1x16xf32>
    %117 = arith.addf %115, %116 : vector<1x16xf32>
    %118 = arith.divf %35, %117 : vector<1x16xf32>
    %c10_i32 = arith.constant 10 : i32
    %cst_59 = arith.constant dense<0.000000e+00> : vector<1x256xf32>
    %119 = tpu.matmul %118, %34, %cst_59 {dimension_numbers = #tpu.dot_dimension_numbers<[1], [0], [0], [1], [0, 0, 1, 1], [], []>} : vector<1x16xf32>, vector<16x256xf32>, vector<1x256xf32> -> vector<1x256xf32>
    %cst_60 = arith.constant 1.000000e-16 : f32
    %120 = vector.broadcast %cst_60 : f32 to vector<1x256xf32>
    %121 = arith.addf %119, %120 : vector<1x256xf32>
    %122 = arith.divf %36, %121 : vector<1x256xf32>
    %cst_61 = arith.constant dense<0.000000e+00> : vector<1x16xf32>
    %123 = tpu.matmul %122, %34, %cst_61 {dimension_numbers = #tpu.dot_dimension_numbers<[1], [1], [0], [0], [0, 0, 1, 0], [], []>} : vector<1x256xf32>, vector<16x256xf32>, vector<1x16xf32> -> vector<1x16xf32>
    %cst_62 = arith.constant 1.000000e-16 : f32
    %124 = vector.broadcast %cst_62 : f32 to vector<1x16xf32>
    %125 = arith.addf %123, %124 : vector<1x16xf32>
    %126 = arith.divf %35, %125 : vector<1x16xf32>
    %c11_i32 = arith.constant 11 : i32
    %cst_63 = arith.constant dense<0.000000e+00> : vector<1x256xf32>
    %127 = tpu.matmul %126, %34, %cst_63 {dimension_numbers = #tpu.dot_dimension_numbers<[1], [0], [0], [1], [0, 0, 1, 1], [], []>} : vector<1x16xf32>, vector<16x256xf32>, vector<1x256xf32> -> vector<1x256xf32>
    %cst_64 = arith.constant 1.000000e-16 : f32
    %128 = vector.broadcast %cst_64 : f32 to vector<1x256xf32>
    %129 = arith.addf %127, %128 : vector<1x256xf32>
    %130 = arith.divf %36, %129 : vector<1x256xf32>
    %cst_65 = arith.constant dense<0.000000e+00> : vector<1x16xf32>
    %131 = tpu.matmul %130, %34, %cst_65 {dimension_numbers = #tpu.dot_dimension_numbers<[1], [1], [0], [0], [0, 0, 1, 0], [], []>} : vector<1x256xf32>, vector<16x256xf32>, vector<1x16xf32> -> vector<1x16xf32>
    %cst_66 = arith.constant 1.000000e-16 : f32
    %132 = vector.broadcast %cst_66 : f32 to vector<1x16xf32>
    %133 = arith.addf %131, %132 : vector<1x16xf32>
    %134 = arith.divf %35, %133 : vector<1x16xf32>
    %c12_i32 = arith.constant 12 : i32
    %cst_67 = arith.constant dense<0.000000e+00> : vector<1x256xf32>
    %135 = tpu.matmul %134, %34, %cst_67 {dimension_numbers = #tpu.dot_dimension_numbers<[1], [0], [0], [1], [0, 0, 1, 1], [], []>} : vector<1x16xf32>, vector<16x256xf32>, vector<1x256xf32> -> vector<1x256xf32>
    %cst_68 = arith.constant 1.000000e-16 : f32
    %136 = vector.broadcast %cst_68 : f32 to vector<1x256xf32>
    %137 = arith.addf %135, %136 : vector<1x256xf32>
    %138 = arith.divf %36, %137 : vector<1x256xf32>
    %cst_69 = arith.constant dense<0.000000e+00> : vector<1x16xf32>
    %139 = tpu.matmul %138, %34, %cst_69 {dimension_numbers = #tpu.dot_dimension_numbers<[1], [1], [0], [0], [0, 0, 1, 0], [], []>} : vector<1x256xf32>, vector<16x256xf32>, vector<1x16xf32> -> vector<1x16xf32>
    %cst_70 = arith.constant 1.000000e-16 : f32
    %140 = vector.broadcast %cst_70 : f32 to vector<1x16xf32>
    %141 = arith.addf %139, %140 : vector<1x16xf32>
    %142 = arith.divf %35, %141 : vector<1x16xf32>
    %c13_i32 = arith.constant 13 : i32
    %cst_71 = arith.constant dense<0.000000e+00> : vector<1x256xf32>
    %143 = tpu.matmul %142, %34, %cst_71 {dimension_numbers = #tpu.dot_dimension_numbers<[1], [0], [0], [1], [0, 0, 1, 1], [], []>} : vector<1x16xf32>, vector<16x256xf32>, vector<1x256xf32> -> vector<1x256xf32>
    %cst_72 = arith.constant 1.000000e-16 : f32
    %144 = vector.broadcast %cst_72 : f32 to vector<1x256xf32>
    %145 = arith.addf %143, %144 : vector<1x256xf32>
    %146 = arith.divf %36, %145 : vector<1x256xf32>
    %cst_73 = arith.constant dense<0.000000e+00> : vector<1x16xf32>
    %147 = tpu.matmul %146, %34, %cst_73 {dimension_numbers = #tpu.dot_dimension_numbers<[1], [1], [0], [0], [0, 0, 1, 0], [], []>} : vector<1x256xf32>, vector<16x256xf32>, vector<1x16xf32> -> vector<1x16xf32>
    %cst_74 = arith.constant 1.000000e-16 : f32
    %148 = vector.broadcast %cst_74 : f32 to vector<1x16xf32>
    %149 = arith.addf %147, %148 : vector<1x16xf32>
    %150 = arith.divf %35, %149 : vector<1x16xf32>
    %c14_i32 = arith.constant 14 : i32
    %cst_75 = arith.constant dense<0.000000e+00> : vector<1x256xf32>
    %151 = tpu.matmul %150, %34, %cst_75 {dimension_numbers = #tpu.dot_dimension_numbers<[1], [0], [0], [1], [0, 0, 1, 1], [], []>} : vector<1x16xf32>, vector<16x256xf32>, vector<1x256xf32> -> vector<1x256xf32>
    %cst_76 = arith.constant 1.000000e-16 : f32
    %152 = vector.broadcast %cst_76 : f32 to vector<1x256xf32>
    %153 = arith.addf %151, %152 : vector<1x256xf32>
    %154 = arith.divf %36, %153 : vector<1x256xf32>
    %cst_77 = arith.constant dense<0.000000e+00> : vector<1x16xf32>
    %155 = tpu.matmul %154, %34, %cst_77 {dimension_numbers = #tpu.dot_dimension_numbers<[1], [1], [0], [0], [0, 0, 1, 0], [], []>} : vector<1x256xf32>, vector<16x256xf32>, vector<1x16xf32> -> vector<1x16xf32>
    %cst_78 = arith.constant 1.000000e-16 : f32
    %156 = vector.broadcast %cst_78 : f32 to vector<1x16xf32>
    %157 = arith.addf %155, %156 : vector<1x16xf32>
    %158 = arith.divf %35, %157 : vector<1x16xf32>
    %c15_i32 = arith.constant 15 : i32
    %cst_79 = arith.constant dense<0.000000e+00> : vector<1x256xf32>
    %159 = tpu.matmul %158, %34, %cst_79 {dimension_numbers = #tpu.dot_dimension_numbers<[1], [0], [0], [1], [0, 0, 1, 1], [], []>} : vector<1x16xf32>, vector<16x256xf32>, vector<1x256xf32> -> vector<1x256xf32>
    %cst_80 = arith.constant 1.000000e-16 : f32
    %160 = vector.broadcast %cst_80 : f32 to vector<1x256xf32>
    %161 = arith.addf %159, %160 : vector<1x256xf32>
    %162 = arith.divf %36, %161 : vector<1x256xf32>
    %cst_81 = arith.constant dense<0.000000e+00> : vector<1x16xf32>
    %163 = tpu.matmul %162, %34, %cst_81 {dimension_numbers = #tpu.dot_dimension_numbers<[1], [1], [0], [0], [0, 0, 1, 0], [], []>} : vector<1x256xf32>, vector<16x256xf32>, vector<1x16xf32> -> vector<1x16xf32>
    %cst_82 = arith.constant 1.000000e-16 : f32
    %164 = vector.broadcast %cst_82 : f32 to vector<1x16xf32>
    %165 = arith.addf %163, %164 : vector<1x16xf32>
    %166 = arith.divf %35, %165 : vector<1x16xf32>
    %c16_i32 = arith.constant 16 : i32
    %cst_83 = arith.constant dense<0.000000e+00> : vector<1x256xf32>
    %167 = tpu.matmul %166, %34, %cst_83 {dimension_numbers = #tpu.dot_dimension_numbers<[1], [0], [0], [1], [0, 0, 1, 1], [], []>} : vector<1x16xf32>, vector<16x256xf32>, vector<1x256xf32> -> vector<1x256xf32>
    %cst_84 = arith.constant 1.000000e-16 : f32
    %168 = vector.broadcast %cst_84 : f32 to vector<1x256xf32>
    %169 = arith.addf %167, %168 : vector<1x256xf32>
    %170 = arith.divf %36, %169 : vector<1x256xf32>
    %cst_85 = arith.constant dense<0.000000e+00> : vector<1x16xf32>
    %171 = tpu.matmul %170, %34, %cst_85 {dimension_numbers = #tpu.dot_dimension_numbers<[1], [1], [0], [0], [0, 0, 1, 0], [], []>} : vector<1x256xf32>, vector<16x256xf32>, vector<1x16xf32> -> vector<1x16xf32>
    %cst_86 = arith.constant 1.000000e-16 : f32
    %172 = vector.broadcast %cst_86 : f32 to vector<1x16xf32>
    %173 = arith.addf %171, %172 : vector<1x16xf32>
    %174 = arith.divf %35, %173 : vector<1x16xf32>
    %c17_i32 = arith.constant 17 : i32
    %cst_87 = arith.constant dense<0.000000e+00> : vector<1x256xf32>
    %175 = tpu.matmul %174, %34, %cst_87 {dimension_numbers = #tpu.dot_dimension_numbers<[1], [0], [0], [1], [0, 0, 1, 1], [], []>} : vector<1x16xf32>, vector<16x256xf32>, vector<1x256xf32> -> vector<1x256xf32>
    %cst_88 = arith.constant 1.000000e-16 : f32
    %176 = vector.broadcast %cst_88 : f32 to vector<1x256xf32>
    %177 = arith.addf %175, %176 : vector<1x256xf32>
    %178 = arith.divf %36, %177 : vector<1x256xf32>
    %cst_89 = arith.constant dense<0.000000e+00> : vector<1x16xf32>
    %179 = tpu.matmul %178, %34, %cst_89 {dimension_numbers = #tpu.dot_dimension_numbers<[1], [1], [0], [0], [0, 0, 1, 0], [], []>} : vector<1x256xf32>, vector<16x256xf32>, vector<1x16xf32> -> vector<1x16xf32>
    %cst_90 = arith.constant 1.000000e-16 : f32
    %180 = vector.broadcast %cst_90 : f32 to vector<1x16xf32>
    %181 = arith.addf %179, %180 : vector<1x16xf32>
    %182 = arith.divf %35, %181 : vector<1x16xf32>
    %c18_i32 = arith.constant 18 : i32
    %cst_91 = arith.constant dense<0.000000e+00> : vector<1x256xf32>
    %183 = tpu.matmul %182, %34, %cst_91 {dimension_numbers = #tpu.dot_dimension_numbers<[1], [0], [0], [1], [0, 0, 1, 1], [], []>} : vector<1x16xf32>, vector<16x256xf32>, vector<1x256xf32> -> vector<1x256xf32>
    %cst_92 = arith.constant 1.000000e-16 : f32
    %184 = vector.broadcast %cst_92 : f32 to vector<1x256xf32>
    %185 = arith.addf %183, %184 : vector<1x256xf32>
    %186 = arith.divf %36, %185 : vector<1x256xf32>
    %cst_93 = arith.constant dense<0.000000e+00> : vector<1x16xf32>
    %187 = tpu.matmul %186, %34, %cst_93 {dimension_numbers = #tpu.dot_dimension_numbers<[1], [1], [0], [0], [0, 0, 1, 0], [], []>} : vector<1x256xf32>, vector<16x256xf32>, vector<1x16xf32> -> vector<1x16xf32>
    %cst_94 = arith.constant 1.000000e-16 : f32
    %188 = vector.broadcast %cst_94 : f32 to vector<1x16xf32>
    %189 = arith.addf %187, %188 : vector<1x16xf32>
    %190 = arith.divf %35, %189 : vector<1x16xf32>
    %c19_i32 = arith.constant 19 : i32
    %cst_95 = arith.constant dense<0.000000e+00> : vector<1x256xf32>
    %191 = tpu.matmul %190, %34, %cst_95 {dimension_numbers = #tpu.dot_dimension_numbers<[1], [0], [0], [1], [0, 0, 1, 1], [], []>} : vector<1x16xf32>, vector<16x256xf32>, vector<1x256xf32> -> vector<1x256xf32>
    %cst_96 = arith.constant 1.000000e-16 : f32
    %192 = vector.broadcast %cst_96 : f32 to vector<1x256xf32>
    %193 = arith.addf %191, %192 : vector<1x256xf32>
    %194 = arith.divf %36, %193 : vector<1x256xf32>
    %cst_97 = arith.constant dense<0.000000e+00> : vector<1x16xf32>
    %195 = tpu.matmul %194, %34, %cst_97 {dimension_numbers = #tpu.dot_dimension_numbers<[1], [1], [0], [0], [0, 0, 1, 0], [], []>} : vector<1x256xf32>, vector<16x256xf32>, vector<1x16xf32> -> vector<1x16xf32>
    %cst_98 = arith.constant 1.000000e-16 : f32
    %196 = vector.broadcast %cst_98 : f32 to vector<1x16xf32>
    %197 = arith.addf %195, %196 : vector<1x16xf32>
    %198 = arith.divf %35, %197 : vector<1x16xf32>
    %c20_i32 = arith.constant 20 : i32
    %cst_99 = arith.constant dense<0.000000e+00> : vector<1x256xf32>
    %199 = tpu.matmul %198, %34, %cst_99 {dimension_numbers = #tpu.dot_dimension_numbers<[1], [0], [0], [1], [0, 0, 1, 1], [], []>} : vector<1x16xf32>, vector<16x256xf32>, vector<1x256xf32> -> vector<1x256xf32>
    %cst_100 = arith.constant 1.000000e-16 : f32
    %200 = vector.broadcast %cst_100 : f32 to vector<1x256xf32>
    %201 = arith.addf %199, %200 : vector<1x256xf32>
    %202 = arith.divf %36, %201 : vector<1x256xf32>
    %cst_101 = arith.constant dense<0.000000e+00> : vector<1x16xf32>
    %203 = tpu.matmul %202, %34, %cst_101 {dimension_numbers = #tpu.dot_dimension_numbers<[1], [1], [0], [0], [0, 0, 1, 0], [], []>} : vector<1x256xf32>, vector<16x256xf32>, vector<1x16xf32> -> vector<1x16xf32>
    %cst_102 = arith.constant 1.000000e-16 : f32
    %204 = vector.broadcast %cst_102 : f32 to vector<1x16xf32>
    %205 = arith.addf %203, %204 : vector<1x16xf32>
    %206 = arith.divf %35, %205 : vector<1x16xf32>
    %c21_i32 = arith.constant 21 : i32
    %cst_103 = arith.constant dense<0.000000e+00> : vector<1x256xf32>
    %207 = tpu.matmul %206, %34, %cst_103 {dimension_numbers = #tpu.dot_dimension_numbers<[1], [0], [0], [1], [0, 0, 1, 1], [], []>} : vector<1x16xf32>, vector<16x256xf32>, vector<1x256xf32> -> vector<1x256xf32>
    %cst_104 = arith.constant 1.000000e-16 : f32
    %208 = vector.broadcast %cst_104 : f32 to vector<1x256xf32>
    %209 = arith.addf %207, %208 : vector<1x256xf32>
    %210 = arith.divf %36, %209 : vector<1x256xf32>
    %cst_105 = arith.constant dense<0.000000e+00> : vector<1x16xf32>
    %211 = tpu.matmul %210, %34, %cst_105 {dimension_numbers = #tpu.dot_dimension_numbers<[1], [1], [0], [0], [0, 0, 1, 0], [], []>} : vector<1x256xf32>, vector<16x256xf32>, vector<1x16xf32> -> vector<1x16xf32>
    %cst_106 = arith.constant 1.000000e-16 : f32
    %212 = vector.broadcast %cst_106 : f32 to vector<1x16xf32>
    %213 = arith.addf %211, %212 : vector<1x16xf32>
    %214 = arith.divf %35, %213 : vector<1x16xf32>
    %c22_i32 = arith.constant 22 : i32
    %cst_107 = arith.constant dense<0.000000e+00> : vector<1x256xf32>
    %215 = tpu.matmul %214, %34, %cst_107 {dimension_numbers = #tpu.dot_dimension_numbers<[1], [0], [0], [1], [0, 0, 1, 1], [], []>} : vector<1x16xf32>, vector<16x256xf32>, vector<1x256xf32> -> vector<1x256xf32>
    %cst_108 = arith.constant 1.000000e-16 : f32
    %216 = vector.broadcast %cst_108 : f32 to vector<1x256xf32>
    %217 = arith.addf %215, %216 : vector<1x256xf32>
    %218 = arith.divf %36, %217 : vector<1x256xf32>
    %cst_109 = arith.constant dense<0.000000e+00> : vector<1x16xf32>
    %219 = tpu.matmul %218, %34, %cst_109 {dimension_numbers = #tpu.dot_dimension_numbers<[1], [1], [0], [0], [0, 0, 1, 0], [], []>} : vector<1x256xf32>, vector<16x256xf32>, vector<1x16xf32> -> vector<1x16xf32>
    %cst_110 = arith.constant 1.000000e-16 : f32
    %220 = vector.broadcast %cst_110 : f32 to vector<1x16xf32>
    %221 = arith.addf %219, %220 : vector<1x16xf32>
    %222 = arith.divf %35, %221 : vector<1x16xf32>
    %c23_i32 = arith.constant 23 : i32
    %cst_111 = arith.constant dense<0.000000e+00> : vector<1x256xf32>
    %223 = tpu.matmul %222, %34, %cst_111 {dimension_numbers = #tpu.dot_dimension_numbers<[1], [0], [0], [1], [0, 0, 1, 1], [], []>} : vector<1x16xf32>, vector<16x256xf32>, vector<1x256xf32> -> vector<1x256xf32>
    %cst_112 = arith.constant 1.000000e-16 : f32
    %224 = vector.broadcast %cst_112 : f32 to vector<1x256xf32>
    %225 = arith.addf %223, %224 : vector<1x256xf32>
    %226 = arith.divf %36, %225 : vector<1x256xf32>
    %cst_113 = arith.constant dense<0.000000e+00> : vector<1x16xf32>
    %227 = tpu.matmul %226, %34, %cst_113 {dimension_numbers = #tpu.dot_dimension_numbers<[1], [1], [0], [0], [0, 0, 1, 0], [], []>} : vector<1x256xf32>, vector<16x256xf32>, vector<1x16xf32> -> vector<1x16xf32>
    %cst_114 = arith.constant 1.000000e-16 : f32
    %228 = vector.broadcast %cst_114 : f32 to vector<1x16xf32>
    %229 = arith.addf %227, %228 : vector<1x16xf32>
    %230 = arith.divf %35, %229 : vector<1x16xf32>
    %c24_i32 = arith.constant 24 : i32
    %cst_115 = arith.constant dense<0.000000e+00> : vector<1x256xf32>
    %231 = tpu.matmul %230, %34, %cst_115 {dimension_numbers = #tpu.dot_dimension_numbers<[1], [0], [0], [1], [0, 0, 1, 1], [], []>} : vector<1x16xf32>, vector<16x256xf32>, vector<1x256xf32> -> vector<1x256xf32>
    %cst_116 = arith.constant 1.000000e-16 : f32
    %232 = vector.broadcast %cst_116 : f32 to vector<1x256xf32>
    %233 = arith.addf %231, %232 : vector<1x256xf32>
    %234 = arith.divf %36, %233 : vector<1x256xf32>
    %cst_117 = arith.constant dense<0.000000e+00> : vector<1x16xf32>
    %235 = tpu.matmul %234, %34, %cst_117 {dimension_numbers = #tpu.dot_dimension_numbers<[1], [1], [0], [0], [0, 0, 1, 0], [], []>} : vector<1x256xf32>, vector<16x256xf32>, vector<1x16xf32> -> vector<1x16xf32>
    %cst_118 = arith.constant 1.000000e-16 : f32
    %236 = vector.broadcast %cst_118 : f32 to vector<1x16xf32>
    %237 = arith.addf %235, %236 : vector<1x16xf32>
    %238 = arith.divf %35, %237 : vector<1x16xf32>
    %c25_i32 = arith.constant 25 : i32
    %cst_119 = arith.constant dense<0.000000e+00> : vector<1x256xf32>
    %239 = tpu.matmul %238, %34, %cst_119 {dimension_numbers = #tpu.dot_dimension_numbers<[1], [0], [0], [1], [0, 0, 1, 1], [], []>} : vector<1x16xf32>, vector<16x256xf32>, vector<1x256xf32> -> vector<1x256xf32>
    %cst_120 = arith.constant 1.000000e-16 : f32
    %240 = vector.broadcast %cst_120 : f32 to vector<1x256xf32>
    %241 = arith.addf %239, %240 : vector<1x256xf32>
    %242 = arith.divf %36, %241 : vector<1x256xf32>
    %cst_121 = arith.constant dense<0.000000e+00> : vector<1x16xf32>
    %243 = tpu.matmul %242, %34, %cst_121 {dimension_numbers = #tpu.dot_dimension_numbers<[1], [1], [0], [0], [0, 0, 1, 0], [], []>} : vector<1x256xf32>, vector<16x256xf32>, vector<1x16xf32> -> vector<1x16xf32>
    %cst_122 = arith.constant 1.000000e-16 : f32
    %244 = vector.broadcast %cst_122 : f32 to vector<1x16xf32>
    %245 = arith.addf %243, %244 : vector<1x16xf32>
    %246 = arith.divf %35, %245 : vector<1x16xf32>
    %c26_i32 = arith.constant 26 : i32
    %cst_123 = arith.constant dense<0.000000e+00> : vector<1x256xf32>
    %247 = tpu.matmul %246, %34, %cst_123 {dimension_numbers = #tpu.dot_dimension_numbers<[1], [0], [0], [1], [0, 0, 1, 1], [], []>} : vector<1x16xf32>, vector<16x256xf32>, vector<1x256xf32> -> vector<1x256xf32>
    %cst_124 = arith.constant 1.000000e-16 : f32
    %248 = vector.broadcast %cst_124 : f32 to vector<1x256xf32>
    %249 = arith.addf %247, %248 : vector<1x256xf32>
    %250 = arith.divf %36, %249 : vector<1x256xf32>
    %cst_125 = arith.constant dense<0.000000e+00> : vector<1x16xf32>
    %251 = tpu.matmul %250, %34, %cst_125 {dimension_numbers = #tpu.dot_dimension_numbers<[1], [1], [0], [0], [0, 0, 1, 0], [], []>} : vector<1x256xf32>, vector<16x256xf32>, vector<1x16xf32> -> vector<1x16xf32>
    %cst_126 = arith.constant 1.000000e-16 : f32
    %252 = vector.broadcast %cst_126 : f32 to vector<1x16xf32>
    %253 = arith.addf %251, %252 : vector<1x16xf32>
    %254 = arith.divf %35, %253 : vector<1x16xf32>
    %c27_i32 = arith.constant 27 : i32
    %cst_127 = arith.constant dense<0.000000e+00> : vector<1x256xf32>
    %255 = tpu.matmul %254, %34, %cst_127 {dimension_numbers = #tpu.dot_dimension_numbers<[1], [0], [0], [1], [0, 0, 1, 1], [], []>} : vector<1x16xf32>, vector<16x256xf32>, vector<1x256xf32> -> vector<1x256xf32>
    %cst_128 = arith.constant 1.000000e-16 : f32
    %256 = vector.broadcast %cst_128 : f32 to vector<1x256xf32>
    %257 = arith.addf %255, %256 : vector<1x256xf32>
    %258 = arith.divf %36, %257 : vector<1x256xf32>
    %cst_129 = arith.constant dense<0.000000e+00> : vector<1x16xf32>
    %259 = tpu.matmul %258, %34, %cst_129 {dimension_numbers = #tpu.dot_dimension_numbers<[1], [1], [0], [0], [0, 0, 1, 0], [], []>} : vector<1x256xf32>, vector<16x256xf32>, vector<1x16xf32> -> vector<1x16xf32>
    %cst_130 = arith.constant 1.000000e-16 : f32
    %260 = vector.broadcast %cst_130 : f32 to vector<1x16xf32>
    %261 = arith.addf %259, %260 : vector<1x16xf32>
    %262 = arith.divf %35, %261 : vector<1x16xf32>
    %c28_i32 = arith.constant 28 : i32
    %cst_131 = arith.constant dense<0.000000e+00> : vector<1x256xf32>
    %263 = tpu.matmul %262, %34, %cst_131 {dimension_numbers = #tpu.dot_dimension_numbers<[1], [0], [0], [1], [0, 0, 1, 1], [], []>} : vector<1x16xf32>, vector<16x256xf32>, vector<1x256xf32> -> vector<1x256xf32>
    %cst_132 = arith.constant 1.000000e-16 : f32
    %264 = vector.broadcast %cst_132 : f32 to vector<1x256xf32>
    %265 = arith.addf %263, %264 : vector<1x256xf32>
    %266 = arith.divf %36, %265 : vector<1x256xf32>
    %cst_133 = arith.constant dense<0.000000e+00> : vector<1x16xf32>
    %267 = tpu.matmul %266, %34, %cst_133 {dimension_numbers = #tpu.dot_dimension_numbers<[1], [1], [0], [0], [0, 0, 1, 0], [], []>} : vector<1x256xf32>, vector<16x256xf32>, vector<1x16xf32> -> vector<1x16xf32>
    %cst_134 = arith.constant 1.000000e-16 : f32
    %268 = vector.broadcast %cst_134 : f32 to vector<1x16xf32>
    %269 = arith.addf %267, %268 : vector<1x16xf32>
    %270 = arith.divf %35, %269 : vector<1x16xf32>
    %c29_i32 = arith.constant 29 : i32
    %cst_135 = arith.constant dense<0.000000e+00> : vector<1x256xf32>
    %271 = tpu.matmul %270, %34, %cst_135 {dimension_numbers = #tpu.dot_dimension_numbers<[1], [0], [0], [1], [0, 0, 1, 1], [], []>} : vector<1x16xf32>, vector<16x256xf32>, vector<1x256xf32> -> vector<1x256xf32>
    %cst_136 = arith.constant 1.000000e-16 : f32
    %272 = vector.broadcast %cst_136 : f32 to vector<1x256xf32>
    %273 = arith.addf %271, %272 : vector<1x256xf32>
    %274 = arith.divf %36, %273 : vector<1x256xf32>
    %cst_137 = arith.constant dense<0.000000e+00> : vector<1x16xf32>
    %275 = tpu.matmul %274, %34, %cst_137 {dimension_numbers = #tpu.dot_dimension_numbers<[1], [1], [0], [0], [0, 0, 1, 0], [], []>} : vector<1x256xf32>, vector<16x256xf32>, vector<1x16xf32> -> vector<1x16xf32>
    %cst_138 = arith.constant 1.000000e-16 : f32
    %276 = vector.broadcast %cst_138 : f32 to vector<1x16xf32>
    %277 = arith.addf %275, %276 : vector<1x16xf32>
    %278 = arith.divf %35, %277 : vector<1x16xf32>
    %279 = arith.mulf %34, %14 : vector<16x256xf32>
    %cst_139 = arith.constant dense<0.000000e+00> : vector<1x256xf32>
    %280 = tpu.matmul %278, %279, %cst_139 {dimension_numbers = #tpu.dot_dimension_numbers<[1], [0], [0], [1], [0, 0, 1, 1], [], []>} : vector<1x16xf32>, vector<16x256xf32>, vector<1x256xf32> -> vector<1x256xf32>
    %281 = arith.mulf %280, %274 : vector<1x256xf32>
    %cst_140 = arith.constant dense<0.000000e+00> : vector<1xf32>
    %282 = vector.multi_reduction <add>, %281, %cst_140 [1] : vector<1x256xf32> to vector<1xf32>
    %283 = vector.shape_cast %282 : vector<1xf32> to vector<1x1xf32>
    %cst_141 = arith.constant 1.000000e+02 : f32
    %284 = vector.broadcast %cst_141 : f32 to vector<1x1xf32>
    %285 = arith.mulf %283, %284 : vector<1x1xf32>
    %cst_142 = arith.constant 0.000000e+00 : f32
    %286 = vector.broadcast %cst_142 : f32 to vector<8x128xf32>
    %287 = vector.broadcast %285 : vector<1x1xf32> to vector<8x128xf32>
    %288 = arith.addf %287, %286 : vector<8x128xf32>
    %c0_143 = arith.constant 0 : index
    %c0_144 = arith.constant 0 : index
    %289 = vector.load %arg3[%c0_143, %c0_144] : memref<8x128xf32, #tpu.memory_space<vmem>>, vector<8x128xf32>
    tpu.vector_store %arg3[%c0_143, %c0_144], %288 {strides = array<i32>} : memref<8x128xf32, #tpu.memory_space<vmem>>, vector<8x128xf32>,
    return
  }
}

</mosaic_0001>

<llo_original>
// kernel: tpu_custom_call.1
$region0: #{tpu_custom_call.1}
  #allocation0 [shape = 'u32[]', space=smem, size = 0x4, offset = 0x4, fixed_abs, tag = 'smem constant byte address 0x4 - core index']
  #allocation1 [shape = 'u32[72,128]{1,0:T(1,128)}', space=vmem, size = 0x9000, scoped, tag = 'internal scratch']
  %s0 = inlined_call_operand.vmem [shape: f32[16,64], index: 0, kind: input, shape index: {}]
  %s1 = inlined_call_operand.vmem [shape: f32[256,64], index: 1, kind: input, shape index: {}]
  %s2 = inlined_call_operand.hbm [shape: bf16[16,256], index: 2, kind: output, shape index: {0}]
  %s3 = inlined_call_operand.hbm [shape: f32[8,128], index: 3, kind: output, shape index: {1}]
  %4 = xla_tuple %s2, %s3
  %s5 = sld [smem:[#allocation0]]
  $region26: #{tpu_custom_call.1} parent=0
    _
  %s7 = ssub.s32 1, %s5
  %s8 = scalar_select 0, %s7, %s5
  $region1: #{tpu_custom_call.1} parent=0
    #allocation2 [shape = 'u8[8192]{0}', space=vmem, size = 0x2000, scoped, tag = 'output window, operand 0, single buffered']
    #allocation3 [shape = 's32[1]{0}', space=sflag, size = 0x4, scoped, tag = 'scoped memory for tpu_custom_call.1']
    #allocation4 [shape = 'u8[4096]{0}', space=vmem, size = 0x1000, scoped, tag = 'output window, operand 1, single buffered']
    #allocation5 [shape = 's32[1]{0}', space=sflag, size = 0x4, scoped, tag = 'scoped memory for tpu_custom_call.1']
    %9 = vsyncpa [#allocation3], 0
    %10 = vsyncpa [#allocation5], 0
    // Predicated region
    $region2: #{tpu_custom_call.1} parent=1 // pred_check
      _
    $region3: #{tpu_custom_call.1} parent=1 // pred_check_branch
      %12 = sbr.rel (0) target = $region5
    $region4: #{tpu_custom_call.1} parent=1 // pred_region
      _
    $region5: #{tpu_custom_call.1} parent=1 // pred_fallthru
      _
    // Predicated region
    $region6: #{tpu_custom_call.1} parent=1 // pred_check
      _
    $region7: #{tpu_custom_call.1} parent=1 // pred_check_branch
      %14 = sbr.rel (0) target = $region9
    $region8: #{tpu_custom_call.1} parent=1 // pred_region
      _
    $region9: #{tpu_custom_call.1} parent=1 // pred_fallthru
      _
    %v15 = vld [vmem:[%s0] sm:$0xff]
    %v16 = vld [vmem:[%s0 + $0x8] sm:$0xff]
    %v17 = vld [vmem:[%s1] sm:$0xff]
    %v18 = vld [vmem:[%s1 + $0x8] sm:$0xff]
    %v19 = vld [vmem:[%s1 + $0x10] sm:$0xff]
    %v20 = vld [vmem:[%s1 + $0x18] sm:$0xff]
    %v21 = vld [vmem:[%s1 + $0x20] sm:$0xff]
    %v22 = vld [vmem:[%s1 + $0x28] sm:$0xff]
    %v23 = vld [vmem:[%s1 + $0x30] sm:$0xff]
    %v24 = vld [vmem:[%s1 + $0x38] sm:$0xff]
    %v25 = vld [vmem:[%s1 + $0x40] sm:$0xff]
    %v26 = vld [vmem:[%s1 + $0x48] sm:$0xff]
    %v27 = vld [vmem:[%s1 + $0x50] sm:$0xff]
    %v28 = vld [vmem:[%s1 + $0x58] sm:$0xff]
    %v29 = vld [vmem:[%s1 + $0x60] sm:$0xff]
    %v30 = vld [vmem:[%s1 + $0x68] sm:$0xff]
    %v31 = vld [vmem:[%s1 + $0x70] sm:$0xff]
    %v32 = vld [vmem:[%s1 + $0x78] sm:$0xff]
    %v33 = vld [vmem:[%s1 + $0x80] sm:$0xff]
    %v34 = vld [vmem:[%s1 + $0x88] sm:$0xff]
    %v35 = vld [vmem:[%s1 + $0x90] sm:$0xff]
    %v36 = vld [vmem:[%s1 + $0x98] sm:$0xff]
    %v37 = vld [vmem:[%s1 + $0xa0] sm:$0xff]
    %v38 = vld [vmem:[%s1 + $0xa8] sm:$0xff]
    %v39 = vld [vmem:[%s1 + $0xb0] sm:$0xff]
    %v40 = vld [vmem:[%s1 + $0xb8] sm:$0xff]
    %v41 = vld [vmem:[%s1 + $0xc0] sm:$0xff]
    %v42 = vld [vmem:[%s1 + $0xc8] sm:$0xff]
    %v43 = vld [vmem:[%s1 + $0xd0] sm:$0xff]
    %v44 = vld [vmem:[%s1 + $0xd8] sm:$0xff]
    %v45 = vld [vmem:[%s1 + $0xe0] sm:$0xff]
    %v46 = vld [vmem:[%s1 + $0xe8] sm:$0xff]
    %v47 = vld [vmem:[%s1 + $0xf0] sm:$0xff]
    %v48 = vld [vmem:[%s1 + $0xf8] sm:$0xff]
    %vm49 = vcmask 523264
    %v51 = vsel %vm49, %v15, 0
    %v54 = vsel %vm49, %v16, 0
    %v57 = vsel %vm49, %v17, 0
    %v60 = vsel %vm49, %v18, 0
    %v63 = vsel %vm49, %v19, 0
    %v66 = vsel %vm49, %v20, 0
    %v69 = vsel %vm49, %v21, 0
    %v72 = vsel %vm49, %v22, 0
    %v75 = vsel %vm49, %v23, 0
    %v78 = vsel %vm49, %v24, 0
    %v81 = vsel %vm49, %v25, 0
    %v84 = vsel %vm49, %v26, 0
    %v87 = vsel %vm49, %v27, 0
    %v90 = vsel %vm49, %v28, 0
    %v93 = vsel %vm49, %v29, 0
    %v96 = vsel %vm49, %v30, 0
    %v99 = vsel %vm49, %v31, 0
    %v102 = vsel %vm49, %v32, 0
    %v105 = vsel %vm49, %v33, 0
    %v108 = vsel %vm49, %v34, 0
    %v111 = vsel %vm49, %v35, 0
    %v114 = vsel %vm49, %v36, 0
    %v117 = vsel %vm49, %v37, 0
    %v120 = vsel %vm49, %v38, 0
    %v123 = vsel %vm49, %v39, 0
    %v126 = vsel %vm49, %v40, 0
    %v129 = vsel %vm49, %v41, 0
    %v132 = vsel %vm49, %v42, 0
    %v135 = vsel %vm49, %v43, 0
    %v138 = vsel %vm49, %v44, 0
    %v141 = vsel %vm49, %v45, 0
    %v144 = vsel %vm49, %v46, 0
    %v147 = vsel %vm49, %v47, 0
    %v150 = vsel %vm49, %v48, 0
    %152 = vmatpush.xpose.msra.mxu0 %v102
    %153 = vmatpush.xpose.msra.mxu0 %v99
    %154 = vmatpush.xpose.msra.mxu0 %v96
    %155 = vmatpush.xpose.msra.mxu0 %v93
    %156 = vmatpush.xpose.msra.mxu0 %v90
    %157 = vmatpush.xpose.msra.mxu0 %v87
    %158 = vmatpush.xpose.msra.mxu0 %v84
    %159 = vmatpush.xpose.msra.mxu0 %v81
    %160 = vmatpush.xpose.msra.mxu0 %v78
    %161 = vmatpush.xpose.msra.mxu0 %v75
    %162 = vmatpush.xpose.msra.mxu0 %v72
    %163 = vmatpush.xpose.msra.mxu0 %v69
    %164 = vmatpush.xpose.msra.mxu0 %v66
    %165 = vmatpush.xpose.msra.mxu0 %v63
    %166 = vmatpush.xpose.msra.mxu0 %v60
    %167 = vmatpush.xpose.msra.mxu0 %v57
    %168 = vmatmul.f32.gmra.mxu0 %v51
    %v169 = vpop.f32.mrf.mxu0
    %v170 = vadd.f32 0.0, %v169
    %171 = vmatmul.f32.gmra.mxu0 %v54
    %v172 = vpop.f32.mrf.mxu0
    %v173 = vadd.f32 0.0, %v172
    %174 = vdwg.mxu0
    %175 = vmatpush.xpose.msra.mxu0 %v150
    %176 = vmatpush.xpose.msra.mxu0 %v147
    %177 = vmatpush.xpose.msra.mxu0 %v144
    %178 = vmatpush.xpose.msra.mxu0 %v141
    %179 = vmatpush.xpose.msra.mxu0 %v138
    %180 = vmatpush.xpose.msra.mxu0 %v135
    %181 = vmatpush.xpose.msra.mxu0 %v132
    %182 = vmatpush.xpose.msra.mxu0 %v129
    %183 = vmatpush.xpose.msra.mxu0 %v126
    %184 = vmatpush.xpose.msra.mxu0 %v123
    %185 = vmatpush.xpose.msra.mxu0 %v120
    %186 = vmatpush.xpose.msra.mxu0 %v117
    %187 = vmatpush.xpose.msra.mxu0 %v114
    %188 = vmatpush.xpose.msra.mxu0 %v111
    %189 = vmatpush.xpose.msra.mxu0 %v108
    %190 = vmatpush.xpose.msra.mxu0 %v105
    %191 = vmatmul.f32.gmra.mxu0 %v51
    %v192 = vpop.f32.mrf.mxu0
    %v193 = vadd.f32 0.0, %v192
    %194 = vmatmul.f32.gmra.mxu0 %v54
    %v195 = vpop.f32.mrf.mxu0
    %v196 = vadd.f32 0.0, %v195
    %197 = vdwg.mxu0
    %v198 = vmul.f32 %v15, %v15
    %v199 = vmul.f32 %v16, %v16
    %v200 = vsel %vm49, %v198, 0.0
    %201 = vadd.xlane.f32.xlu0 %v200
    %v202 = vpop.xlane.xlu0 %201
    %v203 = vsel %vm49, %v199, 0.0
    %204 = vadd.xlane.f32.xlu0 %v203
    %v205 = vpop.xlane.xlu0 %204
    %v206 = vmul.f32 %v17, %v17
    %v207 = vmul.f32 %v18, %v18
    %v208 = vmul.f32 %v19, %v19
    %v209 = vmul.f32 %v20, %v20
    %v210 = vmul.f32 %v21, %v21
    %v211 = vmul.f32 %v22, %v22
    %v212 = vmul.f32 %v23, %v23
    %v213 = vmul.f32 %v24, %v24
    %v214 = vmul.f32 %v25, %v25
    %v215 = vmul.f32 %v26, %v26
    %v216 = vmul.f32 %v27, %v27
    %v217 = vmul.f32 %v28, %v28
    %v218 = vmul.f32 %v29, %v29
    %v219 = vmul.f32 %v30, %v30
    %v220 = vmul.f32 %v31, %v31
    %v221 = vmul.f32 %v32, %v32
    %v222 = vmul.f32 %v33, %v33
    %v223 = vmul.f32 %v34, %v34
    %v224 = vmul.f32 %v35, %v35
    %v225 = vmul.f32 %v36, %v36
    %v226 = vmul.f32 %v37, %v37
    %v227 = vmul.f32 %v38, %v38
    %v228 = vmul.f32 %v39, %v39
    %v229 = vmul.f32 %v40, %v40
    %v230 = vmul.f32 %v41, %v41
    %v231 = vmul.f32 %v42, %v42
    %v232 = vmul.f32 %v43, %v43
    %v233 = vmul.f32 %v44, %v44
    %v234 = vmul.f32 %v45, %v45
    %v235 = vmul.f32 %v46, %v46
    %v236 = vmul.f32 %v47, %v47
    %v237 = vmul.f32 %v48, %v48
    %v239 = vsel %vm49, 1.0, 0
    %v242 = vsel %vm49, %v206, 0
    %v245 = vsel %vm49, %v207, 0
    %v248 = vsel %vm49, %v208, 0
    %v251 = vsel %vm49, %v209, 0
    %v254 = vsel %vm49, %v210, 0
    %v257 = vsel %vm49, %v211, 0
    %v260 = vsel %vm49, %v212, 0
    %v263 = vsel %vm49, %v213, 0
    %v266 = vsel %vm49, %v214, 0
    %v269 = vsel %vm49, %v215, 0
    %v272 = vsel %vm49, %v216, 0
    %v275 = vsel %vm49, %v217, 0
    %v278 = vsel %vm49, %v218, 0
    %v281 = vsel %vm49, %v219, 0
    %v284 = vsel %vm49, %v220, 0
    %v287 = vsel %vm49, %v221, 0
    %v290 = vsel %vm49, %v222, 0
    %v293 = vsel %vm49, %v223, 0
    %v296 = vsel %vm49, %v224, 0
    %v299 = vsel %vm49, %v225, 0
    %v302 = vsel %vm49, %v226, 0
    %v305 = vsel %vm49, %v227, 0
    %v308 = vsel %vm49, %v228, 0
    %v311 = vsel %vm49, %v229, 0
    %v314 = vsel %vm49, %v230, 0
    %v317 = vsel %vm49, %v231, 0
    %v320 = vsel %vm49, %v232, 0
    %v323 = vsel %vm49, %v233, 0
    %v326 = vsel %vm49, %v234, 0
    %v329 = vsel %vm49, %v235, 0
    %v332 = vsel %vm49, %v236, 0
    %v335 = vsel %vm49, %v237, 0
    %337 = vmatpush.xpose.msra.mxu0 %v287
    %338 = vmatpush.xpose.msra.mxu0 %v284
    %339 = vmatpush.xpose.msra.mxu0 %v281
    %340 = vmatpush.xpose.msra.mxu0 %v278
    %341 = vmatpush.xpose.msra.mxu0 %v275
    %342 = vmatpush.xpose.msra.mxu0 %v272
    %343 = vmatpush.xpose.msra.mxu0 %v269
    %344 = vmatpush.xpose.msra.mxu0 %v266
    %345 = vmatpush.xpose.msra.mxu0 %v263
    %346 = vmatpush.xpose.msra.mxu0 %v260
    %347 = vmatpush.xpose.msra.mxu0 %v257
    %348 = vmatpush.xpose.msra.mxu0 %v254
    %349 = vmatpush.xpose.msra.mxu0 %v251
    %350 = vmatpush.xpose.msra.mxu0 %v248
    %351 = vmatpush.xpose.msra.mxu0 %v245
    %352 = vmatpush.xpose.msra.mxu0 %v242
    %353 = vmatmul.f32.gmra.mxu0 %v239
    %v354 = vpop.f32.mrf.mxu0
    %v355 = vadd.f32 0.0, %v354
    %356 = vdwg.mxu0
    %357 = vmatpush.xpose.msra.mxu0 %v335
    %358 = vmatpush.xpose.msra.mxu0 %v332
    %359 = vmatpush.xpose.msra.mxu0 %v329
    %360 = vmatpush.xpose.msra.mxu0 %v326
    %361 = vmatpush.xpose.msra.mxu0 %v323
    %362 = vmatpush.xpose.msra.mxu0 %v320
    %363 = vmatpush.xpose.msra.mxu0 %v317
    %364 = vmatpush.xpose.msra.mxu0 %v314
    %365 = vmatpush.xpose.msra.mxu0 %v311
    %366 = vmatpush.xpose.msra.mxu0 %v308
    %367 = vmatpush.xpose.msra.mxu0 %v305
    %368 = vmatpush.xpose.msra.mxu0 %v302
    %369 = vmatpush.xpose.msra.mxu0 %v299
    %370 = vmatpush.xpose.msra.mxu0 %v296
    %371 = vmatpush.xpose.msra.mxu0 %v293
    %372 = vmatpush.xpose.msra.mxu0 %v290
    %373 = vmatmul.f32.gmra.mxu0 %v239
    %v374 = vpop.f32.mrf.mxu0
    %v375 = vadd.f32 0.0, %v374
    %376 = vdwg.mxu0
    %v377 = vperm.slane %v355, 0
    %v378 = vperm.slane %v375, 0
    %v379 = vadd.f32 %v202, %v377
    %v380 = vadd.f32 %v202, %v378
    %v381 = vadd.f32 %v205, %v377
    %v382 = vadd.f32 %v205, %v378
    %v383 = vmul.f32 %v170, 2.0
    %v384 = vmul.f32 %v193, 2.0
    %v385 = vmul.f32 %v173, 2.0
    %v386 = vmul.f32 %v196, 2.0
    %v387 = vsub.f32 %v379, %v383
    %v388 = vsub.f32 %v380, %v384
    %v389 = vsub.f32 %v381, %v385
    %v390 = vsub.f32 %v382, %v386
    %v391 = vsub.f32 0.0, %v387
    %v392 = vsub.f32 0.0, %v388
    %v393 = vsub.f32 0.0, %v389
    %v394 = vsub.f32 0.0, %v390
    %v395 = vrcp.pop 0.2
    %v396 = vmul.f32 0.2, %v395
    %v397 = vsub.f32 1.0, %v396
    %v398 = vmul.f32 %v395, %v397
    %v399 = vadd.f32 %v395, %v398
    %vm400 = vweird.f32 %v395
    %v401 = vsel %vm400, %v395, %v399
    %v402 = vmul.f32 %v391, %v401
    %v403 = vmul.f32 %v392, %v401
    %v404 = vmul.f32 %v393, %v401
    %v405 = vmul.f32 %v394, %v401
    %v406 = vmax.f32 %v402, %v404
    %v407 = vrot.slane %v406, 4
    %v408 = vmax.f32 %v406, %v407
    %v409 = vrot.slane %v408, 2
    %v410 = vmax.f32 %v408, %v409
    %v411 = vrot.slane %v410, 1
    %v412 = vmax.f32 %v410, %v411
    %v413 = vmax.f32 %v403, %v405
    %v414 = vrot.slane %v413, 4
    %v415 = vmax.f32 %v413, %v414
    %v416 = vrot.slane %v415, 2
    %v417 = vmax.f32 %v415, %v416
    %v418 = vrot.slane %v417, 1
    %v419 = vmax.f32 %v417, %v418
    %v420 = vsub.f32 %v402, %v412
    %v421 = vsub.f32 %v403, %v419
    %v422 = vsub.f32 %v404, %v412
    %v423 = vsub.f32 %v405, %v419
    %v424 = vmul.f32 %v420, 1.442695
    %v425 = vpow.pop %v424
    %v426 = vmul.f32 %v421, 1.442695
    %v427 = vpow.pop %v426
    %v428 = vmul.f32 %v422, 1.442695
    %v429 = vpow.pop %v428
    %v430 = vmul.f32 %v423, 1.442695
    %v431 = vpow.pop %v430
    %v432 = vadd.f32 %v425, %v429
    %v433 = vrot.slane %v432, 4
    %v434 = vadd.f32 %v432, %v433
    %v435 = vrot.slane %v434, 2
    %v436 = vadd.f32 %v434, %v435
    %v437 = vrot.slane %v436, 1
    %v438 = vadd.f32 %v436, %v437
    %v439 = vadd.f32 %v427, %v431
    %v440 = vrot.slane %v439, 4
    %v441 = vadd.f32 %v439, %v440
    %v442 = vrot.slane %v441, 2
    %v443 = vadd.f32 %v441, %v442
    %v444 = vrot.slane %v443, 1
    %v445 = vadd.f32 %v443, %v444
    %v446 = vrcp.pop %v438
    %v447 = vmul.f32 %v438, %v446
    %v448 = vsub.f32 1.0, %v447
    %v449 = vmul.f32 %v446, %v448
    %v450 = vadd.f32 %v446, %v449
    %vm451 = vweird.f32 %v438
    %vm452 = vweird.f32 %v446
    %vm453 = vmor %vm451, %vm452
    %v454 = vsel %vm453, %v446, %v450
    %v455 = vand.u32 2147483647, %v438
    %vm456 = vcmp.eq.f32.partialorder %v455, 8.507059e+37
    %v457 = vand.u32 %v438, 2147483648
    %v458 = vor.u32 1.1754944e-38, %v457
    %v459 = vsel %vm456, %v458, %v454
    %v460 = vmul.f32 %v425, %v459
    %v461 = vrcp.pop %v445
    %v462 = vmul.f32 %v445, %v461
    %v463 = vsub.f32 1.0, %v462
    %v464 = vmul.f32 %v461, %v463
    %v465 = vadd.f32 %v461, %v464
    %vm466 = vweird.f32 %v445
    %vm467 = vweird.f32 %v461
    %vm468 = vmor %vm466, %vm467
    %v469 = vsel %vm468, %v461, %v465
    %v470 = vand.u32 2147483647, %v445
    %vm471 = vcmp.eq.f32.partialorder %v470, 8.507059e+37
    %v472 = vand.u32 %v445, 2147483648
    %v473 = vor.u32 1.1754944e-38, %v472
    %v474 = vsel %vm471, %v473, %v469
    %v475 = vmul.f32 %v427, %v474
    %v476 = vmul.f32 %v429, %v459
    %v477 = vmul.f32 %v431, %v474
    %v478 = vpack.c.bf16 %v475, %v460
    %v479 = vpack.c.bf16 %v477, %v476
    %480 = vst [vmem:[#allocation2] sm:$0xff] %v478
    %481 = vst [vmem:[#allocation2 + $0x8] sm:$0xff] %v479
    %v482 = vmul.f32 %v391, 20.0
    %v483 = vmul.f32 %v392, 20.0
    %v484 = vmul.f32 %v393, 20.0
    %v485 = vmul.f32 %v394, 20.0
    %v486 = vmul.f32 %v482, 1.442695
    %v487 = vpow.pop %v486
    %v488 = vmul.f32 %v483, 1.442695
    %v489 = vpow.pop %v488
    %v490 = vmul.f32 %v484, 1.442695
    %v491 = vpow.pop %v490
    %v492 = vmul.f32 %v485, 1.442695
    %v493 = vpow.pop %v492
    %vm494 = vcmask 130048
    %v496 = vsel %vm494, 0.0625, 0
    %498 = vmatpush.msra.mxu0 0.0
    %499 = vmatpush.msra.mxu0 0.0
    %500 = vmatpush.msra.mxu0 0.0
    %501 = vmatpush.msra.mxu0 0.0
    %502 = vmatpush.msra.mxu0 0.0
    %503 = vmatpush.msra.mxu0 0.0
    %504 = vmatpush.msra.mxu0 0.0
    %505 = vmatpush.msra.mxu0 0.0
    %506 = vmatpush.msra.mxu0 0.0
    %507 = vmatpush.msra.mxu0 0.0
    %508 = vmatpush.msra.mxu0 0.0
    %509 = vmatpush.msra.mxu0 0.0
    %510 = vmatpush.msra.mxu0 0.0
    %511 = vmatpush.msra.mxu0 0.0
    %512 = vmatpush.msra.mxu0 %v491
    %513 = vmatpush.msra.mxu0 %v487
    %514 = vmatmul.f32.gmra.mxu0 %v496
    %v515 = vpop.f32.mrf.mxu0
    %v516 = vadd.f32 1e-16, %v515
    %517 = vdwg.mxu0
    %518 = vmatpush.msra.mxu0 0.0
    %519 = vmatpush.msra.mxu0 0.0
    %520 = vmatpush.msra.mxu0 0.0
    %521 = vmatpush.msra.mxu0 0.0
    %522 = vmatpush.msra.mxu0 0.0
    %523 = vmatpush.msra.mxu0 0.0
    %524 = vmatpush.msra.mxu0 0.0
    %525 = vmatpush.msra.mxu0 0.0
    %526 = vmatpush.msra.mxu0 0.0
    %527 = vmatpush.msra.mxu0 0.0
    %528 = vmatpush.msra.mxu0 0.0
    %529 = vmatpush.msra.mxu0 0.0
    %530 = vmatpush.msra.mxu0 0.0
    %531 = vmatpush.msra.mxu0 0.0
    %532 = vmatpush.msra.mxu0 %v493
    %533 = vmatpush.msra.mxu0 %v489
    %534 = vmatmul.f32.gmra.mxu0 %v496
    %v535 = vpop.f32.mrf.mxu0
    %v536 = vadd.f32 1e-16, %v535
    %537 = vdwg.mxu0
    %v538 = vrcp.pop %v516
    %v539 = vmul.f32 %v516, %v538
    %v540 = vsub.f32 1.0, %v539
    %v541 = vmul.f32 %v538, %v540
    %v542 = vadd.f32 %v538, %v541
    %vm543 = vweird.f32 %v516
    %vm544 = vweird.f32 %v538
    %vm545 = vmor %vm543, %vm544
    %v546 = vsel %vm545, %v538, %v542
    %v547 = vand.u32 2147483647, %v516
    %vm548 = vcmp.eq.f32.partialorder %v547, 8.507059e+37
    %v549 = vand.u32 %v516, 2147483648
    %v550 = vor.u32 1.1754944e-38, %v549
    %v551 = vsel %vm548, %v550, %v546
    %v552 = vmul.f32 0.00390625, %v551
    %v553 = vrcp.pop %v536
    %v554 = vmul.f32 %v536, %v553
    %v555 = vsub.f32 1.0, %v554
    %v556 = vmul.f32 %v553, %v555
    %v557 = vadd.f32 %v553, %v556
    %vm558 = vweird.f32 %v536
    %vm559 = vweird.f32 %v553
    %vm560 = vmor %vm558, %vm559
    %v561 = vsel %vm560, %v553, %v557
    %v562 = vand.u32 2147483647, %v536
    %vm563 = vcmp.eq.f32.partialorder %v562, 8.507059e+37
    %v564 = vand.u32 %v536, 2147483648
    %v565 = vor.u32 1.1754944e-38, %v564
    %v566 = vsel %vm563, %v565, %v561
    %v567 = vmul.f32 0.00390625, %v566
    %568 = vmatpush.xpose.msra.mxu0 0.0
    %569 = vmatpush.xpose.msra.mxu0 0.0
    %570 = vmatpush.xpose.msra.mxu0 0.0
    %571 = vmatpush.xpose.msra.mxu0 0.0
    %572 = vmatpush.xpose.msra.mxu0 0.0
    %573 = vmatpush.xpose.msra.mxu0 0.0
    %574 = vmatpush.xpose.msra.mxu0 0.0
    %575 = vmatpush.xpose.msra.mxu0 0.0
    %576 = vmatpush.xpose.msra.mxu0 0.0
    %577 = vmatpush.xpose.msra.mxu0 0.0
    %578 = vmatpush.xpose.msra.mxu0 0.0
    %579 = vmatpush.xpose.msra.mxu0 0.0
    %580 = vmatpush.xpose.msra.mxu0 0.0
    %581 = vmatpush.xpose.msra.mxu0 0.0
    %582 = vmatpush.xpose.msra.mxu0 %v491
    %583 = vmatpush.xpose.msra.mxu0 %v487
    %584 = vmatmul.f32.gmra.mxu0 %v552
    %v585 = vpop.f32.mrf.mxu0
    %v586 = vadd.f32 1e-16, %v585
    %587 = vdwg.mxu0
    %588 = vmatpush.xpose.msra.mxu0 0.0
    %589 = vmatpush.xpose.msra.mxu0 0.0
    %590 = vmatpush.xpose.msra.mxu0 0.0
    %591 = vmatpush.xpose.msra.mxu0 0.0
    %592 = vmatpush.xpose.msra.mxu0 0.0
    %593 = vmatpush.xpose.msra.mxu0 0.0
    %594 = vmatpush.xpose.msra.mxu0 0.0
    %595 = vmatpush.xpose.msra.mxu0 0.0
    %596 = vmatpush.xpose.msra.mxu0 0.0
    %597 = vmatpush.xpose.msra.mxu0 0.0
    %598 = vmatpush.xpose.msra.mxu0 0.0
    %599 = vmatpush.xpose.msra.mxu0 0.0
    %600 = vmatpush.xpose.msra.mxu0 0.0
    %601 = vmatpush.xpose.msra.mxu0 0.0
    %602 = vmatpush.xpose.msra.mxu0 %v493
    %603 = vmatpush.xpose.msra.mxu0 %v489
    %604 = vmatmul.f32.gmra.mxu0 %v567
    %v605 = vpop.f32.mrf.mxu0
    %v606 = vadd.f32 %v586, %v605
    %607 = vdwg.mxu0
    %v608 = vrcp.pop %v606
    %v609 = vmul.f32 %v606, %v608
    %v610 = vsub.f32 1.0, %v609
    %v611 = vmul.f32 %v608, %v610
    %v612 = vadd.f32 %v608, %v611
    %vm613 = vweird.f32 %v606
    %vm614 = vweird.f32 %v608
    %vm615 = vmor %vm613, %vm614
    %v616 = vsel %vm615, %v608, %v612
    %v617 = vand.u32 2147483647, %v606
    %vm618 = vcmp.eq.f32.partialorder %v617, 8.507059e+37
    %v619 = vand.u32 %v606, 2147483648
    %v620 = vor.u32 1.1754944e-38, %v619
    %v621 = vsel %vm618, %v620, %v616
    %v622 = vmul.f32 0.0625, %v621
    %v624 = vsel %vm494, %v622, 0
    %626 = vmatpush.msra.mxu0 0.0
    %627 = vmatpush.msra.mxu0 0.0
    %628 = vmatpush.msra.mxu0 0.0
    %629 = vmatpush.msra.mxu0 0.0
    %630 = vmatpush.msra.mxu0 0.0
    %631 = vmatpush.msra.mxu0 0.0
    %632 = vmatpush.msra.mxu0 0.0
    %633 = vmatpush.msra.mxu0 0.0
    %634 = vmatpush.msra.mxu0 0.0
    %635 = vmatpush.msra.mxu0 0.0
    %636 = vmatpush.msra.mxu0 0.0
    %637 = vmatpush.msra.mxu0 0.0
    %638 = vmatpush.msra.mxu0 0.0
    %639 = vmatpush.msra.mxu0 0.0
    %640 = vmatpush.msra.mxu0 %v491
    %641 = vmatpush.msra.mxu0 %v487
    %642 = vmatmul.f32.gmra.mxu0 %v624
    %v643 = vpop.f32.mrf.mxu0
    %v644 = vadd.f32 1e-16, %v643
    %645 = vdwg.mxu0
    %646 = vmatpush.msra.mxu0 0.0
    %647 = vmatpush.msra.mxu0 0.0
    %648 = vmatpush.msra.mxu0 0.0
    %649 = vmatpush.msra.mxu0 0.0
    %650 = vmatpush.msra.mxu0 0.0
    %651 = vmatpush.msra.mxu0 0.0
    %652 = vmatpush.msra.mxu0 0.0
    %653 = vmatpush.msra.mxu0 0.0
    %654 = vmatpush.msra.mxu0 0.0
    %655 = vmatpush.msra.mxu0 0.0
    %656 = vmatpush.msra.mxu0 0.0
    %657 = vmatpush.msra.mxu0 0.0
    %658 = vmatpush.msra.mxu0 0.0
    %659 = vmatpush.msra.mxu0 0.0
    %660 = vmatpush.msra.mxu0 %v493
    %661 = vmatpush.msra.mxu0 %v489
    %662 = vmatmul.f32.gmra.mxu0 %v624
    %v663 = vpop.f32.mrf.mxu0
    %v664 = vadd.f32 1e-16, %v663
    %665 = vdwg.mxu0
    %v666 = vrcp.pop %v644
    %v667 = vmul.f32 %v644, %v666
    %v668 = vsub.f32 1.0, %v667
    %v669 = vmul.f32 %v666, %v668
    %v670 = vadd.f32 %v666, %v669
    %vm671 = vweird.f32 %v644
    %vm672 = vweird.f32 %v666
    %vm673 = vmor %vm671, %vm672
    %v674 = vsel %vm673, %v666, %v670
    %v675 = vand.u32 2147483647, %v644
    %vm676 = vcmp.eq.f32.partialorder %v675, 8.507059e+37
    %v677 = vand.u32 %v644, 2147483648
    %v678 = vor.u32 1.1754944e-38, %v677
    %v679 = vsel %vm676, %v678, %v674
    %v680 = vmul.f32 0.00390625, %v679
    %v681 = vrcp.pop %v664
    %v682 = vmul.f32 %v664, %v681
    %v683 = vsub.f32 1.0, %v682
    %v684 = vmul.f32 %v681, %v683
    %v685 = vadd.f32 %v681, %v684
    %vm686 = vweird.f32 %v664
    %vm687 = vweird.f32 %v681
    %vm688 = vmor %vm686, %vm687
    %v689 = vsel %vm688, %v681, %v685
    %v690 = vand.u32 2147483647, %v664
    %vm691 = vcmp.eq.f32.partialorder %v690, 8.507059e+37
    %v692 = vand.u32 %v664, 2147483648
    %v693 = vor.u32 1.1754944e-38, %v692
    %v694 = vsel %vm691, %v693, %v689
    %v695 = vmul.f32 0.00390625, %v694
    %696 = vmatpush.xpose.msra.mxu0 0.0
    %697 = vmatpush.xpose.msra.mxu0 0.0
    %698 = vmatpush.xpose.msra.mxu0 0.0
    %699 = vmatpush.xpose.msra.mxu0 0.0
    %700 = vmatpush.xpose.msra.mxu0 0.0
    %701 = vmatpush.xpose.msra.mxu0 0.0
    %702 = vmatpush.xpose.msra.mxu0 0.0
    %703 = vmatpush.xpose.msra.mxu0 0.0
    %704 = vmatpush.xpose.msra.mxu0 0.0
    %705 = vmatpush.xpose.msra.mxu0 0.0
    %706 = vmatpush.xpose.msra.mxu0 0.0
    %707 = vmatpush.xpose.msra.mxu0 0.0
    %708 = vmatpush.xpose.msra.mxu0 0.0
    %709 = vmatpush.xpose.msra.mxu0 0.0
    %710 = vmatpush.xpose.msra.mxu0 %v491
    %711 = vmatpush.xpose.msra.mxu0 %v487
    %712 = vmatmul.f32.gmra.mxu0 %v680
    %v713 = vpop.f32.mrf.mxu0
    %v714 = vadd.f32 1e-16, %v713
    %715 = vdwg.mxu0
    %716 = vmatpush.xpose.msra.mxu0 0.0
    %717 = vmatpush.xpose.msra.mxu0 0.0
    %718 = vmatpush.xpose.msra.mxu0 0.0
    %719 = vmatpush.xpose.msra.mxu0 0.0
    %720 = vmatpush.xpose.msra.mxu0 0.0
    %721 = vmatpush.xpose.msra.mxu0 0.0
    %722 = vmatpush.xpose.msra.mxu0 0.0
    %723 = vmatpush.xpose.msra.mxu0 0.0
    %724 = vmatpush.xpose.msra.mxu0 0.0
    %725 = vmatpush.xpose.msra.mxu0 0.0
    %726 = vmatpush.xpose.msra.mxu0 0.0
    %727 = vmatpush.xpose.msra.mxu0 0.0
    %728 = vmatpush.xpose.msra.mxu0 0.0
    %729 = vmatpush.xpose.msra.mxu0 0.0
    %730 = vmatpush.xpose.msra.mxu0 %v493
    %731 = vmatpush.xpose.msra.mxu0 %v489
    %732 = vmatmul.f32.gmra.mxu0 %v695
    %v733 = vpop.f32.mrf.mxu0
    %v734 = vadd.f32 %v714, %v733
    %735 = vdwg.mxu0
    %v736 = vrcp.pop %v734
    %v737 = vmul.f32 %v734, %v736
    %v738 = vsub.f32 1.0, %v737
    %v739 = vmul.f32 %v736, %v738
    %v740 = vadd.f32 %v736, %v739
    %vm741 = vweird.f32 %v734
    %vm742 = vweird.f32 %v736
    %vm743 = vmor %vm741, %vm742
    %v744 = vsel %vm743, %v736, %v740
    %v745 = vand.u32 2147483647, %v734
    %vm746 = vcmp.eq.f32.partialorder %v745, 8.507059e+37
    %v747 = vand.u32 %v734, 2147483648
    %v748 = vor.u32 1.1754944e-38, %v747
    %v749 = vsel %vm746, %v748, %v744
    %v750 = vmul.f32 0.0625, %v749
    %v752 = vsel %vm494, %v750, 0
    %754 = vmatpush.msra.mxu0 0.0
    %755 = vmatpush.msra.mxu0 0.0
    %756 = vmatpush.msra.mxu0 0.0
    %757 = vmatpush.msra.mxu0 0.0
    %758 = vmatpush.msra.mxu0 0.0
    %759 = vmatpush.msra.mxu0 0.0
    %760 = vmatpush.msra.mxu0 0.0
    %761 = vmatpush.msra.mxu0 0.0
    %762 = vmatpush.msra.mxu0 0.0
    %763 = vmatpush.msra.mxu0 0.0
    %764 = vmatpush.msra.mxu0 0.0
    %765 = vmatpush.msra.mxu0 0.0
    %766 = vmatpush.msra.mxu0 0.0
    %767 = vmatpush.msra.mxu0 0.0
    %768 = vmatpush.msra.mxu0 %v491
    %769 = vmatpush.msra.mxu0 %v487
    %770 = vmatmul.f32.gmra.mxu0 %v752
    %v771 = vpop.f32.mrf.mxu0
    %v772 = vadd.f32 1e-16, %v771
    %773 = vdwg.mxu0
    %774 = vmatpush.msra.mxu0 0.0
    %775 = vmatpush.msra.mxu0 0.0
    %776 = vmatpush.msra.mxu0 0.0
    %777 = vmatpush.msra.mxu0 0.0
    %778 = vmatpush.msra.mxu0 0.0
    %779 = vmatpush.msra.mxu0 0.0
    %780 = vmatpush.msra.mxu0 0.0
    %781 = vmatpush.msra.mxu0 0.0
    %782 = vmatpush.msra.mxu0 0.0
    %783 = vmatpush.msra.mxu0 0.0
    %784 = vmatpush.msra.mxu0 0.0
    %785 = vmatpush.msra.mxu0 0.0
    %786 = vmatpush.msra.mxu0 0.0
    %787 = vmatpush.msra.mxu0 0.0
    %788 = vmatpush.msra.mxu0 %v493
    %789 = vmatpush.msra.mxu0 %v489
    %790 = vmatmul.f32.gmra.mxu0 %v752
    %v791 = vpop.f32.mrf.mxu0
    %v792 = vadd.f32 1e-16, %v791
    %793 = vdwg.mxu0
    %v794 = vrcp.pop %v772
    %v795 = vmul.f32 %v772, %v794
    %v796 = vsub.f32 1.0, %v795
    %v797 = vmul.f32 %v794, %v796
    %v798 = vadd.f32 %v794, %v797
    %vm799 = vweird.f32 %v772
    %vm800 = vweird.f32 %v794
    %vm801 = vmor %vm799, %vm800
    %v802 = vsel %vm801, %v794, %v798
    %v803 = vand.u32 2147483647, %v772
    %vm804 = vcmp.eq.f32.partialorder %v803, 8.507059e+37
    %v805 = vand.u32 %v772, 2147483648
    %v806 = vor.u32 1.1754944e-38, %v805
    %v807 = vsel %vm804, %v806, %v802
    %v808 = vmul.f32 0.00390625, %v807
    %v809 = vrcp.pop %v792
    %v810 = vmul.f32 %v792, %v809
    %v811 = vsub.f32 1.0, %v810
    %v812 = vmul.f32 %v809, %v811
    %v813 = vadd.f32 %v809, %v812
    %vm814 = vweird.f32 %v792
    %vm815 = vweird.f32 %v809
    %vm816 = vmor %vm814, %vm815
    %v817 = vsel %vm816, %v809, %v813
    %v818 = vand.u32 2147483647, %v792
    %vm819 = vcmp.eq.f32.partialorder %v818, 8.507059e+37
    %v820 = vand.u32 %v792, 2147483648
    %v821 = vor.u32 1.1754944e-38, %v820
    %v822 = vsel %vm819, %v821, %v817
    %v823 = vmul.f32 0.00390625, %v822
    %824 = vmatpush.xpose.msra.mxu0 0.0
    %825 = vmatpush.xpose.msra.mxu0 0.0
    %826 = vmatpush.xpose.msra.mxu0 0.0
    %827 = vmatpush.xpose.msra.mxu0 0.0
    %828 = vmatpush.xpose.msra.mxu0 0.0
    %829 = vmatpush.xpose.msra.mxu0 0.0
    %830 = vmatpush.xpose.msra.mxu0 0.0
    %831 = vmatpush.xpose.msra.mxu0 0.0
    %832 = vmatpush.xpose.msra.mxu0 0.0
    %833 = vmatpush.xpose.msra.mxu0 0.0
    %834 = vmatpush.xpose.msra.mxu0 0.0
    %835 = vmatpush.xpose.msra.mxu0 0.0
    %836 = vmatpush.xpose.msra.mxu0 0.0
    %837 = vmatpush.xpose.msra.mxu0 0.0
    %838 = vmatpush.xpose.msra.mxu0 %v491
    %839 = vmatpush.xpose.msra.mxu0 %v487
    %840 = vmatmul.f32.gmra.mxu0 %v808
    %v841 = vpop.f32.mrf.mxu0
    %v842 = vadd.f32 1e-16, %v841
    %843 = vdwg.mxu0
    %844 = vmatpush.xpose.msra.mxu0 0.0
    %845 = vmatpush.xpose.msra.mxu0 0.0
    %846 = vmatpush.xpose.msra.mxu0 0.0
    %847 = vmatpush.xpose.msra.mxu0 0.0
    %848 = vmatpush.xpose.msra.mxu0 0.0
    %849 = vmatpush.xpose.msra.mxu0 0.0
    %850 = vmatpush.xpose.msra.mxu0 0.0
    %851 = vmatpush.xpose.msra.mxu0 0.0
    %852 = vmatpush.xpose.msra.mxu0 0.0
    %853 = vmatpush.xpose.msra.mxu0 0.0
    %854 = vmatpush.xpose.msra.mxu0 0.0
    %855 = vmatpush.xpose.msra.mxu0 0.0
    %856 = vmatpush.xpose.msra.mxu0 0.0
    %857 = vmatpush.xpose.msra.mxu0 0.0
    %858 = vmatpush.xpose.msra.mxu0 %v493
    %859 = vmatpush.xpose.msra.mxu0 %v489
    %860 = vmatmul.f32.gmra.mxu0 %v823
    %v861 = vpop.f32.mrf.mxu0
    %v862 = vadd.f32 %v842, %v861
    %863 = vdwg.mxu0
    %v864 = vrcp.pop %v862
    %v865 = vmul.f32 %v862, %v864
    %v866 = vsub.f32 1.0, %v865
    %v867 = vmul.f32 %v864, %v866
    %v868 = vadd.f32 %v864, %v867
    %vm869 = vweird.f32 %v862
    %vm870 = vweird.f32 %v864
    %vm871 = vmor %vm869, %vm870
    %v872 = vsel %vm871, %v864, %v868
    %v873 = vand.u32 2147483647, %v862
    %vm874 = vcmp.eq.f32.partialorder %v873, 8.507059e+37
    %v875 = vand.u32 %v862, 2147483648
    %v876 = vor.u32 1.1754944e-38, %v875
    %v877 = vsel %vm874, %v876, %v872
    %v878 = vmul.f32 0.0625, %v877
    %v880 = vsel %vm494, %v878, 0
    %882 = vmatpush.msra.mxu0 0.0
    %883 = vmatpush.msra.mxu0 0.0
    %884 = vmatpush.msra.mxu0 0.0
    %885 = vmatpush.msra.mxu0 0.0
    %886 = vmatpush.msra.mxu0 0.0
    %887 = vmatpush.msra.mxu0 0.0
    %888 = vmatpush.msra.mxu0 0.0
    %889 = vmatpush.msra.mxu0 0.0
    %890 = vmatpush.msra.mxu0 0.0
    %891 = vmatpush.msra.mxu0 0.0
    %892 = vmatpush.msra.mxu0 0.0
    %893 = vmatpush.msra.mxu0 0.0
    %894 = vmatpush.msra.mxu0 0.0
    %895 = vmatpush.msra.mxu0 0.0
    %896 = vmatpush.msra.mxu0 %v491
    %897 = vmatpush.msra.mxu0 %v487
    %898 = vmatmul.f32.gmra.mxu0 %v880
    %v899 = vpop.f32.mrf.mxu0
    %v900 = vadd.f32 1e-16, %v899
    %901 = vdwg.mxu0
    %902 = vmatpush.msra.mxu0 0.0
    %903 = vmatpush.msra.mxu0 0.0
    %904 = vmatpush.msra.mxu0 0.0
    %905 = vmatpush.msra.mxu0 0.0
    %906 = vmatpush.msra.mxu0 0.0
    %907 = vmatpush.msra.mxu0 0.0
    %908 = vmatpush.msra.mxu0 0.0
    %909 = vmatpush.msra.mxu0 0.0
    %910 = vmatpush.msra.mxu0 0.0
    %911 = vmatpush.msra.mxu0 0.0
    %912 = vmatpush.msra.mxu0 0.0
    %913 = vmatpush.msra.mxu0 0.0
    %914 = vmatpush.msra.mxu0 0.0
    %915 = vmatpush.msra.mxu0 0.0
    %916 = vmatpush.msra.mxu0 %v493
    %917 = vmatpush.msra.mxu0 %v489
    %918 = vmatmul.f32.gmra.mxu0 %v880
    %v919 = vpop.f32.mrf.mxu0
    %v920 = vadd.f32 1e-16, %v919
    %921 = vdwg.mxu0
    %v922 = vrcp.pop %v900
    %v923 = vmul.f32 %v900, %v922
    %v924 = vsub.f32 1.0, %v923
    %v925 = vmul.f32 %v922, %v924
    %v926 = vadd.f32 %v922, %v925
    %vm927 = vweird.f32 %v900
    %vm928 = vweird.f32 %v922
    %vm929 = vmor %vm927, %vm928
    %v930 = vsel %vm929, %v922, %v926
    %v931 = vand.u32 2147483647, %v900
    %vm932 = vcmp.eq.f32.partialorder %v931, 8.507059e+37
    %v933 = vand.u32 %v900, 2147483648
    %v934 = vor.u32 1.1754944e-38, %v933
    %v935 = vsel %vm932, %v934, %v930
    %v936 = vmul.f32 0.00390625, %v935
    %v937 = vrcp.pop %v920
    %v938 = vmul.f32 %v920, %v937
    %v939 = vsub.f32 1.0, %v938
    %v940 = vmul.f32 %v937, %v939
    %v941 = vadd.f32 %v937, %v940
    %vm942 = vweird.f32 %v920
    %vm943 = vweird.f32 %v937
    %vm944 = vmor %vm942, %vm943
    %v945 = vsel %vm944, %v937, %v941
    %v946 = vand.u32 2147483647, %v920
    %vm947 = vcmp.eq.f32.partialorder %v946, 8.507059e+37
    %v948 = vand.u32 %v920, 2147483648
    %v949 = vor.u32 1.1754944e-38, %v948
    %v950 = vsel %vm947, %v949, %v945
    %v951 = vmul.f32 0.00390625, %v950
    %952 = vmatpush.xpose.msra.mxu0 0.0
    %953 = vmatpush.xpose.msra.mxu0 0.0
    %954 = vmatpush.xpose.msra.mxu0 0.0
    %955 = vmatpush.xpose.msra.mxu0 0.0
    %956 = vmatpush.xpose.msra.mxu0 0.0
    %957 = vmatpush.xpose.msra.mxu0 0.0
    %958 = vmatpush.xpose.msra.mxu0 0.0
    %959 = vmatpush.xpose.msra.mxu0 0.0
    %960 = vmatpush.xpose.msra.mxu0 0.0
    %961 = vmatpush.xpose.msra.mxu0 0.0
    %962 = vmatpush.xpose.msra.mxu0 0.0
    %963 = vmatpush.xpose.msra.mxu0 0.0
    %964 = vmatpush.xpose.msra.mxu0 0.0
    %965 = vmatpush.xpose.msra.mxu0 0.0
    %966 = vmatpush.xpose.msra.mxu0 %v491
    %967 = vmatpush.xpose.msra.mxu0 %v487
    %968 = vmatmul.f32.gmra.mxu0 %v936
    %v969 = vpop.f32.mrf.mxu0
    %v970 = vadd.f32 1e-16, %v969
    %971 = vdwg.mxu0
    %972 = vmatpush.xpose.msra.mxu0 0.0
    %973 = vmatpush.xpose.msra.mxu0 0.0
    %974 = vmatpush.xpose.msra.mxu0 0.0
    %975 = vmatpush.xpose.msra.mxu0 0.0
    %976 = vmatpush.xpose.msra.mxu0 0.0
    %977 = vmatpush.xpose.msra.mxu0 0.0
    %978 = vmatpush.xpose.msra.mxu0 0.0
    %979 = vmatpush.xpose.msra.mxu0 0.0
    %980 = vmatpush.xpose.msra.mxu0 0.0
    %981 = vmatpush.xpose.msra.mxu0 0.0
    %982 = vmatpush.xpose.msra.mxu0 0.0
    %983 = vmatpush.xpose.msra.mxu0 0.0
    %984 = vmatpush.xpose.msra.mxu0 0.0
    %985 = vmatpush.xpose.msra.mxu0 0.0
    %986 = vmatpush.xpose.msra.mxu0 %v493
    %987 = vmatpush.xpose.msra.mxu0 %v489
    %988 = vmatmul.f32.gmra.mxu0 %v951
    %v989 = vpop.f32.mrf.mxu0
    %v990 = vadd.f32 %v970, %v989
    %991 = vdwg.mxu0
    %v992 = vrcp.pop %v990
    %v993 = vmul.f32 %v990, %v992
    %v994 = vsub.f32 1.0, %v993
    %v995 = vmul.f32 %v992, %v994
    %v996 = vadd.f32 %v992, %v995
    %vm997 = vweird.f32 %v990
    %vm998 = vweird.f32 %v992
    %vm999 = vmor %vm997, %vm998
    %v1000 = vsel %vm999, %v992, %v996
    %v1001 = vand.u32 2147483647, %v990
    %vm1002 = vcmp.eq.f32.partialorder %v1001, 8.507059e+37
    %v1003 = vand.u32 %v990, 2147483648
    %v1004 = vor.u32 1.1754944e-38, %v1003
    %v1005 = vsel %vm1002, %v1004, %v1000
    %v1006 = vmul.f32 0.0625, %v1005
    %v1008 = vsel %vm494, %v1006, 0
    %1010 = vmatpush.msra.mxu0 0.0
    %1011 = vmatpush.msra.mxu0 0.0
    %1012 = vmatpush.msra.mxu0 0.0
    %1013 = vmatpush.msra.mxu0 0.0
    %1014 = vmatpush.msra.mxu0 0.0
    %1015 = vmatpush.msra.mxu0 0.0
    %1016 = vmatpush.msra.mxu0 0.0
    %1017 = vmatpush.msra.mxu0 0.0
    %1018 = vmatpush.msra.mxu0 0.0
    %1019 = vmatpush.msra.mxu0 0.0
    %1020 = vmatpush.msra.mxu0 0.0
    %1021 = vmatpush.msra.mxu0 0.0
    %1022 = vmatpush.msra.mxu0 0.0
    %1023 = vmatpush.msra.mxu0 0.0
    %1024 = vmatpush.msra.mxu0 %v491
    %1025 = vmatpush.msra.mxu0 %v487
    %1026 = vmatmul.f32.gmra.mxu0 %v1008
    %v1027 = vpop.f32.mrf.mxu0
    %v1028 = vadd.f32 1e-16, %v1027
    %1029 = vdwg.mxu0
    %1030 = vmatpush.msra.mxu0 0.0
    %1031 = vmatpush.msra.mxu0 0.0
    %1032 = vmatpush.msra.mxu0 0.0
    %1033 = vmatpush.msra.mxu0 0.0
    %1034 = vmatpush.msra.mxu0 0.0
    %1035 = vmatpush.msra.mxu0 0.0
    %1036 = vmatpush.msra.mxu0 0.0
    %1037 = vmatpush.msra.mxu0 0.0
    %1038 = vmatpush.msra.mxu0 0.0
    %1039 = vmatpush.msra.mxu0 0.0
    %1040 = vmatpush.msra.mxu0 0.0
    %1041 = vmatpush.msra.mxu0 0.0
    %1042 = vmatpush.msra.mxu0 0.0
    %1043 = vmatpush.msra.mxu0 0.0
    %1044 = vmatpush.msra.mxu0 %v493
    %1045 = vmatpush.msra.mxu0 %v489
    %1046 = vmatmul.f32.gmra.mxu0 %v1008
    %v1047 = vpop.f32.mrf.mxu0
    %v1048 = vadd.f32 1e-16, %v1047
    %1049 = vdwg.mxu0
    %v1050 = vrcp.pop %v1028
    %v1051 = vmul.f32 %v1028, %v1050
    %v1052 = vsub.f32 1.0, %v1051
    %v1053 = vmul.f32 %v1050, %v1052
    %v1054 = vadd.f32 %v1050, %v1053
    %vm1055 = vweird.f32 %v1028
    %vm1056 = vweird.f32 %v1050
    %vm1057 = vmor %vm1055, %vm1056
    %v1058 = vsel %vm1057, %v1050, %v1054
    %v1059 = vand.u32 2147483647, %v1028
    %vm1060 = vcmp.eq.f32.partialorder %v1059, 8.507059e+37
    %v1061 = vand.u32 %v1028, 2147483648
    %v1062 = vor.u32 1.1754944e-38, %v1061
    %v1063 = vsel %vm1060, %v1062, %v1058
    %v1064 = vmul.f32 0.00390625, %v1063
    %v1065 = vrcp.pop %v1048
    %v1066 = vmul.f32 %v1048, %v1065
    %v1067 = vsub.f32 1.0, %v1066
    %v1068 = vmul.f32 %v1065, %v1067
    %v1069 = vadd.f32 %v1065, %v1068
    %vm1070 = vweird.f32 %v1048
    %vm1071 = vweird.f32 %v1065
    %vm1072 = vmor %vm1070, %vm1071
    %v1073 = vsel %vm1072, %v1065, %v1069
    %v1074 = vand.u32 2147483647, %v1048
    %vm1075 = vcmp.eq.f32.partialorder %v1074, 8.507059e+37
    %v1076 = vand.u32 %v1048, 2147483648
    %v1077 = vor.u32 1.1754944e-38, %v1076
    %v1078 = vsel %vm1075, %v1077, %v1073
    %v1079 = vmul.f32 0.00390625, %v1078
    %1080 = vmatpush.xpose.msra.mxu0 0.0
    %1081 = vmatpush.xpose.msra.mxu0 0.0
    %1082 = vmatpush.xpose.msra.mxu0 0.0
    %1083 = vmatpush.xpose.msra.mxu0 0.0
    %1084 = vmatpush.xpose.msra.mxu0 0.0
    %1085 = vmatpush.xpose.msra.mxu0 0.0
    %1086 = vmatpush.xpose.msra.mxu0 0.0
    %1087 = vmatpush.xpose.msra.mxu0 0.0
    %1088 = vmatpush.xpose.msra.mxu0 0.0
    %1089 = vmatpush.xpose.msra.mxu0 0.0
    %1090 = vmatpush.xpose.msra.mxu0 0.0
    %1091 = vmatpush.xpose.msra.mxu0 0.0
    %1092 = vmatpush.xpose.msra.mxu0 0.0
    %1093 = vmatpush.xpose.msra.mxu0 0.0
    %1094 = vmatpush.xpose.msra.mxu0 %v491
    %1095 = vmatpush.xpose.msra.mxu0 %v487
    %1096 = vmatmul.f32.gmra.mxu0 %v1064
    %v1097 = vpop.f32.mrf.mxu0
    %v1098 = vadd.f32 1e-16, %v1097
    %1099 = vdwg.mxu0
    %1100 = vmatpush.xpose.msra.mxu0 0.0
    %1101 = vmatpush.xpose.msra.mxu0 0.0
    %1102 = vmatpush.xpose.msra.mxu0 0.0
    %1103 = vmatpush.xpose.msra.mxu0 0.0
    %1104 = vmatpush.xpose.msra.mxu0 0.0
    %1105 = vmatpush.xpose.msra.mxu0 0.0
    %1106 = vmatpush.xpose.msra.mxu0 0.0
    %1107 = vmatpush.xpose.msra.mxu0 0.0
    %1108 = vmatpush.xpose.msra.mxu0 0.0
    %1109 = vmatpush.xpose.msra.mxu0 0.0
    %1110 = vmatpush.xpose.msra.mxu0 0.0
    %1111 = vmatpush.xpose.msra.mxu0 0.0
    %1112 = vmatpush.xpose.msra.mxu0 0.0
    %1113 = vmatpush.xpose.msra.mxu0 0.0
    %1114 = vmatpush.xpose.msra.mxu0 %v493
    %1115 = vmatpush.xpose.msra.mxu0 %v489
    %1116 = vmatmul.f32.gmra.mxu0 %v1079
    %v1117 = vpop.f32.mrf.mxu0
    %v1118 = vadd.f32 %v1098, %v1117
    %1119 = vdwg.mxu0
    %v1120 = vrcp.pop %v1118
    %v1121 = vmul.f32 %v1118, %v1120
    %v1122 = vsub.f32 1.0, %v1121
    %v1123 = vmul.f32 %v1120, %v1122
    %v1124 = vadd.f32 %v1120, %v1123
    %vm1125 = vweird.f32 %v1118
    %vm1126 = vweird.f32 %v1120
    %vm1127 = vmor %vm1125, %vm1126
    %v1128 = vsel %vm1127, %v1120, %v1124
    %v1129 = vand.u32 2147483647, %v1118
    %vm1130 = vcmp.eq.f32.partialorder %v1129, 8.507059e+37
    %v1131 = vand.u32 %v1118, 2147483648
    %v1132 = vor.u32 1.1754944e-38, %v1131
    %v1133 = vsel %vm1130, %v1132, %v1128
    %v1134 = vmul.f32 0.0625, %v1133
    %v1136 = vsel %vm494, %v1134, 0
    %1138 = vmatpush.msra.mxu0 0.0
    %1139 = vmatpush.msra.mxu0 0.0
    %1140 = vmatpush.msra.mxu0 0.0
    %1141 = vmatpush.msra.mxu0 0.0
    %1142 = vmatpush.msra.mxu0 0.0
    %1143 = vmatpush.msra.mxu0 0.0
    %1144 = vmatpush.msra.mxu0 0.0
    %1145 = vmatpush.msra.mxu0 0.0
    %1146 = vmatpush.msra.mxu0 0.0
    %1147 = vmatpush.msra.mxu0 0.0
    %1148 = vmatpush.msra.mxu0 0.0
    %1149 = vmatpush.msra.mxu0 0.0
    %1150 = vmatpush.msra.mxu0 0.0
    %1151 = vmatpush.msra.mxu0 0.0
    %1152 = vmatpush.msra.mxu0 %v491
    %1153 = vmatpush.msra.mxu0 %v487
    %1154 = vmatmul.f32.gmra.mxu0 %v1136
    %v1155 = vpop.f32.mrf.mxu0
    %v1156 = vadd.f32 1e-16, %v1155
    %1157 = vdwg.mxu0
    %1158 = vmatpush.msra.mxu0 0.0
    %1159 = vmatpush.msra.mxu0 0.0
    %1160 = vmatpush.msra.mxu0 0.0
    %1161 = vmatpush.msra.mxu0 0.0
    %1162 = vmatpush.msra.mxu0 0.0
    %1163 = vmatpush.msra.mxu0 0.0
    %1164 = vmatpush.msra.mxu0 0.0
    %1165 = vmatpush.msra.mxu0 0.0
    %1166 = vmatpush.msra.mxu0 0.0
    %1167 = vmatpush.msra.mxu0 0.0
    %1168 = vmatpush.msra.mxu0 0.0
    %1169 = vmatpush.msra.mxu0 0.0
    %1170 = vmatpush.msra.mxu0 0.0
    %1171 = vmatpush.msra.mxu0 0.0
    %1172 = vmatpush.msra.mxu0 %v493
    %1173 = vmatpush.msra.mxu0 %v489
    %1174 = vmatmul.f32.gmra.mxu0 %v1136
    %v1175 = vpop.f32.mrf.mxu0
    %v1176 = vadd.f32 1e-16, %v1175
    %1177 = vdwg.mxu0
    %v1178 = vrcp.pop %v1156
    %v1179 = vmul.f32 %v1156, %v1178
    %v1180 = vsub.f32 1.0, %v1179
    %v1181 = vmul.f32 %v1178, %v1180
    %v1182 = vadd.f32 %v1178, %v1181
    %vm1183 = vweird.f32 %v1156
    %vm1184 = vweird.f32 %v1178
    %vm1185 = vmor %vm1183, %vm1184
    %v1186 = vsel %vm1185, %v1178, %v1182
    %v1187 = vand.u32 2147483647, %v1156
    %vm1188 = vcmp.eq.f32.partialorder %v1187, 8.507059e+37
    %v1189 = vand.u32 %v1156, 2147483648
    %v1190 = vor.u32 1.1754944e-38, %v1189
    %v1191 = vsel %vm1188, %v1190, %v1186
    %v1192 = vmul.f32 0.00390625, %v1191
    %v1193 = vrcp.pop %v1176
    %v1194 = vmul.f32 %v1176, %v1193
    %v1195 = vsub.f32 1.0, %v1194
    %v1196 = vmul.f32 %v1193, %v1195
    %v1197 = vadd.f32 %v1193, %v1196
    %vm1198 = vweird.f32 %v1176
    %vm1199 = vweird.f32 %v1193
    %vm1200 = vmor %vm1198, %vm1199
    %v1201 = vsel %vm1200, %v1193, %v1197
    %v1202 = vand.u32 2147483647, %v1176
    %vm1203 = vcmp.eq.f32.partialorder %v1202, 8.507059e+37
    %v1204 = vand.u32 %v1176, 2147483648
    %v1205 = vor.u32 1.1754944e-38, %v1204
    %v1206 = vsel %vm1203, %v1205, %v1201
    %v1207 = vmul.f32 0.00390625, %v1206
    %1208 = vmatpush.xpose.msra.mxu0 0.0
    %1209 = vmatpush.xpose.msra.mxu0 0.0
    %1210 = vmatpush.xpose.msra.mxu0 0.0
    %1211 = vmatpush.xpose.msra.mxu0 0.0
    %1212 = vmatpush.xpose.msra.mxu0 0.0
    %1213 = vmatpush.xpose.msra.mxu0 0.0
    %1214 = vmatpush.xpose.msra.mxu0 0.0
    %1215 = vmatpush.xpose.msra.mxu0 0.0
    %1216 = vmatpush.xpose.msra.mxu0 0.0
    %1217 = vmatpush.xpose.msra.mxu0 0.0
    %1218 = vmatpush.xpose.msra.mxu0 0.0
    %1219 = vmatpush.xpose.msra.mxu0 0.0
    %1220 = vmatpush.xpose.msra.mxu0 0.0
    %1221 = vmatpush.xpose.msra.mxu0 0.0
    %1222 = vmatpush.xpose.msra.mxu0 %v491
    %1223 = vmatpush.xpose.msra.mxu0 %v487
    %1224 = vmatmul.f32.gmra.mxu0 %v1192
    %v1225 = vpop.f32.mrf.mxu0
    %v1226 = vadd.f32 1e-16, %v1225
    %1227 = vdwg.mxu0
    %1228 = vmatpush.xpose.msra.mxu0 0.0
    %1229 = vmatpush.xpose.msra.mxu0 0.0
    %1230 = vmatpush.xpose.msra.mxu0 0.0
    %1231 = vmatpush.xpose.msra.mxu0 0.0
    %1232 = vmatpush.xpose.msra.mxu0 0.0
    %1233 = vmatpush.xpose.msra.mxu0 0.0
    %1234 = vmatpush.xpose.msra.mxu0 0.0
    %1235 = vmatpush.xpose.msra.mxu0 0.0
    %1236 = vmatpush.xpose.msra.mxu0 0.0
    %1237 = vmatpush.xpose.msra.mxu0 0.0
    %1238 = vmatpush.xpose.msra.mxu0 0.0
    %1239 = vmatpush.xpose.msra.mxu0 0.0
    %1240 = vmatpush.xpose.msra.mxu0 0.0
    %1241 = vmatpush.xpose.msra.mxu0 0.0
    %1242 = vmatpush.xpose.msra.mxu0 %v493
    %1243 = vmatpush.xpose.msra.mxu0 %v489
    %1244 = vmatmul.f32.gmra.mxu0 %v1207
    %v1245 = vpop.f32.mrf.mxu0
    %v1246 = vadd.f32 %v1226, %v1245
    %1247 = vdwg.mxu0
    %v1248 = vrcp.pop %v1246
    %v1249 = vmul.f32 %v1246, %v1248
    %v1250 = vsub.f32 1.0, %v1249
    %v1251 = vmul.f32 %v1248, %v1250
    %v1252 = vadd.f32 %v1248, %v1251
    %vm1253 = vweird.f32 %v1246
    %vm1254 = vweird.f32 %v1248
    %vm1255 = vmor %vm1253, %vm1254
    %v1256 = vsel %vm1255, %v1248, %v1252
    %v1257 = vand.u32 2147483647, %v1246
    %vm1258 = vcmp.eq.f32.partialorder %v1257, 8.507059e+37
    %v1259 = vand.u32 %v1246, 2147483648
    %v1260 = vor.u32 1.1754944e-38, %v1259
    %v1261 = vsel %vm1258, %v1260, %v1256
    %v1262 = vmul.f32 0.0625, %v1261
    %v1264 = vsel %vm494, %v1262, 0
    %1266 = vmatpush.msra.mxu0 0.0
    %1267 = vmatpush.msra.mxu0 0.0
    %1268 = vmatpush.msra.mxu0 0.0
    %1269 = vmatpush.msra.mxu0 0.0
    %1270 = vmatpush.msra.mxu0 0.0
    %1271 = vmatpush.msra.mxu0 0.0
    %1272 = vmatpush.msra.mxu0 0.0
    %1273 = vmatpush.msra.mxu0 0.0
    %1274 = vmatpush.msra.mxu0 0.0
    %1275 = vmatpush.msra.mxu0 0.0
    %1276 = vmatpush.msra.mxu0 0.0
    %1277 = vmatpush.msra.mxu0 0.0
    %1278 = vmatpush.msra.mxu0 0.0
    %1279 = vmatpush.msra.mxu0 0.0
    %1280 = vmatpush.msra.mxu0 %v491
    %1281 = vmatpush.msra.mxu0 %v487
    %1282 = vmatmul.f32.gmra.mxu0 %v1264
    %v1283 = vpop.f32.mrf.mxu0
    %v1284 = vadd.f32 1e-16, %v1283
    %1285 = vdwg.mxu0
    %1286 = vmatpush.msra.mxu0 0.0
    %1287 = vmatpush.msra.mxu0 0.0
    %1288 = vmatpush.msra.mxu0 0.0
    %1289 = vmatpush.msra.mxu0 0.0
    %1290 = vmatpush.msra.mxu0 0.0
    %1291 = vmatpush.msra.mxu0 0.0
    %1292 = vmatpush.msra.mxu0 0.0
    %1293 = vmatpush.msra.mxu0 0.0
    %1294 = vmatpush.msra.mxu0 0.0
    %1295 = vmatpush.msra.mxu0 0.0
    %1296 = vmatpush.msra.mxu0 0.0
    %1297 = vmatpush.msra.mxu0 0.0
    %1298 = vmatpush.msra.mxu0 0.0
    %1299 = vmatpush.msra.mxu0 0.0
    %1300 = vmatpush.msra.mxu0 %v493
    %1301 = vmatpush.msra.mxu0 %v489
    %1302 = vmatmul.f32.gmra.mxu0 %v1264
    %v1303 = vpop.f32.mrf.mxu0
    %v1304 = vadd.f32 1e-16, %v1303
    %1305 = vdwg.mxu0
    %v1306 = vrcp.pop %v1284
    %v1307 = vmul.f32 %v1284, %v1306
    %v1308 = vsub.f32 1.0, %v1307
    %v1309 = vmul.f32 %v1306, %v1308
    %v1310 = vadd.f32 %v1306, %v1309
    %vm1311 = vweird.f32 %v1284
    %vm1312 = vweird.f32 %v1306
    %vm1313 = vmor %vm1311, %vm1312
    %v1314 = vsel %vm1313, %v1306, %v1310
    %v1315 = vand.u32 2147483647, %v1284
    %vm1316 = vcmp.eq.f32.partialorder %v1315, 8.507059e+37
    %v1317 = vand.u32 %v1284, 2147483648
    %v1318 = vor.u32 1.1754944e-38, %v1317
    %v1319 = vsel %vm1316, %v1318, %v1314
    %v1320 = vmul.f32 0.00390625, %v1319
    %v1321 = vrcp.pop %v1304
    %v1322 = vmul.f32 %v1304, %v1321
    %v1323 = vsub.f32 1.0, %v1322
    %v1324 = vmul.f32 %v1321, %v1323
    %v1325 = vadd.f32 %v1321, %v1324
    %vm1326 = vweird.f32 %v1304
    %vm1327 = vweird.f32 %v1321
    %vm1328 = vmor %vm1326, %vm1327
    %v1329 = vsel %vm1328, %v1321, %v1325
    %v1330 = vand.u32 2147483647, %v1304
    %vm1331 = vcmp.eq.f32.partialorder %v1330, 8.507059e+37
    %v1332 = vand.u32 %v1304, 2147483648
    %v1333 = vor.u32 1.1754944e-38, %v1332
    %v1334 = vsel %vm1331, %v1333, %v1329
    %v1335 = vmul.f32 0.00390625, %v1334
    %1336 = vmatpush.xpose.msra.mxu0 0.0
    %1337 = vmatpush.xpose.msra.mxu0 0.0
    %1338 = vmatpush.xpose.msra.mxu0 0.0
    %1339 = vmatpush.xpose.msra.mxu0 0.0
    %1340 = vmatpush.xpose.msra.mxu0 0.0
    %1341 = vmatpush.xpose.msra.mxu0 0.0
    %1342 = vmatpush.xpose.msra.mxu0 0.0
    %1343 = vmatpush.xpose.msra.mxu0 0.0
    %1344 = vmatpush.xpose.msra.mxu0 0.0
    %1345 = vmatpush.xpose.msra.mxu0 0.0
    %1346 = vmatpush.xpose.msra.mxu0 0.0
    %1347 = vmatpush.xpose.msra.mxu0 0.0
    %1348 = vmatpush.xpose.msra.mxu0 0.0
    %1349 = vmatpush.xpose.msra.mxu0 0.0
    %1350 = vmatpush.xpose.msra.mxu0 %v491
    %1351 = vmatpush.xpose.msra.mxu0 %v487
    %1352 = vmatmul.f32.gmra.mxu0 %v1320
    %v1353 = vpop.f32.mrf.mxu0
    %v1354 = vadd.f32 1e-16, %v1353
    %1355 = vdwg.mxu0
    %1356 = vmatpush.xpose.msra.mxu0 0.0
    %1357 = vmatpush.xpose.msra.mxu0 0.0
    %1358 = vmatpush.xpose.msra.mxu0 0.0
    %1359 = vmatpush.xpose.msra.mxu0 0.0
    %1360 = vmatpush.xpose.msra.mxu0 0.0
    %1361 = vmatpush.xpose.msra.mxu0 0.0
    %1362 = vmatpush.xpose.msra.mxu0 0.0
    %1363 = vmatpush.xpose.msra.mxu0 0.0
    %1364 = vmatpush.xpose.msra.mxu0 0.0
    %1365 = vmatpush.xpose.msra.mxu0 0.0
    %1366 = vmatpush.xpose.msra.mxu0 0.0
    %1367 = vmatpush.xpose.msra.mxu0 0.0
    %1368 = vmatpush.xpose.msra.mxu0 0.0
    %1369 = vmatpush.xpose.msra.mxu0 0.0
    %1370 = vmatpush.xpose.msra.mxu0 %v493
    %1371 = vmatpush.xpose.msra.mxu0 %v489
    %1372 = vmatmul.f32.gmra.mxu0 %v1335
    %v1373 = vpop.f32.mrf.mxu0
    %v1374 = vadd.f32 %v1354, %v1373
    %1375 = vdwg.mxu0
    %v1376 = vrcp.pop %v1374
    %v1377 = vmul.f32 %v1374, %v1376
    %v1378 = vsub.f32 1.0, %v1377
    %v1379 = vmul.f32 %v1376, %v1378
    %v1380 = vadd.f32 %v1376, %v1379
    %vm1381 = vweird.f32 %v1374
    %vm1382 = vweird.f32 %v1376
    %vm1383 = vmor %vm1381, %vm1382
    %v1384 = vsel %vm1383, %v1376, %v1380
    %v1385 = vand.u32 2147483647, %v1374
    %vm1386 = vcmp.eq.f32.partialorder %v1385, 8.507059e+37
    %v1387 = vand.u32 %v1374, 2147483648
    %v1388 = vor.u32 1.1754944e-38, %v1387
    %v1389 = vsel %vm1386, %v1388, %v1384
    %v1390 = vmul.f32 0.0625, %v1389
    %v1392 = vsel %vm494, %v1390, 0
    %1394 = vmatpush.msra.mxu0 0.0
    %1395 = vmatpush.msra.mxu0 0.0
    %1396 = vmatpush.msra.mxu0 0.0
    %1397 = vmatpush.msra.mxu0 0.0
    %1398 = vmatpush.msra.mxu0 0.0
    %1399 = vmatpush.msra.mxu0 0.0
    %1400 = vmatpush.msra.mxu0 0.0
    %1401 = vmatpush.msra.mxu0 0.0
    %1402 = vmatpush.msra.mxu0 0.0
    %1403 = vmatpush.msra.mxu0 0.0
    %1404 = vmatpush.msra.mxu0 0.0
    %1405 = vmatpush.msra.mxu0 0.0
    %1406 = vmatpush.msra.mxu0 0.0
    %1407 = vmatpush.msra.mxu0 0.0
    %1408 = vmatpush.msra.mxu0 %v491
    %1409 = vmatpush.msra.mxu0 %v487
    %1410 = vmatmul.f32.gmra.mxu0 %v1392
    %v1411 = vpop.f32.mrf.mxu0
    %v1412 = vadd.f32 1e-16, %v1411
    %1413 = vdwg.mxu0
    %1414 = vmatpush.msra.mxu0 0.0
    %1415 = vmatpush.msra.mxu0 0.0
    %1416 = vmatpush.msra.mxu0 0.0
    %1417 = vmatpush.msra.mxu0 0.0
    %1418 = vmatpush.msra.mxu0 0.0
    %1419 = vmatpush.msra.mxu0 0.0
    %1420 = vmatpush.msra.mxu0 0.0
    %1421 = vmatpush.msra.mxu0 0.0
    %1422 = vmatpush.msra.mxu0 0.0
    %1423 = vmatpush.msra.mxu0 0.0
    %1424 = vmatpush.msra.mxu0 0.0
    %1425 = vmatpush.msra.mxu0 0.0
    %1426 = vmatpush.msra.mxu0 0.0
    %1427 = vmatpush.msra.mxu0 0.0
    %1428 = vmatpush.msra.mxu0 %v493
    %1429 = vmatpush.msra.mxu0 %v489
    %1430 = vmatmul.f32.gmra.mxu0 %v1392
    %v1431 = vpop.f32.mrf.mxu0
    %v1432 = vadd.f32 1e-16, %v1431
    %1433 = vdwg.mxu0
    %v1434 = vrcp.pop %v1412
    %v1435 = vmul.f32 %v1412, %v1434
    %v1436 = vsub.f32 1.0, %v1435
    %v1437 = vmul.f32 %v1434, %v1436
    %v1438 = vadd.f32 %v1434, %v1437
    %vm1439 = vweird.f32 %v1412
    %vm1440 = vweird.f32 %v1434
    %vm1441 = vmor %vm1439, %vm1440
    %v1442 = vsel %vm1441, %v1434, %v1438
    %v1443 = vand.u32 2147483647, %v1412
    %vm1444 = vcmp.eq.f32.partialorder %v1443, 8.507059e+37
    %v1445 = vand.u32 %v1412, 2147483648
    %v1446 = vor.u32 1.1754944e-38, %v1445
    %v1447 = vsel %vm1444, %v1446, %v1442
    %v1448 = vmul.f32 0.00390625, %v1447
    %v1449 = vrcp.pop %v1432
    %v1450 = vmul.f32 %v1432, %v1449
    %v1451 = vsub.f32 1.0, %v1450
    %v1452 = vmul.f32 %v1449, %v1451
    %v1453 = vadd.f32 %v1449, %v1452
    %vm1454 = vweird.f32 %v1432
    %vm1455 = vweird.f32 %v1449
    %vm1456 = vmor %vm1454, %vm1455
    %v1457 = vsel %vm1456, %v1449, %v1453
    %v1458 = vand.u32 2147483647, %v1432
    %vm1459 = vcmp.eq.f32.partialorder %v1458, 8.507059e+37
    %v1460 = vand.u32 %v1432, 2147483648
    %v1461 = vor.u32 1.1754944e-38, %v1460
    %v1462 = vsel %vm1459, %v1461, %v1457
    %v1463 = vmul.f32 0.00390625, %v1462
    %1464 = vmatpush.xpose.msra.mxu0 0.0
    %1465 = vmatpush.xpose.msra.mxu0 0.0
    %1466 = vmatpush.xpose.msra.mxu0 0.0
    %1467 = vmatpush.xpose.msra.mxu0 0.0
    %1468 = vmatpush.xpose.msra.mxu0 0.0
    %1469 = vmatpush.xpose.msra.mxu0 0.0
    %1470 = vmatpush.xpose.msra.mxu0 0.0
    %1471 = vmatpush.xpose.msra.mxu0 0.0
    %1472 = vmatpush.xpose.msra.mxu0 0.0
    %1473 = vmatpush.xpose.msra.mxu0 0.0
    %1474 = vmatpush.xpose.msra.mxu0 0.0
    %1475 = vmatpush.xpose.msra.mxu0 0.0
    %1476 = vmatpush.xpose.msra.mxu0 0.0
    %1477 = vmatpush.xpose.msra.mxu0 0.0
    %1478 = vmatpush.xpose.msra.mxu0 %v491
    %1479 = vmatpush.xpose.msra.mxu0 %v487
    %1480 = vmatmul.f32.gmra.mxu0 %v1448
    %v1481 = vpop.f32.mrf.mxu0
    %v1482 = vadd.f32 1e-16, %v1481
    %1483 = vdwg.mxu0
    %1484 = vmatpush.xpose.msra.mxu0 0.0
    %1485 = vmatpush.xpose.msra.mxu0 0.0
    %1486 = vmatpush.xpose.msra.mxu0 0.0
    %1487 = vmatpush.xpose.msra.mxu0 0.0
    %1488 = vmatpush.xpose.msra.mxu0 0.0
    %1489 = vmatpush.xpose.msra.mxu0 0.0
    %1490 = vmatpush.xpose.msra.mxu0 0.0
    %1491 = vmatpush.xpose.msra.mxu0 0.0
    %1492 = vmatpush.xpose.msra.mxu0 0.0
    %1493 = vmatpush.xpose.msra.mxu0 0.0
    %1494 = vmatpush.xpose.msra.mxu0 0.0
    %1495 = vmatpush.xpose.msra.mxu0 0.0
    %1496 = vmatpush.xpose.msra.mxu0 0.0
    %1497 = vmatpush.xpose.msra.mxu0 0.0
    %1498 = vmatpush.xpose.msra.mxu0 %v493
    %1499 = vmatpush.xpose.msra.mxu0 %v489
    %1500 = vmatmul.f32.gmra.mxu0 %v1463
    %v1501 = vpop.f32.mrf.mxu0
    %v1502 = vadd.f32 %v1482, %v1501
    %1503 = vdwg.mxu0
    %v1504 = vrcp.pop %v1502
    %v1505 = vmul.f32 %v1502, %v1504
    %v1506 = vsub.f32 1.0, %v1505
    %v1507 = vmul.f32 %v1504, %v1506
    %v1508 = vadd.f32 %v1504, %v1507
    %vm1509 = vweird.f32 %v1502
    %vm1510 = vweird.f32 %v1504
    %vm1511 = vmor %vm1509, %vm1510
    %v1512 = vsel %vm1511, %v1504, %v1508
    %v1513 = vand.u32 2147483647, %v1502
    %vm1514 = vcmp.eq.f32.partialorder %v1513, 8.507059e+37
    %v1515 = vand.u32 %v1502, 2147483648
    %v1516 = vor.u32 1.1754944e-38, %v1515
    %v1517 = vsel %vm1514, %v1516, %v1512
    %v1518 = vmul.f32 0.0625, %v1517
    %v1520 = vsel %vm494, %v1518, 0
    %1522 = vmatpush.msra.mxu0 0.0
    %1523 = vmatpush.msra.mxu0 0.0
    %1524 = vmatpush.msra.mxu0 0.0
    %1525 = vmatpush.msra.mxu0 0.0
    %1526 = vmatpush.msra.mxu0 0.0
    %1527 = vmatpush.msra.mxu0 0.0
    %1528 = vmatpush.msra.mxu0 0.0
    %1529 = vmatpush.msra.mxu0 0.0
    %1530 = vmatpush.msra.mxu0 0.0
    %1531 = vmatpush.msra.mxu0 0.0
    %1532 = vmatpush.msra.mxu0 0.0
    %1533 = vmatpush.msra.mxu0 0.0
    %1534 = vmatpush.msra.mxu0 0.0
    %1535 = vmatpush.msra.mxu0 0.0
    %1536 = vmatpush.msra.mxu0 %v491
    %1537 = vmatpush.msra.mxu0 %v487
    %1538 = vmatmul.f32.gmra.mxu0 %v1520
    %v1539 = vpop.f32.mrf.mxu0
    %v1540 = vadd.f32 1e-16, %v1539
    %1541 = vdwg.mxu0
    %1542 = vmatpush.msra.mxu0 0.0
    %1543 = vmatpush.msra.mxu0 0.0
    %1544 = vmatpush.msra.mxu0 0.0
    %1545 = vmatpush.msra.mxu0 0.0
    %1546 = vmatpush.msra.mxu0 0.0
    %1547 = vmatpush.msra.mxu0 0.0
    %1548 = vmatpush.msra.mxu0 0.0
    %1549 = vmatpush.msra.mxu0 0.0
    %1550 = vmatpush.msra.mxu0 0.0
    %1551 = vmatpush.msra.mxu0 0.0
    %1552 = vmatpush.msra.mxu0 0.0
    %1553 = vmatpush.msra.mxu0 0.0
    %1554 = vmatpush.msra.mxu0 0.0
    %1555 = vmatpush.msra.mxu0 0.0
    %1556 = vmatpush.msra.mxu0 %v493
    %1557 = vmatpush.msra.mxu0 %v489
    %1558 = vmatmul.f32.gmra.mxu0 %v1520
    %v1559 = vpop.f32.mrf.mxu0
    %v1560 = vadd.f32 1e-16, %v1559
    %1561 = vdwg.mxu0
    %v1562 = vrcp.pop %v1540
    %v1563 = vmul.f32 %v1540, %v1562
    %v1564 = vsub.f32 1.0, %v1563
    %v1565 = vmul.f32 %v1562, %v1564
    %v1566 = vadd.f32 %v1562, %v1565
    %vm1567 = vweird.f32 %v1540
    %vm1568 = vweird.f32 %v1562
    %vm1569 = vmor %vm1567, %vm1568
    %v1570 = vsel %vm1569, %v1562, %v1566
    %v1571 = vand.u32 2147483647, %v1540
    %vm1572 = vcmp.eq.f32.partialorder %v1571, 8.507059e+37
    %v1573 = vand.u32 %v1540, 2147483648
    %v1574 = vor.u32 1.1754944e-38, %v1573
    %v1575 = vsel %vm1572, %v1574, %v1570
    %v1576 = vmul.f32 0.00390625, %v1575
    %v1577 = vrcp.pop %v1560
    %v1578 = vmul.f32 %v1560, %v1577
    %v1579 = vsub.f32 1.0, %v1578
    %v1580 = vmul.f32 %v1577, %v1579
    %v1581 = vadd.f32 %v1577, %v1580
    %vm1582 = vweird.f32 %v1560
    %vm1583 = vweird.f32 %v1577
    %vm1584 = vmor %vm1582, %vm1583
    %v1585 = vsel %vm1584, %v1577, %v1581
    %v1586 = vand.u32 2147483647, %v1560
    %vm1587 = vcmp.eq.f32.partialorder %v1586, 8.507059e+37
    %v1588 = vand.u32 %v1560, 2147483648
    %v1589 = vor.u32 1.1754944e-38, %v1588
    %v1590 = vsel %vm1587, %v1589, %v1585
    %v1591 = vmul.f32 0.00390625, %v1590
    %1592 = vmatpush.xpose.msra.mxu0 0.0
    %1593 = vmatpush.xpose.msra.mxu0 0.0
    %1594 = vmatpush.xpose.msra.mxu0 0.0
    %1595 = vmatpush.xpose.msra.mxu0 0.0
    %1596 = vmatpush.xpose.msra.mxu0 0.0
    %1597 = vmatpush.xpose.msra.mxu0 0.0
    %1598 = vmatpush.xpose.msra.mxu0 0.0
    %1599 = vmatpush.xpose.msra.mxu0 0.0
    %1600 = vmatpush.xpose.msra.mxu0 0.0
    %1601 = vmatpush.xpose.msra.mxu0 0.0
    %1602 = vmatpush.xpose.msra.mxu0 0.0
    %1603 = vmatpush.xpose.msra.mxu0 0.0
    %1604 = vmatpush.xpose.msra.mxu0 0.0
    %1605 = vmatpush.xpose.msra.mxu0 0.0
    %1606 = vmatpush.xpose.msra.mxu0 %v491
    %1607 = vmatpush.xpose.msra.mxu0 %v487
    %1608 = vmatmul.f32.gmra.mxu0 %v1576
    %v1609 = vpop.f32.mrf.mxu0
    %v1610 = vadd.f32 1e-16, %v1609
    %1611 = vdwg.mxu0
    %1612 = vmatpush.xpose.msra.mxu0 0.0
    %1613 = vmatpush.xpose.msra.mxu0 0.0
    %1614 = vmatpush.xpose.msra.mxu0 0.0
    %1615 = vmatpush.xpose.msra.mxu0 0.0
    %1616 = vmatpush.xpose.msra.mxu0 0.0
    %1617 = vmatpush.xpose.msra.mxu0 0.0
    %1618 = vmatpush.xpose.msra.mxu0 0.0
    %1619 = vmatpush.xpose.msra.mxu0 0.0
    %1620 = vmatpush.xpose.msra.mxu0 0.0
    %1621 = vmatpush.xpose.msra.mxu0 0.0
    %1622 = vmatpush.xpose.msra.mxu0 0.0
    %1623 = vmatpush.xpose.msra.mxu0 0.0
    %1624 = vmatpush.xpose.msra.mxu0 0.0
    %1625 = vmatpush.xpose.msra.mxu0 0.0
    %1626 = vmatpush.xpose.msra.mxu0 %v493
    %1627 = vmatpush.xpose.msra.mxu0 %v489
    %1628 = vmatmul.f32.gmra.mxu0 %v1591
    %v1629 = vpop.f32.mrf.mxu0
    %v1630 = vadd.f32 %v1610, %v1629
    %1631 = vdwg.mxu0
    %v1632 = vrcp.pop %v1630
    %v1633 = vmul.f32 %v1630, %v1632
    %v1634 = vsub.f32 1.0, %v1633
    %v1635 = vmul.f32 %v1632, %v1634
    %v1636 = vadd.f32 %v1632, %v1635
    %vm1637 = vweird.f32 %v1630
    %vm1638 = vweird.f32 %v1632
    %vm1639 = vmor %vm1637, %vm1638
    %v1640 = vsel %vm1639, %v1632, %v1636
    %v1641 = vand.u32 2147483647, %v1630
    %vm1642 = vcmp.eq.f32.partialorder %v1641, 8.507059e+37
    %v1643 = vand.u32 %v1630, 2147483648
    %v1644 = vor.u32 1.1754944e-38, %v1643
    %v1645 = vsel %vm1642, %v1644, %v1640
    %v1646 = vmul.f32 0.0625, %v1645
    %v1648 = vsel %vm494, %v1646, 0
    %1650 = vmatpush.msra.mxu0 0.0
    %1651 = vmatpush.msra.mxu0 0.0
    %1652 = vmatpush.msra.mxu0 0.0
    %1653 = vmatpush.msra.mxu0 0.0
    %1654 = vmatpush.msra.mxu0 0.0
    %1655 = vmatpush.msra.mxu0 0.0
    %1656 = vmatpush.msra.mxu0 0.0
    %1657 = vmatpush.msra.mxu0 0.0
    %1658 = vmatpush.msra.mxu0 0.0
    %1659 = vmatpush.msra.mxu0 0.0
    %1660 = vmatpush.msra.mxu0 0.0
    %1661 = vmatpush.msra.mxu0 0.0
    %1662 = vmatpush.msra.mxu0 0.0
    %1663 = vmatpush.msra.mxu0 0.0
    %1664 = vmatpush.msra.mxu0 %v491
    %1665 = vmatpush.msra.mxu0 %v487
    %1666 = vmatmul.f32.gmra.mxu0 %v1648
    %v1667 = vpop.f32.mrf.mxu0
    %v1668 = vadd.f32 1e-16, %v1667
    %1669 = vdwg.mxu0
    %1670 = vmatpush.msra.mxu0 0.0
    %1671 = vmatpush.msra.mxu0 0.0
    %1672 = vmatpush.msra.mxu0 0.0
    %1673 = vmatpush.msra.mxu0 0.0
    %1674 = vmatpush.msra.mxu0 0.0
    %1675 = vmatpush.msra.mxu0 0.0
    %1676 = vmatpush.msra.mxu0 0.0
    %1677 = vmatpush.msra.mxu0 0.0
    %1678 = vmatpush.msra.mxu0 0.0
    %1679 = vmatpush.msra.mxu0 0.0
    %1680 = vmatpush.msra.mxu0 0.0
    %1681 = vmatpush.msra.mxu0 0.0
    %1682 = vmatpush.msra.mxu0 0.0
    %1683 = vmatpush.msra.mxu0 0.0
    %1684 = vmatpush.msra.mxu0 %v493
    %1685 = vmatpush.msra.mxu0 %v489
    %1686 = vmatmul.f32.gmra.mxu0 %v1648
    %v1687 = vpop.f32.mrf.mxu0
    %v1688 = vadd.f32 1e-16, %v1687
    %1689 = vdwg.mxu0
    %v1690 = vrcp.pop %v1668
    %v1691 = vmul.f32 %v1668, %v1690
    %v1692 = vsub.f32 1.0, %v1691
    %v1693 = vmul.f32 %v1690, %v1692
    %v1694 = vadd.f32 %v1690, %v1693
    %vm1695 = vweird.f32 %v1668
    %vm1696 = vweird.f32 %v1690
    %vm1697 = vmor %vm1695, %vm1696
    %v1698 = vsel %vm1697, %v1690, %v1694
    %v1699 = vand.u32 2147483647, %v1668
    %vm1700 = vcmp.eq.f32.partialorder %v1699, 8.507059e+37
    %v1701 = vand.u32 %v1668, 2147483648
    %v1702 = vor.u32 1.1754944e-38, %v1701
    %v1703 = vsel %vm1700, %v1702, %v1698
    %v1704 = vmul.f32 0.00390625, %v1703
    %v1705 = vrcp.pop %v1688
    %v1706 = vmul.f32 %v1688, %v1705
    %v1707 = vsub.f32 1.0, %v1706
    %v1708 = vmul.f32 %v1705, %v1707
    %v1709 = vadd.f32 %v1705, %v1708
    %vm1710 = vweird.f32 %v1688
    %vm1711 = vweird.f32 %v1705
    %vm1712 = vmor %vm1710, %vm1711
    %v1713 = vsel %vm1712, %v1705, %v1709
    %v1714 = vand.u32 2147483647, %v1688
    %vm1715 = vcmp.eq.f32.partialorder %v1714, 8.507059e+37
    %v1716 = vand.u32 %v1688, 2147483648
    %v1717 = vor.u32 1.1754944e-38, %v1716
    %v1718 = vsel %vm1715, %v1717, %v1713
    %v1719 = vmul.f32 0.00390625, %v1718
    %1720 = vmatpush.xpose.msra.mxu0 0.0
    %1721 = vmatpush.xpose.msra.mxu0 0.0
    %1722 = vmatpush.xpose.msra.mxu0 0.0
    %1723 = vmatpush.xpose.msra.mxu0 0.0
    %1724 = vmatpush.xpose.msra.mxu0 0.0
    %1725 = vmatpush.xpose.msra.mxu0 0.0
    %1726 = vmatpush.xpose.msra.mxu0 0.0
    %1727 = vmatpush.xpose.msra.mxu0 0.0
    %1728 = vmatpush.xpose.msra.mxu0 0.0
    %1729 = vmatpush.xpose.msra.mxu0 0.0
    %1730 = vmatpush.xpose.msra.mxu0 0.0
    %1731 = vmatpush.xpose.msra.mxu0 0.0
    %1732 = vmatpush.xpose.msra.mxu0 0.0
    %1733 = vmatpush.xpose.msra.mxu0 0.0
    %1734 = vmatpush.xpose.msra.mxu0 %v491
    %1735 = vmatpush.xpose.msra.mxu0 %v487
    %1736 = vmatmul.f32.gmra.mxu0 %v1704
    %v1737 = vpop.f32.mrf.mxu0
    %v1738 = vadd.f32 1e-16, %v1737
    %1739 = vdwg.mxu0
    %1740 = vmatpush.xpose.msra.mxu0 0.0
    %1741 = vmatpush.xpose.msra.mxu0 0.0
    %1742 = vmatpush.xpose.msra.mxu0 0.0
    %1743 = vmatpush.xpose.msra.mxu0 0.0
    %1744 = vmatpush.xpose.msra.mxu0 0.0
    %1745 = vmatpush.xpose.msra.mxu0 0.0
    %1746 = vmatpush.xpose.msra.mxu0 0.0
    %1747 = vmatpush.xpose.msra.mxu0 0.0
    %1748 = vmatpush.xpose.msra.mxu0 0.0
    %1749 = vmatpush.xpose.msra.mxu0 0.0
    %1750 = vmatpush.xpose.msra.mxu0 0.0
    %1751 = vmatpush.xpose.msra.mxu0 0.0
    %1752 = vmatpush.xpose.msra.mxu0 0.0
    %1753 = vmatpush.xpose.msra.mxu0 0.0
    %1754 = vmatpush.xpose.msra.mxu0 %v493
    %1755 = vmatpush.xpose.msra.mxu0 %v489
    %1756 = vmatmul.f32.gmra.mxu0 %v1719
    %v1757 = vpop.f32.mrf.mxu0
    %v1758 = vadd.f32 %v1738, %v1757
    %1759 = vdwg.mxu0
    %v1760 = vrcp.pop %v1758
    %v1761 = vmul.f32 %v1758, %v1760
    %v1762 = vsub.f32 1.0, %v1761
    %v1763 = vmul.f32 %v1760, %v1762
    %v1764 = vadd.f32 %v1760, %v1763
    %vm1765 = vweird.f32 %v1758
    %vm1766 = vweird.f32 %v1760
    %vm1767 = vmor %vm1765, %vm1766
    %v1768 = vsel %vm1767, %v1760, %v1764
    %v1769 = vand.u32 2147483647, %v1758
    %vm1770 = vcmp.eq.f32.partialorder %v1769, 8.507059e+37
    %v1771 = vand.u32 %v1758, 2147483648
    %v1772 = vor.u32 1.1754944e-38, %v1771
    %v1773 = vsel %vm1770, %v1772, %v1768
    %v1774 = vmul.f32 0.0625, %v1773
    %v1776 = vsel %vm494, %v1774, 0
    %1778 = vmatpush.msra.mxu0 0.0
    %1779 = vmatpush.msra.mxu0 0.0
    %1780 = vmatpush.msra.mxu0 0.0
    %1781 = vmatpush.msra.mxu0 0.0
    %1782 = vmatpush.msra.mxu0 0.0
    %1783 = vmatpush.msra.mxu0 0.0
    %1784 = vmatpush.msra.mxu0 0.0
    %1785 = vmatpush.msra.mxu0 0.0
    %1786 = vmatpush.msra.mxu0 0.0
    %1787 = vmatpush.msra.mxu0 0.0
    %1788 = vmatpush.msra.mxu0 0.0
    %1789 = vmatpush.msra.mxu0 0.0
    %1790 = vmatpush.msra.mxu0 0.0
    %1791 = vmatpush.msra.mxu0 0.0
    %1792 = vmatpush.msra.mxu0 %v491
    %1793 = vmatpush.msra.mxu0 %v487
    %1794 = vmatmul.f32.gmra.mxu0 %v1776
    %v1795 = vpop.f32.mrf.mxu0
    %v1796 = vadd.f32 1e-16, %v1795
    %1797 = vdwg.mxu0
    %1798 = vmatpush.msra.mxu0 0.0
    %1799 = vmatpush.msra.mxu0 0.0
    %1800 = vmatpush.msra.mxu0 0.0
    %1801 = vmatpush.msra.mxu0 0.0
    %1802 = vmatpush.msra.mxu0 0.0
    %1803 = vmatpush.msra.mxu0 0.0
    %1804 = vmatpush.msra.mxu0 0.0
    %1805 = vmatpush.msra.mxu0 0.0
    %1806 = vmatpush.msra.mxu0 0.0
    %1807 = vmatpush.msra.mxu0 0.0
    %1808 = vmatpush.msra.mxu0 0.0
    %1809 = vmatpush.msra.mxu0 0.0
    %1810 = vmatpush.msra.mxu0 0.0
    %1811 = vmatpush.msra.mxu0 0.0
    %1812 = vmatpush.msra.mxu0 %v493
    %1813 = vmatpush.msra.mxu0 %v489
    %1814 = vmatmul.f32.gmra.mxu0 %v1776
    %v1815 = vpop.f32.mrf.mxu0
    %v1816 = vadd.f32 1e-16, %v1815
    %1817 = vdwg.mxu0
    %v1818 = vrcp.pop %v1796
    %v1819 = vmul.f32 %v1796, %v1818
    %v1820 = vsub.f32 1.0, %v1819
    %v1821 = vmul.f32 %v1818, %v1820
    %v1822 = vadd.f32 %v1818, %v1821
    %vm1823 = vweird.f32 %v1796
    %vm1824 = vweird.f32 %v1818
    %vm1825 = vmor %vm1823, %vm1824
    %v1826 = vsel %vm1825, %v1818, %v1822
    %v1827 = vand.u32 2147483647, %v1796
    %vm1828 = vcmp.eq.f32.partialorder %v1827, 8.507059e+37
    %v1829 = vand.u32 %v1796, 2147483648
    %v1830 = vor.u32 1.1754944e-38, %v1829
    %v1831 = vsel %vm1828, %v1830, %v1826
    %v1832 = vmul.f32 0.00390625, %v1831
    %v1833 = vrcp.pop %v1816
    %v1834 = vmul.f32 %v1816, %v1833
    %v1835 = vsub.f32 1.0, %v1834
    %v1836 = vmul.f32 %v1833, %v1835
    %v1837 = vadd.f32 %v1833, %v1836
    %vm1838 = vweird.f32 %v1816
    %vm1839 = vweird.f32 %v1833
    %vm1840 = vmor %vm1838, %vm1839
    %v1841 = vsel %vm1840, %v1833, %v1837
    %v1842 = vand.u32 2147483647, %v1816
    %vm1843 = vcmp.eq.f32.partialorder %v1842, 8.507059e+37
    %v1844 = vand.u32 %v1816, 2147483648
    %v1845 = vor.u32 1.1754944e-38, %v1844
    %v1846 = vsel %vm1843, %v1845, %v1841
    %v1847 = vmul.f32 0.00390625, %v1846
    %1848 = vmatpush.xpose.msra.mxu0 0.0
    %1849 = vmatpush.xpose.msra.mxu0 0.0
    %1850 = vmatpush.xpose.msra.mxu0 0.0
    %1851 = vmatpush.xpose.msra.mxu0 0.0
    %1852 = vmatpush.xpose.msra.mxu0 0.0
    %1853 = vmatpush.xpose.msra.mxu0 0.0
    %1854 = vmatpush.xpose.msra.mxu0 0.0
    %1855 = vmatpush.xpose.msra.mxu0 0.0
    %1856 = vmatpush.xpose.msra.mxu0 0.0
    %1857 = vmatpush.xpose.msra.mxu0 0.0
    %1858 = vmatpush.xpose.msra.mxu0 0.0
    %1859 = vmatpush.xpose.msra.mxu0 0.0
    %1860 = vmatpush.xpose.msra.mxu0 0.0
    %1861 = vmatpush.xpose.msra.mxu0 0.0
    %1862 = vmatpush.xpose.msra.mxu0 %v491
    %1863 = vmatpush.xpose.msra.mxu0 %v487
    %1864 = vmatmul.f32.gmra.mxu0 %v1832
    %v1865 = vpop.f32.mrf.mxu0
    %v1866 = vadd.f32 1e-16, %v1865
    %1867 = vdwg.mxu0
    %1868 = vmatpush.xpose.msra.mxu0 0.0
    %1869 = vmatpush.xpose.msra.mxu0 0.0
    %1870 = vmatpush.xpose.msra.mxu0 0.0
    %1871 = vmatpush.xpose.msra.mxu0 0.0
    %1872 = vmatpush.xpose.msra.mxu0 0.0
    %1873 = vmatpush.xpose.msra.mxu0 0.0
    %1874 = vmatpush.xpose.msra.mxu0 0.0
    %1875 = vmatpush.xpose.msra.mxu0 0.0
    %1876 = vmatpush.xpose.msra.mxu0 0.0
    %1877 = vmatpush.xpose.msra.mxu0 0.0
    %1878 = vmatpush.xpose.msra.mxu0 0.0
    %1879 = vmatpush.xpose.msra.mxu0 0.0
    %1880 = vmatpush.xpose.msra.mxu0 0.0
    %1881 = vmatpush.xpose.msra.mxu0 0.0
    %1882 = vmatpush.xpose.msra.mxu0 %v493
    %1883 = vmatpush.xpose.msra.mxu0 %v489
    %1884 = vmatmul.f32.gmra.mxu0 %v1847
    %v1885 = vpop.f32.mrf.mxu0
    %v1886 = vadd.f32 %v1866, %v1885
    %1887 = vdwg.mxu0
    %v1888 = vrcp.pop %v1886
    %v1889 = vmul.f32 %v1886, %v1888
    %v1890 = vsub.f32 1.0, %v1889
    %v1891 = vmul.f32 %v1888, %v1890
    %v1892 = vadd.f32 %v1888, %v1891
    %vm1893 = vweird.f32 %v1886
    %vm1894 = vweird.f32 %v1888
    %vm1895 = vmor %vm1893, %vm1894
    %v1896 = vsel %vm1895, %v1888, %v1892
    %v1897 = vand.u32 2147483647, %v1886
    %vm1898 = vcmp.eq.f32.partialorder %v1897, 8.507059e+37
    %v1899 = vand.u32 %v1886, 2147483648
    %v1900 = vor.u32 1.1754944e-38, %v1899
    %v1901 = vsel %vm1898, %v1900, %v1896
    %v1902 = vmul.f32 0.0625, %v1901
    %v1904 = vsel %vm494, %v1902, 0
    %1906 = vmatpush.msra.mxu0 0.0
    %1907 = vmatpush.msra.mxu0 0.0
    %1908 = vmatpush.msra.mxu0 0.0
    %1909 = vmatpush.msra.mxu0 0.0
    %1910 = vmatpush.msra.mxu0 0.0
    %1911 = vmatpush.msra.mxu0 0.0
    %1912 = vmatpush.msra.mxu0 0.0
    %1913 = vmatpush.msra.mxu0 0.0
    %1914 = vmatpush.msra.mxu0 0.0
    %1915 = vmatpush.msra.mxu0 0.0
    %1916 = vmatpush.msra.mxu0 0.0
    %1917 = vmatpush.msra.mxu0 0.0
    %1918 = vmatpush.msra.mxu0 0.0
    %1919 = vmatpush.msra.mxu0 0.0
    %1920 = vmatpush.msra.mxu0 %v491
    %1921 = vmatpush.msra.mxu0 %v487
    %1922 = vmatmul.f32.gmra.mxu0 %v1904
    %v1923 = vpop.f32.mrf.mxu0
    %v1924 = vadd.f32 1e-16, %v1923
    %1925 = vdwg.mxu0
    %1926 = vmatpush.msra.mxu0 0.0
    %1927 = vmatpush.msra.mxu0 0.0
    %1928 = vmatpush.msra.mxu0 0.0
    %1929 = vmatpush.msra.mxu0 0.0
    %1930 = vmatpush.msra.mxu0 0.0
    %1931 = vmatpush.msra.mxu0 0.0
    %1932 = vmatpush.msra.mxu0 0.0
    %1933 = vmatpush.msra.mxu0 0.0
    %1934 = vmatpush.msra.mxu0 0.0
    %1935 = vmatpush.msra.mxu0 0.0
    %1936 = vmatpush.msra.mxu0 0.0
    %1937 = vmatpush.msra.mxu0 0.0
    %1938 = vmatpush.msra.mxu0 0.0
    %1939 = vmatpush.msra.mxu0 0.0
    %1940 = vmatpush.msra.mxu0 %v493
    %1941 = vmatpush.msra.mxu0 %v489
    %1942 = vmatmul.f32.gmra.mxu0 %v1904
    %v1943 = vpop.f32.mrf.mxu0
    %v1944 = vadd.f32 1e-16, %v1943
    %1945 = vdwg.mxu0
    %v1946 = vrcp.pop %v1924
    %v1947 = vmul.f32 %v1924, %v1946
    %v1948 = vsub.f32 1.0, %v1947
    %v1949 = vmul.f32 %v1946, %v1948
    %v1950 = vadd.f32 %v1946, %v1949
    %vm1951 = vweird.f32 %v1924
    %vm1952 = vweird.f32 %v1946
    %vm1953 = vmor %vm1951, %vm1952
    %v1954 = vsel %vm1953, %v1946, %v1950
    %v1955 = vand.u32 2147483647, %v1924
    %vm1956 = vcmp.eq.f32.partialorder %v1955, 8.507059e+37
    %v1957 = vand.u32 %v1924, 2147483648
    %v1958 = vor.u32 1.1754944e-38, %v1957
    %v1959 = vsel %vm1956, %v1958, %v1954
    %v1960 = vmul.f32 0.00390625, %v1959
    %v1961 = vrcp.pop %v1944
    %v1962 = vmul.f32 %v1944, %v1961
    %v1963 = vsub.f32 1.0, %v1962
    %v1964 = vmul.f32 %v1961, %v1963
    %v1965 = vadd.f32 %v1961, %v1964
    %vm1966 = vweird.f32 %v1944
    %vm1967 = vweird.f32 %v1961
    %vm1968 = vmor %vm1966, %vm1967
    %v1969 = vsel %vm1968, %v1961, %v1965
    %v1970 = vand.u32 2147483647, %v1944
    %vm1971 = vcmp.eq.f32.partialorder %v1970, 8.507059e+37
    %v1972 = vand.u32 %v1944, 2147483648
    %v1973 = vor.u32 1.1754944e-38, %v1972
    %v1974 = vsel %vm1971, %v1973, %v1969
    %v1975 = vmul.f32 0.00390625, %v1974
    %1976 = vmatpush.xpose.msra.mxu0 0.0
    %1977 = vmatpush.xpose.msra.mxu0 0.0
    %1978 = vmatpush.xpose.msra.mxu0 0.0
    %1979 = vmatpush.xpose.msra.mxu0 0.0
    %1980 = vmatpush.xpose.msra.mxu0 0.0
    %1981 = vmatpush.xpose.msra.mxu0 0.0
    %1982 = vmatpush.xpose.msra.mxu0 0.0
    %1983 = vmatpush.xpose.msra.mxu0 0.0
    %1984 = vmatpush.xpose.msra.mxu0 0.0
    %1985 = vmatpush.xpose.msra.mxu0 0.0
    %1986 = vmatpush.xpose.msra.mxu0 0.0
    %1987 = vmatpush.xpose.msra.mxu0 0.0
    %1988 = vmatpush.xpose.msra.mxu0 0.0
    %1989 = vmatpush.xpose.msra.mxu0 0.0
    %1990 = vmatpush.xpose.msra.mxu0 %v491
    %1991 = vmatpush.xpose.msra.mxu0 %v487
    %1992 = vmatmul.f32.gmra.mxu0 %v1960
    %v1993 = vpop.f32.mrf.mxu0
    %v1994 = vadd.f32 1e-16, %v1993
    %1995 = vdwg.mxu0
    %1996 = vmatpush.xpose.msra.mxu0 0.0
    %1997 = vmatpush.xpose.msra.mxu0 0.0
    %1998 = vmatpush.xpose.msra.mxu0 0.0
    %1999 = vmatpush.xpose.msra.mxu0 0.0
    %2000 = vmatpush.xpose.msra.mxu0 0.0
    %2001 = vmatpush.xpose.msra.mxu0 0.0
    %2002 = vmatpush.xpose.msra.mxu0 0.0
    %2003 = vmatpush.xpose.msra.mxu0 0.0
    %2004 = vmatpush.xpose.msra.mxu0 0.0
    %2005 = vmatpush.xpose.msra.mxu0 0.0
    %2006 = vmatpush.xpose.msra.mxu0 0.0
    %2007 = vmatpush.xpose.msra.mxu0 0.0
    %2008 = vmatpush.xpose.msra.mxu0 0.0
    %2009 = vmatpush.xpose.msra.mxu0 0.0
    %2010 = vmatpush.xpose.msra.mxu0 %v493
    %2011 = vmatpush.xpose.msra.mxu0 %v489
    %2012 = vmatmul.f32.gmra.mxu0 %v1975
    %v2013 = vpop.f32.mrf.mxu0
    %v2014 = vadd.f32 %v1994, %v2013
    %2015 = vdwg.mxu0
    %v2016 = vrcp.pop %v2014
    %v2017 = vmul.f32 %v2014, %v2016
    %v2018 = vsub.f32 1.0, %v2017
    %v2019 = vmul.f32 %v2016, %v2018
    %v2020 = vadd.f32 %v2016, %v2019
    %vm2021 = vweird.f32 %v2014
    %vm2022 = vweird.f32 %v2016
    %vm2023 = vmor %vm2021, %vm2022
    %v2024 = vsel %vm2023, %v2016, %v2020
    %v2025 = vand.u32 2147483647, %v2014
    %vm2026 = vcmp.eq.f32.partialorder %v2025, 8.507059e+37
    %v2027 = vand.u32 %v2014, 2147483648
    %v2028 = vor.u32 1.1754944e-38, %v2027
    %v2029 = vsel %vm2026, %v2028, %v2024
    %v2030 = vmul.f32 0.0625, %v2029
    %v2032 = vsel %vm494, %v2030, 0
    %2034 = vmatpush.msra.mxu0 0.0
    %2035 = vmatpush.msra.mxu0 0.0
    %2036 = vmatpush.msra.mxu0 0.0
    %2037 = vmatpush.msra.mxu0 0.0
    %2038 = vmatpush.msra.mxu0 0.0
    %2039 = vmatpush.msra.mxu0 0.0
    %2040 = vmatpush.msra.mxu0 0.0
    %2041 = vmatpush.msra.mxu0 0.0
    %2042 = vmatpush.msra.mxu0 0.0
    %2043 = vmatpush.msra.mxu0 0.0
    %2044 = vmatpush.msra.mxu0 0.0
    %2045 = vmatpush.msra.mxu0 0.0
    %2046 = vmatpush.msra.mxu0 0.0
    %2047 = vmatpush.msra.mxu0 0.0
    %2048 = vmatpush.msra.mxu0 %v491
    %2049 = vmatpush.msra.mxu0 %v487
    %2050 = vmatmul.f32.gmra.mxu0 %v2032
    %v2051 = vpop.f32.mrf.mxu0
    %v2052 = vadd.f32 1e-16, %v2051
    %2053 = vdwg.mxu0
    %2054 = vmatpush.msra.mxu0 0.0
    %2055 = vmatpush.msra.mxu0 0.0
    %2056 = vmatpush.msra.mxu0 0.0
    %2057 = vmatpush.msra.mxu0 0.0
    %2058 = vmatpush.msra.mxu0 0.0
    %2059 = vmatpush.msra.mxu0 0.0
    %2060 = vmatpush.msra.mxu0 0.0
    %2061 = vmatpush.msra.mxu0 0.0
    %2062 = vmatpush.msra.mxu0 0.0
    %2063 = vmatpush.msra.mxu0 0.0
    %2064 = vmatpush.msra.mxu0 0.0
    %2065 = vmatpush.msra.mxu0 0.0
    %2066 = vmatpush.msra.mxu0 0.0
    %2067 = vmatpush.msra.mxu0 0.0
    %2068 = vmatpush.msra.mxu0 %v493
    %2069 = vmatpush.msra.mxu0 %v489
    %2070 = vmatmul.f32.gmra.mxu0 %v2032
    %v2071 = vpop.f32.mrf.mxu0
    %v2072 = vadd.f32 1e-16, %v2071
    %2073 = vdwg.mxu0
    %v2074 = vrcp.pop %v2052
    %v2075 = vmul.f32 %v2052, %v2074
    %v2076 = vsub.f32 1.0, %v2075
    %v2077 = vmul.f32 %v2074, %v2076
    %v2078 = vadd.f32 %v2074, %v2077
    %vm2079 = vweird.f32 %v2052
    %vm2080 = vweird.f32 %v2074
    %vm2081 = vmor %vm2079, %vm2080
    %v2082 = vsel %vm2081, %v2074, %v2078
    %v2083 = vand.u32 2147483647, %v2052
    %vm2084 = vcmp.eq.f32.partialorder %v2083, 8.507059e+37
    %v2085 = vand.u32 %v2052, 2147483648
    %v2086 = vor.u32 1.1754944e-38, %v2085
    %v2087 = vsel %vm2084, %v2086, %v2082
    %v2088 = vmul.f32 0.00390625, %v2087
    %v2089 = vrcp.pop %v2072
    %v2090 = vmul.f32 %v2072, %v2089
    %v2091 = vsub.f32 1.0, %v2090
    %v2092 = vmul.f32 %v2089, %v2091
    %v2093 = vadd.f32 %v2089, %v2092
    %vm2094 = vweird.f32 %v2072
    %vm2095 = vweird.f32 %v2089
    %vm2096 = vmor %vm2094, %vm2095
    %v2097 = vsel %vm2096, %v2089, %v2093
    %v2098 = vand.u32 2147483647, %v2072
    %vm2099 = vcmp.eq.f32.partialorder %v2098, 8.507059e+37
    %v2100 = vand.u32 %v2072, 2147483648
    %v2101 = vor.u32 1.1754944e-38, %v2100
    %v2102 = vsel %vm2099, %v2101, %v2097
    %v2103 = vmul.f32 0.00390625, %v2102
    %2104 = vmatpush.xpose.msra.mxu0 0.0
    %2105 = vmatpush.xpose.msra.mxu0 0.0
    %2106 = vmatpush.xpose.msra.mxu0 0.0
    %2107 = vmatpush.xpose.msra.mxu0 0.0
    %2108 = vmatpush.xpose.msra.mxu0 0.0
    %2109 = vmatpush.xpose.msra.mxu0 0.0
    %2110 = vmatpush.xpose.msra.mxu0 0.0
    %2111 = vmatpush.xpose.msra.mxu0 0.0
    %2112 = vmatpush.xpose.msra.mxu0 0.0
    %2113 = vmatpush.xpose.msra.mxu0 0.0
    %2114 = vmatpush.xpose.msra.mxu0 0.0
    %2115 = vmatpush.xpose.msra.mxu0 0.0
    %2116 = vmatpush.xpose.msra.mxu0 0.0
    %2117 = vmatpush.xpose.msra.mxu0 0.0
    %2118 = vmatpush.xpose.msra.mxu0 %v491
    %2119 = vmatpush.xpose.msra.mxu0 %v487
    %2120 = vmatmul.f32.gmra.mxu0 %v2088
    %v2121 = vpop.f32.mrf.mxu0
    %v2122 = vadd.f32 1e-16, %v2121
    %2123 = vdwg.mxu0
    %2124 = vmatpush.xpose.msra.mxu0 0.0
    %2125 = vmatpush.xpose.msra.mxu0 0.0
    %2126 = vmatpush.xpose.msra.mxu0 0.0
    %2127 = vmatpush.xpose.msra.mxu0 0.0
    %2128 = vmatpush.xpose.msra.mxu0 0.0
    %2129 = vmatpush.xpose.msra.mxu0 0.0
    %2130 = vmatpush.xpose.msra.mxu0 0.0
    %2131 = vmatpush.xpose.msra.mxu0 0.0
    %2132 = vmatpush.xpose.msra.mxu0 0.0
    %2133 = vmatpush.xpose.msra.mxu0 0.0
    %2134 = vmatpush.xpose.msra.mxu0 0.0
    %2135 = vmatpush.xpose.msra.mxu0 0.0
    %2136 = vmatpush.xpose.msra.mxu0 0.0
    %2137 = vmatpush.xpose.msra.mxu0 0.0
    %2138 = vmatpush.xpose.msra.mxu0 %v493
    %2139 = vmatpush.xpose.msra.mxu0 %v489
    %2140 = vmatmul.f32.gmra.mxu0 %v2103
    %v2141 = vpop.f32.mrf.mxu0
    %v2142 = vadd.f32 %v2122, %v2141
    %2143 = vdwg.mxu0
    %v2144 = vrcp.pop %v2142
    %v2145 = vmul.f32 %v2142, %v2144
    %v2146 = vsub.f32 1.0, %v2145
    %v2147 = vmul.f32 %v2144, %v2146
    %v2148 = vadd.f32 %v2144, %v2147
    %vm2149 = vweird.f32 %v2142
    %vm2150 = vweird.f32 %v2144
    %vm2151 = vmor %vm2149, %vm2150
    %v2152 = vsel %vm2151, %v2144, %v2148
    %v2153 = vand.u32 2147483647, %v2142
    %vm2154 = vcmp.eq.f32.partialorder %v2153, 8.507059e+37
    %v2155 = vand.u32 %v2142, 2147483648
    %v2156 = vor.u32 1.1754944e-38, %v2155
    %v2157 = vsel %vm2154, %v2156, %v2152
    %v2158 = vmul.f32 0.0625, %v2157
    %v2160 = vsel %vm494, %v2158, 0
    %2162 = vmatpush.msra.mxu0 0.0
    %2163 = vmatpush.msra.mxu0 0.0
    %2164 = vmatpush.msra.mxu0 0.0
    %2165 = vmatpush.msra.mxu0 0.0
    %2166 = vmatpush.msra.mxu0 0.0
    %2167 = vmatpush.msra.mxu0 0.0
    %2168 = vmatpush.msra.mxu0 0.0
    %2169 = vmatpush.msra.mxu0 0.0
    %2170 = vmatpush.msra.mxu0 0.0
    %2171 = vmatpush.msra.mxu0 0.0
    %2172 = vmatpush.msra.mxu0 0.0
    %2173 = vmatpush.msra.mxu0 0.0
    %2174 = vmatpush.msra.mxu0 0.0
    %2175 = vmatpush.msra.mxu0 0.0
    %2176 = vmatpush.msra.mxu0 %v491
    %2177 = vmatpush.msra.mxu0 %v487
    %2178 = vmatmul.f32.gmra.mxu0 %v2160
    %v2179 = vpop.f32.mrf.mxu0
    %v2180 = vadd.f32 1e-16, %v2179
    %2181 = vdwg.mxu0
    %2182 = vmatpush.msra.mxu0 0.0
    %2183 = vmatpush.msra.mxu0 0.0
    %2184 = vmatpush.msra.mxu0 0.0
    %2185 = vmatpush.msra.mxu0 0.0
    %2186 = vmatpush.msra.mxu0 0.0
    %2187 = vmatpush.msra.mxu0 0.0
    %2188 = vmatpush.msra.mxu0 0.0
    %2189 = vmatpush.msra.mxu0 0.0
    %2190 = vmatpush.msra.mxu0 0.0
    %2191 = vmatpush.msra.mxu0 0.0
    %2192 = vmatpush.msra.mxu0 0.0
    %2193 = vmatpush.msra.mxu0 0.0
    %2194 = vmatpush.msra.mxu0 0.0
    %2195 = vmatpush.msra.mxu0 0.0
    %2196 = vmatpush.msra.mxu0 %v493
    %2197 = vmatpush.msra.mxu0 %v489
    %2198 = vmatmul.f32.gmra.mxu0 %v2160
    %v2199 = vpop.f32.mrf.mxu0
    %v2200 = vadd.f32 1e-16, %v2199
    %2201 = vdwg.mxu0
    %v2202 = vrcp.pop %v2180
    %v2203 = vmul.f32 %v2180, %v2202
    %v2204 = vsub.f32 1.0, %v2203
    %v2205 = vmul.f32 %v2202, %v2204
    %v2206 = vadd.f32 %v2202, %v2205
    %vm2207 = vweird.f32 %v2180
    %vm2208 = vweird.f32 %v2202
    %vm2209 = vmor %vm2207, %vm2208
    %v2210 = vsel %vm2209, %v2202, %v2206
    %v2211 = vand.u32 2147483647, %v2180
    %vm2212 = vcmp.eq.f32.partialorder %v2211, 8.507059e+37
    %v2213 = vand.u32 %v2180, 2147483648
    %v2214 = vor.u32 1.1754944e-38, %v2213
    %v2215 = vsel %vm2212, %v2214, %v2210
    %v2216 = vmul.f32 0.00390625, %v2215
    %v2217 = vrcp.pop %v2200
    %v2218 = vmul.f32 %v2200, %v2217
    %v2219 = vsub.f32 1.0, %v2218
    %v2220 = vmul.f32 %v2217, %v2219
    %v2221 = vadd.f32 %v2217, %v2220
    %vm2222 = vweird.f32 %v2200
    %vm2223 = vweird.f32 %v2217
    %vm2224 = vmor %vm2222, %vm2223
    %v2225 = vsel %vm2224, %v2217, %v2221
    %v2226 = vand.u32 2147483647, %v2200
    %vm2227 = vcmp.eq.f32.partialorder %v2226, 8.507059e+37
    %v2228 = vand.u32 %v2200, 2147483648
    %v2229 = vor.u32 1.1754944e-38, %v2228
    %v2230 = vsel %vm2227, %v2229, %v2225
    %v2231 = vmul.f32 0.00390625, %v2230
    %2232 = vmatpush.xpose.msra.mxu0 0.0
    %2233 = vmatpush.xpose.msra.mxu0 0.0
    %2234 = vmatpush.xpose.msra.mxu0 0.0
    %2235 = vmatpush.xpose.msra.mxu0 0.0
    %2236 = vmatpush.xpose.msra.mxu0 0.0
    %2237 = vmatpush.xpose.msra.mxu0 0.0
    %2238 = vmatpush.xpose.msra.mxu0 0.0
    %2239 = vmatpush.xpose.msra.mxu0 0.0
    %2240 = vmatpush.xpose.msra.mxu0 0.0
    %2241 = vmatpush.xpose.msra.mxu0 0.0
    %2242 = vmatpush.xpose.msra.mxu0 0.0
    %2243 = vmatpush.xpose.msra.mxu0 0.0
    %2244 = vmatpush.xpose.msra.mxu0 0.0
    %2245 = vmatpush.xpose.msra.mxu0 0.0
    %2246 = vmatpush.xpose.msra.mxu0 %v491
    %2247 = vmatpush.xpose.msra.mxu0 %v487
    %2248 = vmatmul.f32.gmra.mxu0 %v2216
    %v2249 = vpop.f32.mrf.mxu0
    %v2250 = vadd.f32 1e-16, %v2249
    %2251 = vdwg.mxu0
    %2252 = vmatpush.xpose.msra.mxu0 0.0
    %2253 = vmatpush.xpose.msra.mxu0 0.0
    %2254 = vmatpush.xpose.msra.mxu0 0.0
    %2255 = vmatpush.xpose.msra.mxu0 0.0
    %2256 = vmatpush.xpose.msra.mxu0 0.0
    %2257 = vmatpush.xpose.msra.mxu0 0.0
    %2258 = vmatpush.xpose.msra.mxu0 0.0
    %2259 = vmatpush.xpose.msra.mxu0 0.0
    %2260 = vmatpush.xpose.msra.mxu0 0.0
    %2261 = vmatpush.xpose.msra.mxu0 0.0
    %2262 = vmatpush.xpose.msra.mxu0 0.0
    %2263 = vmatpush.xpose.msra.mxu0 0.0
    %2264 = vmatpush.xpose.msra.mxu0 0.0
    %2265 = vmatpush.xpose.msra.mxu0 0.0
    %2266 = vmatpush.xpose.msra.mxu0 %v493
    %2267 = vmatpush.xpose.msra.mxu0 %v489
    %2268 = vmatmul.f32.gmra.mxu0 %v2231
    %v2269 = vpop.f32.mrf.mxu0
    %v2270 = vadd.f32 %v2250, %v2269
    %2271 = vdwg.mxu0
    %v2272 = vrcp.pop %v2270
    %v2273 = vmul.f32 %v2270, %v2272
    %v2274 = vsub.f32 1.0, %v2273
    %v2275 = vmul.f32 %v2272, %v2274
    %v2276 = vadd.f32 %v2272, %v2275
    %vm2277 = vweird.f32 %v2270
    %vm2278 = vweird.f32 %v2272
    %vm2279 = vmor %vm2277, %vm2278
    %v2280 = vsel %vm2279, %v2272, %v2276
    %v2281 = vand.u32 2147483647, %v2270
    %vm2282 = vcmp.eq.f32.partialorder %v2281, 8.507059e+37
    %v2283 = vand.u32 %v2270, 2147483648
    %v2284 = vor.u32 1.1754944e-38, %v2283
    %v2285 = vsel %vm2282, %v2284, %v2280
    %v2286 = vmul.f32 0.0625, %v2285
    %v2288 = vsel %vm494, %v2286, 0
    %2290 = vmatpush.msra.mxu0 0.0
    %2291 = vmatpush.msra.mxu0 0.0
    %2292 = vmatpush.msra.mxu0 0.0
    %2293 = vmatpush.msra.mxu0 0.0
    %2294 = vmatpush.msra.mxu0 0.0
    %2295 = vmatpush.msra.mxu0 0.0
    %2296 = vmatpush.msra.mxu0 0.0
    %2297 = vmatpush.msra.mxu0 0.0
    %2298 = vmatpush.msra.mxu0 0.0
    %2299 = vmatpush.msra.mxu0 0.0
    %2300 = vmatpush.msra.mxu0 0.0
    %2301 = vmatpush.msra.mxu0 0.0
    %2302 = vmatpush.msra.mxu0 0.0
    %2303 = vmatpush.msra.mxu0 0.0
    %2304 = vmatpush.msra.mxu0 %v491
    %2305 = vmatpush.msra.mxu0 %v487
    %2306 = vmatmul.f32.gmra.mxu0 %v2288
    %v2307 = vpop.f32.mrf.mxu0
    %v2308 = vadd.f32 1e-16, %v2307
    %2309 = vdwg.mxu0
    %2310 = vmatpush.msra.mxu0 0.0
    %2311 = vmatpush.msra.mxu0 0.0
    %2312 = vmatpush.msra.mxu0 0.0
    %2313 = vmatpush.msra.mxu0 0.0
    %2314 = vmatpush.msra.mxu0 0.0
    %2315 = vmatpush.msra.mxu0 0.0
    %2316 = vmatpush.msra.mxu0 0.0
    %2317 = vmatpush.msra.mxu0 0.0
    %2318 = vmatpush.msra.mxu0 0.0
    %2319 = vmatpush.msra.mxu0 0.0
    %2320 = vmatpush.msra.mxu0 0.0
    %2321 = vmatpush.msra.mxu0 0.0
    %2322 = vmatpush.msra.mxu0 0.0
    %2323 = vmatpush.msra.mxu0 0.0
    %2324 = vmatpush.msra.mxu0 %v493
    %2325 = vmatpush.msra.mxu0 %v489
    %2326 = vmatmul.f32.gmra.mxu0 %v2288
    %v2327 = vpop.f32.mrf.mxu0
    %v2328 = vadd.f32 1e-16, %v2327
    %2329 = vdwg.mxu0
    %v2330 = vrcp.pop %v2308
    %v2331 = vmul.f32 %v2308, %v2330
    %v2332 = vsub.f32 1.0, %v2331
    %v2333 = vmul.f32 %v2330, %v2332
    %v2334 = vadd.f32 %v2330, %v2333
    %vm2335 = vweird.f32 %v2308
    %vm2336 = vweird.f32 %v2330
    %vm2337 = vmor %vm2335, %vm2336
    %v2338 = vsel %vm2337, %v2330, %v2334
    %v2339 = vand.u32 2147483647, %v2308
    %vm2340 = vcmp.eq.f32.partialorder %v2339, 8.507059e+37
    %v2341 = vand.u32 %v2308, 2147483648
    %v2342 = vor.u32 1.1754944e-38, %v2341
    %v2343 = vsel %vm2340, %v2342, %v2338
    %v2344 = vmul.f32 0.00390625, %v2343
    %v2345 = vrcp.pop %v2328
    %v2346 = vmul.f32 %v2328, %v2345
    %v2347 = vsub.f32 1.0, %v2346
    %v2348 = vmul.f32 %v2345, %v2347
    %v2349 = vadd.f32 %v2345, %v2348
    %vm2350 = vweird.f32 %v2328
    %vm2351 = vweird.f32 %v2345
    %vm2352 = vmor %vm2350, %vm2351
    %v2353 = vsel %vm2352, %v2345, %v2349
    %v2354 = vand.u32 2147483647, %v2328
    %vm2355 = vcmp.eq.f32.partialorder %v2354, 8.507059e+37
    %v2356 = vand.u32 %v2328, 2147483648
    %v2357 = vor.u32 1.1754944e-38, %v2356
    %v2358 = vsel %vm2355, %v2357, %v2353
    %v2359 = vmul.f32 0.00390625, %v2358
    %2360 = vmatpush.xpose.msra.mxu0 0.0
    %2361 = vmatpush.xpose.msra.mxu0 0.0
    %2362 = vmatpush.xpose.msra.mxu0 0.0
    %2363 = vmatpush.xpose.msra.mxu0 0.0
    %2364 = vmatpush.xpose.msra.mxu0 0.0
    %2365 = vmatpush.xpose.msra.mxu0 0.0
    %2366 = vmatpush.xpose.msra.mxu0 0.0
    %2367 = vmatpush.xpose.msra.mxu0 0.0
    %2368 = vmatpush.xpose.msra.mxu0 0.0
    %2369 = vmatpush.xpose.msra.mxu0 0.0
    %2370 = vmatpush.xpose.msra.mxu0 0.0
    %2371 = vmatpush.xpose.msra.mxu0 0.0
    %2372 = vmatpush.xpose.msra.mxu0 0.0
    %2373 = vmatpush.xpose.msra.mxu0 0.0
    %2374 = vmatpush.xpose.msra.mxu0 %v491
    %2375 = vmatpush.xpose.msra.mxu0 %v487
    %2376 = vmatmul.f32.gmra.mxu0 %v2344
    %v2377 = vpop.f32.mrf.mxu0
    %v2378 = vadd.f32 1e-16, %v2377
    %2379 = vdwg.mxu0
    %2380 = vmatpush.xpose.msra.mxu0 0.0
    %2381 = vmatpush.xpose.msra.mxu0 0.0
    %2382 = vmatpush.xpose.msra.mxu0 0.0
    %2383 = vmatpush.xpose.msra.mxu0 0.0
    %2384 = vmatpush.xpose.msra.mxu0 0.0
    %2385 = vmatpush.xpose.msra.mxu0 0.0
    %2386 = vmatpush.xpose.msra.mxu0 0.0
    %2387 = vmatpush.xpose.msra.mxu0 0.0
    %2388 = vmatpush.xpose.msra.mxu0 0.0
    %2389 = vmatpush.xpose.msra.mxu0 0.0
    %2390 = vmatpush.xpose.msra.mxu0 0.0
    %2391 = vmatpush.xpose.msra.mxu0 0.0
    %2392 = vmatpush.xpose.msra.mxu0 0.0
    %2393 = vmatpush.xpose.msra.mxu0 0.0
    %2394 = vmatpush.xpose.msra.mxu0 %v493
    %2395 = vmatpush.xpose.msra.mxu0 %v489
    %2396 = vmatmul.f32.gmra.mxu0 %v2359
    %v2397 = vpop.f32.mrf.mxu0
    %v2398 = vadd.f32 %v2378, %v2397
    %2399 = vdwg.mxu0
    %v2400 = vrcp.pop %v2398
    %v2401 = vmul.f32 %v2398, %v2400
    %v2402 = vsub.f32 1.0, %v2401
    %v2403 = vmul.f32 %v2400, %v2402
    %v2404 = vadd.f32 %v2400, %v2403
    %vm2405 = vweird.f32 %v2398
    %vm2406 = vweird.f32 %v2400
    %vm2407 = vmor %vm2405, %vm2406
    %v2408 = vsel %vm2407, %v2400, %v2404
    %v2409 = vand.u32 2147483647, %v2398
    %vm2410 = vcmp.eq.f32.partialorder %v2409, 8.507059e+37
    %v2411 = vand.u32 %v2398, 2147483648
    %v2412 = vor.u32 1.1754944e-38, %v2411
    %v2413 = vsel %vm2410, %v2412, %v2408
    %v2414 = vmul.f32 0.0625, %v2413
    %v2416 = vsel %vm494, %v2414, 0
    %2418 = vmatpush.msra.mxu0 0.0
    %2419 = vmatpush.msra.mxu0 0.0
    %2420 = vmatpush.msra.mxu0 0.0
    %2421 = vmatpush.msra.mxu0 0.0
    %2422 = vmatpush.msra.mxu0 0.0
    %2423 = vmatpush.msra.mxu0 0.0
    %2424 = vmatpush.msra.mxu0 0.0
    %2425 = vmatpush.msra.mxu0 0.0
    %2426 = vmatpush.msra.mxu0 0.0
    %2427 = vmatpush.msra.mxu0 0.0
    %2428 = vmatpush.msra.mxu0 0.0
    %2429 = vmatpush.msra.mxu0 0.0
    %2430 = vmatpush.msra.mxu0 0.0
    %2431 = vmatpush.msra.mxu0 0.0
    %2432 = vmatpush.msra.mxu0 %v491
    %2433 = vmatpush.msra.mxu0 %v487
    %2434 = vmatmul.f32.gmra.mxu0 %v2416
    %v2435 = vpop.f32.mrf.mxu0
    %v2436 = vadd.f32 1e-16, %v2435
    %2437 = vdwg.mxu0
    %2438 = vmatpush.msra.mxu0 0.0
    %2439 = vmatpush.msra.mxu0 0.0
    %2440 = vmatpush.msra.mxu0 0.0
    %2441 = vmatpush.msra.mxu0 0.0
    %2442 = vmatpush.msra.mxu0 0.0
    %2443 = vmatpush.msra.mxu0 0.0
    %2444 = vmatpush.msra.mxu0 0.0
    %2445 = vmatpush.msra.mxu0 0.0
    %2446 = vmatpush.msra.mxu0 0.0
    %2447 = vmatpush.msra.mxu0 0.0
    %2448 = vmatpush.msra.mxu0 0.0
    %2449 = vmatpush.msra.mxu0 0.0
    %2450 = vmatpush.msra.mxu0 0.0
    %2451 = vmatpush.msra.mxu0 0.0
    %2452 = vmatpush.msra.mxu0 %v493
    %2453 = vmatpush.msra.mxu0 %v489
    %2454 = vmatmul.f32.gmra.mxu0 %v2416
    %v2455 = vpop.f32.mrf.mxu0
    %v2456 = vadd.f32 1e-16, %v2455
    %2457 = vdwg.mxu0
    %v2458 = vrcp.pop %v2436
    %v2459 = vmul.f32 %v2436, %v2458
    %v2460 = vsub.f32 1.0, %v2459
    %v2461 = vmul.f32 %v2458, %v2460
    %v2462 = vadd.f32 %v2458, %v2461
    %vm2463 = vweird.f32 %v2436
    %vm2464 = vweird.f32 %v2458
    %vm2465 = vmor %vm2463, %vm2464
    %v2466 = vsel %vm2465, %v2458, %v2462
    %v2467 = vand.u32 2147483647, %v2436
    %vm2468 = vcmp.eq.f32.partialorder %v2467, 8.507059e+37
    %v2469 = vand.u32 %v2436, 2147483648
    %v2470 = vor.u32 1.1754944e-38, %v2469
    %v2471 = vsel %vm2468, %v2470, %v2466
    %v2472 = vmul.f32 0.00390625, %v2471
    %v2473 = vrcp.pop %v2456
    %v2474 = vmul.f32 %v2456, %v2473
    %v2475 = vsub.f32 1.0, %v2474
    %v2476 = vmul.f32 %v2473, %v2475
    %v2477 = vadd.f32 %v2473, %v2476
    %vm2478 = vweird.f32 %v2456
    %vm2479 = vweird.f32 %v2473
    %vm2480 = vmor %vm2478, %vm2479
    %v2481 = vsel %vm2480, %v2473, %v2477
    %v2482 = vand.u32 2147483647, %v2456
    %vm2483 = vcmp.eq.f32.partialorder %v2482, 8.507059e+37
    %v2484 = vand.u32 %v2456, 2147483648
    %v2485 = vor.u32 1.1754944e-38, %v2484
    %v2486 = vsel %vm2483, %v2485, %v2481
    %v2487 = vmul.f32 0.00390625, %v2486
    %2488 = vmatpush.xpose.msra.mxu0 0.0
    %2489 = vmatpush.xpose.msra.mxu0 0.0
    %2490 = vmatpush.xpose.msra.mxu0 0.0
    %2491 = vmatpush.xpose.msra.mxu0 0.0
    %2492 = vmatpush.xpose.msra.mxu0 0.0
    %2493 = vmatpush.xpose.msra.mxu0 0.0
    %2494 = vmatpush.xpose.msra.mxu0 0.0
    %2495 = vmatpush.xpose.msra.mxu0 0.0
    %2496 = vmatpush.xpose.msra.mxu0 0.0
    %2497 = vmatpush.xpose.msra.mxu0 0.0
    %2498 = vmatpush.xpose.msra.mxu0 0.0
    %2499 = vmatpush.xpose.msra.mxu0 0.0
    %2500 = vmatpush.xpose.msra.mxu0 0.0
    %2501 = vmatpush.xpose.msra.mxu0 0.0
    %2502 = vmatpush.xpose.msra.mxu0 %v491
    %2503 = vmatpush.xpose.msra.mxu0 %v487
    %2504 = vmatmul.f32.gmra.mxu0 %v2472
    %v2505 = vpop.f32.mrf.mxu0
    %v2506 = vadd.f32 1e-16, %v2505
    %2507 = vdwg.mxu0
    %2508 = vmatpush.xpose.msra.mxu0 0.0
    %2509 = vmatpush.xpose.msra.mxu0 0.0
    %2510 = vmatpush.xpose.msra.mxu0 0.0
    %2511 = vmatpush.xpose.msra.mxu0 0.0
    %2512 = vmatpush.xpose.msra.mxu0 0.0
    %2513 = vmatpush.xpose.msra.mxu0 0.0
    %2514 = vmatpush.xpose.msra.mxu0 0.0
    %2515 = vmatpush.xpose.msra.mxu0 0.0
    %2516 = vmatpush.xpose.msra.mxu0 0.0
    %2517 = vmatpush.xpose.msra.mxu0 0.0
    %2518 = vmatpush.xpose.msra.mxu0 0.0
    %2519 = vmatpush.xpose.msra.mxu0 0.0
    %2520 = vmatpush.xpose.msra.mxu0 0.0
    %2521 = vmatpush.xpose.msra.mxu0 0.0
    %2522 = vmatpush.xpose.msra.mxu0 %v493
    %2523 = vmatpush.xpose.msra.mxu0 %v489
    %2524 = vmatmul.f32.gmra.mxu0 %v2487
    %v2525 = vpop.f32.mrf.mxu0
    %v2526 = vadd.f32 %v2506, %v2525
    %2527 = vdwg.mxu0
    %v2528 = vrcp.pop %v2526
    %v2529 = vmul.f32 %v2526, %v2528
    %v2530 = vsub.f32 1.0, %v2529
    %v2531 = vmul.f32 %v2528, %v2530
    %v2532 = vadd.f32 %v2528, %v2531
    %vm2533 = vweird.f32 %v2526
    %vm2534 = vweird.f32 %v2528
    %vm2535 = vmor %vm2533, %vm2534
    %v2536 = vsel %vm2535, %v2528, %v2532
    %v2537 = vand.u32 2147483647, %v2526
    %vm2538 = vcmp.eq.f32.partialorder %v2537, 8.507059e+37
    %v2539 = vand.u32 %v2526, 2147483648
    %v2540 = vor.u32 1.1754944e-38, %v2539
    %v2541 = vsel %vm2538, %v2540, %v2536
    %v2542 = vmul.f32 0.0625, %v2541
    %v2544 = vsel %vm494, %v2542, 0
    %2546 = vmatpush.msra.mxu0 0.0
    %2547 = vmatpush.msra.mxu0 0.0
    %2548 = vmatpush.msra.mxu0 0.0
    %2549 = vmatpush.msra.mxu0 0.0
    %2550 = vmatpush.msra.mxu0 0.0
    %2551 = vmatpush.msra.mxu0 0.0
    %2552 = vmatpush.msra.mxu0 0.0
    %2553 = vmatpush.msra.mxu0 0.0
    %2554 = vmatpush.msra.mxu0 0.0
    %2555 = vmatpush.msra.mxu0 0.0
    %2556 = vmatpush.msra.mxu0 0.0
    %2557 = vmatpush.msra.mxu0 0.0
    %2558 = vmatpush.msra.mxu0 0.0
    %2559 = vmatpush.msra.mxu0 0.0
    %2560 = vmatpush.msra.mxu0 %v491
    %2561 = vmatpush.msra.mxu0 %v487
    %2562 = vmatmul.f32.gmra.mxu0 %v2544
    %v2563 = vpop.f32.mrf.mxu0
    %v2564 = vadd.f32 1e-16, %v2563
    %2565 = vdwg.mxu0
    %2566 = vmatpush.msra.mxu0 0.0
    %2567 = vmatpush.msra.mxu0 0.0
    %2568 = vmatpush.msra.mxu0 0.0
    %2569 = vmatpush.msra.mxu0 0.0
    %2570 = vmatpush.msra.mxu0 0.0
    %2571 = vmatpush.msra.mxu0 0.0
    %2572 = vmatpush.msra.mxu0 0.0
    %2573 = vmatpush.msra.mxu0 0.0
    %2574 = vmatpush.msra.mxu0 0.0
    %2575 = vmatpush.msra.mxu0 0.0
    %2576 = vmatpush.msra.mxu0 0.0
    %2577 = vmatpush.msra.mxu0 0.0
    %2578 = vmatpush.msra.mxu0 0.0
    %2579 = vmatpush.msra.mxu0 0.0
    %2580 = vmatpush.msra.mxu0 %v493
    %2581 = vmatpush.msra.mxu0 %v489
    %2582 = vmatmul.f32.gmra.mxu0 %v2544
    %v2583 = vpop.f32.mrf.mxu0
    %v2584 = vadd.f32 1e-16, %v2583
    %2585 = vdwg.mxu0
    %v2586 = vrcp.pop %v2564
    %v2587 = vmul.f32 %v2564, %v2586
    %v2588 = vsub.f32 1.0, %v2587
    %v2589 = vmul.f32 %v2586, %v2588
    %v2590 = vadd.f32 %v2586, %v2589
    %vm2591 = vweird.f32 %v2564
    %vm2592 = vweird.f32 %v2586
    %vm2593 = vmor %vm2591, %vm2592
    %v2594 = vsel %vm2593, %v2586, %v2590
    %v2595 = vand.u32 2147483647, %v2564
    %vm2596 = vcmp.eq.f32.partialorder %v2595, 8.507059e+37
    %v2597 = vand.u32 %v2564, 2147483648
    %v2598 = vor.u32 1.1754944e-38, %v2597
    %v2599 = vsel %vm2596, %v2598, %v2594
    %v2600 = vmul.f32 0.00390625, %v2599
    %v2601 = vrcp.pop %v2584
    %v2602 = vmul.f32 %v2584, %v2601
    %v2603 = vsub.f32 1.0, %v2602
    %v2604 = vmul.f32 %v2601, %v2603
    %v2605 = vadd.f32 %v2601, %v2604
    %vm2606 = vweird.f32 %v2584
    %vm2607 = vweird.f32 %v2601
    %vm2608 = vmor %vm2606, %vm2607
    %v2609 = vsel %vm2608, %v2601, %v2605
    %v2610 = vand.u32 2147483647, %v2584
    %vm2611 = vcmp.eq.f32.partialorder %v2610, 8.507059e+37
    %v2612 = vand.u32 %v2584, 2147483648
    %v2613 = vor.u32 1.1754944e-38, %v2612
    %v2614 = vsel %vm2611, %v2613, %v2609
    %v2615 = vmul.f32 0.00390625, %v2614
    %2616 = vmatpush.xpose.msra.mxu0 0.0
    %2617 = vmatpush.xpose.msra.mxu0 0.0
    %2618 = vmatpush.xpose.msra.mxu0 0.0
    %2619 = vmatpush.xpose.msra.mxu0 0.0
    %2620 = vmatpush.xpose.msra.mxu0 0.0
    %2621 = vmatpush.xpose.msra.mxu0 0.0
    %2622 = vmatpush.xpose.msra.mxu0 0.0
    %2623 = vmatpush.xpose.msra.mxu0 0.0
    %2624 = vmatpush.xpose.msra.mxu0 0.0
    %2625 = vmatpush.xpose.msra.mxu0 0.0
    %2626 = vmatpush.xpose.msra.mxu0 0.0
    %2627 = vmatpush.xpose.msra.mxu0 0.0
    %2628 = vmatpush.xpose.msra.mxu0 0.0
    %2629 = vmatpush.xpose.msra.mxu0 0.0
    %2630 = vmatpush.xpose.msra.mxu0 %v491
    %2631 = vmatpush.xpose.msra.mxu0 %v487
    %2632 = vmatmul.f32.gmra.mxu0 %v2600
    %v2633 = vpop.f32.mrf.mxu0
    %v2634 = vadd.f32 1e-16, %v2633
    %2635 = vdwg.mxu0
    %2636 = vmatpush.xpose.msra.mxu0 0.0
    %2637 = vmatpush.xpose.msra.mxu0 0.0
    %2638 = vmatpush.xpose.msra.mxu0 0.0
    %2639 = vmatpush.xpose.msra.mxu0 0.0
    %2640 = vmatpush.xpose.msra.mxu0 0.0
    %2641 = vmatpush.xpose.msra.mxu0 0.0
    %2642 = vmatpush.xpose.msra.mxu0 0.0
    %2643 = vmatpush.xpose.msra.mxu0 0.0
    %2644 = vmatpush.xpose.msra.mxu0 0.0
    %2645 = vmatpush.xpose.msra.mxu0 0.0
    %2646 = vmatpush.xpose.msra.mxu0 0.0
    %2647 = vmatpush.xpose.msra.mxu0 0.0
    %2648 = vmatpush.xpose.msra.mxu0 0.0
    %2649 = vmatpush.xpose.msra.mxu0 0.0
    %2650 = vmatpush.xpose.msra.mxu0 %v493
    %2651 = vmatpush.xpose.msra.mxu0 %v489
    %2652 = vmatmul.f32.gmra.mxu0 %v2615
    %v2653 = vpop.f32.mrf.mxu0
    %v2654 = vadd.f32 %v2634, %v2653
    %2655 = vdwg.mxu0
    %v2656 = vrcp.pop %v2654
    %v2657 = vmul.f32 %v2654, %v2656
    %v2658 = vsub.f32 1.0, %v2657
    %v2659 = vmul.f32 %v2656, %v2658
    %v2660 = vadd.f32 %v2656, %v2659
    %vm2661 = vweird.f32 %v2654
    %vm2662 = vweird.f32 %v2656
    %vm2663 = vmor %vm2661, %vm2662
    %v2664 = vsel %vm2663, %v2656, %v2660
    %v2665 = vand.u32 2147483647, %v2654
    %vm2666 = vcmp.eq.f32.partialorder %v2665, 8.507059e+37
    %v2667 = vand.u32 %v2654, 2147483648
    %v2668 = vor.u32 1.1754944e-38, %v2667
    %v2669 = vsel %vm2666, %v2668, %v2664
    %v2670 = vmul.f32 0.0625, %v2669
    %v2672 = vsel %vm494, %v2670, 0
    %2674 = vmatpush.msra.mxu0 0.0
    %2675 = vmatpush.msra.mxu0 0.0
    %2676 = vmatpush.msra.mxu0 0.0
    %2677 = vmatpush.msra.mxu0 0.0
    %2678 = vmatpush.msra.mxu0 0.0
    %2679 = vmatpush.msra.mxu0 0.0
    %2680 = vmatpush.msra.mxu0 0.0
    %2681 = vmatpush.msra.mxu0 0.0
    %2682 = vmatpush.msra.mxu0 0.0
    %2683 = vmatpush.msra.mxu0 0.0
    %2684 = vmatpush.msra.mxu0 0.0
    %2685 = vmatpush.msra.mxu0 0.0
    %2686 = vmatpush.msra.mxu0 0.0
    %2687 = vmatpush.msra.mxu0 0.0
    %2688 = vmatpush.msra.mxu0 %v491
    %2689 = vmatpush.msra.mxu0 %v487
    %2690 = vmatmul.f32.gmra.mxu0 %v2672
    %v2691 = vpop.f32.mrf.mxu0
    %v2692 = vadd.f32 1e-16, %v2691
    %2693 = vdwg.mxu0
    %2694 = vmatpush.msra.mxu0 0.0
    %2695 = vmatpush.msra.mxu0 0.0
    %2696 = vmatpush.msra.mxu0 0.0
    %2697 = vmatpush.msra.mxu0 0.0
    %2698 = vmatpush.msra.mxu0 0.0
    %2699 = vmatpush.msra.mxu0 0.0
    %2700 = vmatpush.msra.mxu0 0.0
    %2701 = vmatpush.msra.mxu0 0.0
    %2702 = vmatpush.msra.mxu0 0.0
    %2703 = vmatpush.msra.mxu0 0.0
    %2704 = vmatpush.msra.mxu0 0.0
    %2705 = vmatpush.msra.mxu0 0.0
    %2706 = vmatpush.msra.mxu0 0.0
    %2707 = vmatpush.msra.mxu0 0.0
    %2708 = vmatpush.msra.mxu0 %v493
    %2709 = vmatpush.msra.mxu0 %v489
    %2710 = vmatmul.f32.gmra.mxu0 %v2672
    %v2711 = vpop.f32.mrf.mxu0
    %v2712 = vadd.f32 1e-16, %v2711
    %2713 = vdwg.mxu0
    %v2714 = vrcp.pop %v2692
    %v2715 = vmul.f32 %v2692, %v2714
    %v2716 = vsub.f32 1.0, %v2715
    %v2717 = vmul.f32 %v2714, %v2716
    %v2718 = vadd.f32 %v2714, %v2717
    %vm2719 = vweird.f32 %v2692
    %vm2720 = vweird.f32 %v2714
    %vm2721 = vmor %vm2719, %vm2720
    %v2722 = vsel %vm2721, %v2714, %v2718
    %v2723 = vand.u32 2147483647, %v2692
    %vm2724 = vcmp.eq.f32.partialorder %v2723, 8.507059e+37
    %v2725 = vand.u32 %v2692, 2147483648
    %v2726 = vor.u32 1.1754944e-38, %v2725
    %v2727 = vsel %vm2724, %v2726, %v2722
    %v2728 = vmul.f32 0.00390625, %v2727
    %v2729 = vrcp.pop %v2712
    %v2730 = vmul.f32 %v2712, %v2729
    %v2731 = vsub.f32 1.0, %v2730
    %v2732 = vmul.f32 %v2729, %v2731
    %v2733 = vadd.f32 %v2729, %v2732
    %vm2734 = vweird.f32 %v2712
    %vm2735 = vweird.f32 %v2729
    %vm2736 = vmor %vm2734, %vm2735
    %v2737 = vsel %vm2736, %v2729, %v2733
    %v2738 = vand.u32 2147483647, %v2712
    %vm2739 = vcmp.eq.f32.partialorder %v2738, 8.507059e+37
    %v2740 = vand.u32 %v2712, 2147483648
    %v2741 = vor.u32 1.1754944e-38, %v2740
    %v2742 = vsel %vm2739, %v2741, %v2737
    %v2743 = vmul.f32 0.00390625, %v2742
    %2744 = vmatpush.xpose.msra.mxu0 0.0
    %2745 = vmatpush.xpose.msra.mxu0 0.0
    %2746 = vmatpush.xpose.msra.mxu0 0.0
    %2747 = vmatpush.xpose.msra.mxu0 0.0
    %2748 = vmatpush.xpose.msra.mxu0 0.0
    %2749 = vmatpush.xpose.msra.mxu0 0.0
    %2750 = vmatpush.xpose.msra.mxu0 0.0
    %2751 = vmatpush.xpose.msra.mxu0 0.0
    %2752 = vmatpush.xpose.msra.mxu0 0.0
    %2753 = vmatpush.xpose.msra.mxu0 0.0
    %2754 = vmatpush.xpose.msra.mxu0 0.0
    %2755 = vmatpush.xpose.msra.mxu0 0.0
    %2756 = vmatpush.xpose.msra.mxu0 0.0
    %2757 = vmatpush.xpose.msra.mxu0 0.0
    %2758 = vmatpush.xpose.msra.mxu0 %v491
    %2759 = vmatpush.xpose.msra.mxu0 %v487
    %2760 = vmatmul.f32.gmra.mxu0 %v2728
    %v2761 = vpop.f32.mrf.mxu0
    %v2762 = vadd.f32 1e-16, %v2761
    %2763 = vdwg.mxu0
    %2764 = vmatpush.xpose.msra.mxu0 0.0
    %2765 = vmatpush.xpose.msra.mxu0 0.0
    %2766 = vmatpush.xpose.msra.mxu0 0.0
    %2767 = vmatpush.xpose.msra.mxu0 0.0
    %2768 = vmatpush.xpose.msra.mxu0 0.0
    %2769 = vmatpush.xpose.msra.mxu0 0.0
    %2770 = vmatpush.xpose.msra.mxu0 0.0
    %2771 = vmatpush.xpose.msra.mxu0 0.0
    %2772 = vmatpush.xpose.msra.mxu0 0.0
    %2773 = vmatpush.xpose.msra.mxu0 0.0
    %2774 = vmatpush.xpose.msra.mxu0 0.0
    %2775 = vmatpush.xpose.msra.mxu0 0.0
    %2776 = vmatpush.xpose.msra.mxu0 0.0
    %2777 = vmatpush.xpose.msra.mxu0 0.0
    %2778 = vmatpush.xpose.msra.mxu0 %v493
    %2779 = vmatpush.xpose.msra.mxu0 %v489
    %2780 = vmatmul.f32.gmra.mxu0 %v2743
    %v2781 = vpop.f32.mrf.mxu0
    %v2782 = vadd.f32 %v2762, %v2781
    %2783 = vdwg.mxu0
    %v2784 = vrcp.pop %v2782
    %v2785 = vmul.f32 %v2782, %v2784
    %v2786 = vsub.f32 1.0, %v2785
    %v2787 = vmul.f32 %v2784, %v2786
    %v2788 = vadd.f32 %v2784, %v2787
    %vm2789 = vweird.f32 %v2782
    %vm2790 = vweird.f32 %v2784
    %vm2791 = vmor %vm2789, %vm2790
    %v2792 = vsel %vm2791, %v2784, %v2788
    %v2793 = vand.u32 2147483647, %v2782
    %vm2794 = vcmp.eq.f32.partialorder %v2793, 8.507059e+37
    %v2795 = vand.u32 %v2782, 2147483648
    %v2796 = vor.u32 1.1754944e-38, %v2795
    %v2797 = vsel %vm2794, %v2796, %v2792
    %v2798 = vmul.f32 0.0625, %v2797
    %v2800 = vsel %vm494, %v2798, 0
    %2802 = vmatpush.msra.mxu0 0.0
    %2803 = vmatpush.msra.mxu0 0.0
    %2804 = vmatpush.msra.mxu0 0.0
    %2805 = vmatpush.msra.mxu0 0.0
    %2806 = vmatpush.msra.mxu0 0.0
    %2807 = vmatpush.msra.mxu0 0.0
    %2808 = vmatpush.msra.mxu0 0.0
    %2809 = vmatpush.msra.mxu0 0.0
    %2810 = vmatpush.msra.mxu0 0.0
    %2811 = vmatpush.msra.mxu0 0.0
    %2812 = vmatpush.msra.mxu0 0.0
    %2813 = vmatpush.msra.mxu0 0.0
    %2814 = vmatpush.msra.mxu0 0.0
    %2815 = vmatpush.msra.mxu0 0.0
    %2816 = vmatpush.msra.mxu0 %v491
    %2817 = vmatpush.msra.mxu0 %v487
    %2818 = vmatmul.f32.gmra.mxu0 %v2800
    %v2819 = vpop.f32.mrf.mxu0
    %v2820 = vadd.f32 1e-16, %v2819
    %2821 = vdwg.mxu0
    %2822 = vmatpush.msra.mxu0 0.0
    %2823 = vmatpush.msra.mxu0 0.0
    %2824 = vmatpush.msra.mxu0 0.0
    %2825 = vmatpush.msra.mxu0 0.0
    %2826 = vmatpush.msra.mxu0 0.0
    %2827 = vmatpush.msra.mxu0 0.0
    %2828 = vmatpush.msra.mxu0 0.0
    %2829 = vmatpush.msra.mxu0 0.0
    %2830 = vmatpush.msra.mxu0 0.0
    %2831 = vmatpush.msra.mxu0 0.0
    %2832 = vmatpush.msra.mxu0 0.0
    %2833 = vmatpush.msra.mxu0 0.0
    %2834 = vmatpush.msra.mxu0 0.0
    %2835 = vmatpush.msra.mxu0 0.0
    %2836 = vmatpush.msra.mxu0 %v493
    %2837 = vmatpush.msra.mxu0 %v489
    %2838 = vmatmul.f32.gmra.mxu0 %v2800
    %v2839 = vpop.f32.mrf.mxu0
    %v2840 = vadd.f32 1e-16, %v2839
    %2841 = vdwg.mxu0
    %v2842 = vrcp.pop %v2820
    %v2843 = vmul.f32 %v2820, %v2842
    %v2844 = vsub.f32 1.0, %v2843
    %v2845 = vmul.f32 %v2842, %v2844
    %v2846 = vadd.f32 %v2842, %v2845
    %vm2847 = vweird.f32 %v2820
    %vm2848 = vweird.f32 %v2842
    %vm2849 = vmor %vm2847, %vm2848
    %v2850 = vsel %vm2849, %v2842, %v2846
    %v2851 = vand.u32 2147483647, %v2820
    %vm2852 = vcmp.eq.f32.partialorder %v2851, 8.507059e+37
    %v2853 = vand.u32 %v2820, 2147483648
    %v2854 = vor.u32 1.1754944e-38, %v2853
    %v2855 = vsel %vm2852, %v2854, %v2850
    %v2856 = vmul.f32 0.00390625, %v2855
    %v2857 = vrcp.pop %v2840
    %v2858 = vmul.f32 %v2840, %v2857
    %v2859 = vsub.f32 1.0, %v2858
    %v2860 = vmul.f32 %v2857, %v2859
    %v2861 = vadd.f32 %v2857, %v2860
    %vm2862 = vweird.f32 %v2840
    %vm2863 = vweird.f32 %v2857
    %vm2864 = vmor %vm2862, %vm2863
    %v2865 = vsel %vm2864, %v2857, %v2861
    %v2866 = vand.u32 2147483647, %v2840
    %vm2867 = vcmp.eq.f32.partialorder %v2866, 8.507059e+37
    %v2868 = vand.u32 %v2840, 2147483648
    %v2869 = vor.u32 1.1754944e-38, %v2868
    %v2870 = vsel %vm2867, %v2869, %v2865
    %v2871 = vmul.f32 0.00390625, %v2870
    %2872 = vmatpush.xpose.msra.mxu0 0.0
    %2873 = vmatpush.xpose.msra.mxu0 0.0
    %2874 = vmatpush.xpose.msra.mxu0 0.0
    %2875 = vmatpush.xpose.msra.mxu0 0.0
    %2876 = vmatpush.xpose.msra.mxu0 0.0
    %2877 = vmatpush.xpose.msra.mxu0 0.0
    %2878 = vmatpush.xpose.msra.mxu0 0.0
    %2879 = vmatpush.xpose.msra.mxu0 0.0
    %2880 = vmatpush.xpose.msra.mxu0 0.0
    %2881 = vmatpush.xpose.msra.mxu0 0.0
    %2882 = vmatpush.xpose.msra.mxu0 0.0
    %2883 = vmatpush.xpose.msra.mxu0 0.0
    %2884 = vmatpush.xpose.msra.mxu0 0.0
    %2885 = vmatpush.xpose.msra.mxu0 0.0
    %2886 = vmatpush.xpose.msra.mxu0 %v491
    %2887 = vmatpush.xpose.msra.mxu0 %v487
    %2888 = vmatmul.f32.gmra.mxu0 %v2856
    %v2889 = vpop.f32.mrf.mxu0
    %v2890 = vadd.f32 1e-16, %v2889
    %2891 = vdwg.mxu0
    %2892 = vmatpush.xpose.msra.mxu0 0.0
    %2893 = vmatpush.xpose.msra.mxu0 0.0
    %2894 = vmatpush.xpose.msra.mxu0 0.0
    %2895 = vmatpush.xpose.msra.mxu0 0.0
    %2896 = vmatpush.xpose.msra.mxu0 0.0
    %2897 = vmatpush.xpose.msra.mxu0 0.0
    %2898 = vmatpush.xpose.msra.mxu0 0.0
    %2899 = vmatpush.xpose.msra.mxu0 0.0
    %2900 = vmatpush.xpose.msra.mxu0 0.0
    %2901 = vmatpush.xpose.msra.mxu0 0.0
    %2902 = vmatpush.xpose.msra.mxu0 0.0
    %2903 = vmatpush.xpose.msra.mxu0 0.0
    %2904 = vmatpush.xpose.msra.mxu0 0.0
    %2905 = vmatpush.xpose.msra.mxu0 0.0
    %2906 = vmatpush.xpose.msra.mxu0 %v493
    %2907 = vmatpush.xpose.msra.mxu0 %v489
    %2908 = vmatmul.f32.gmra.mxu0 %v2871
    %v2909 = vpop.f32.mrf.mxu0
    %v2910 = vadd.f32 %v2890, %v2909
    %2911 = vdwg.mxu0
    %v2912 = vrcp.pop %v2910
    %v2913 = vmul.f32 %v2910, %v2912
    %v2914 = vsub.f32 1.0, %v2913
    %v2915 = vmul.f32 %v2912, %v2914
    %v2916 = vadd.f32 %v2912, %v2915
    %vm2917 = vweird.f32 %v2910
    %vm2918 = vweird.f32 %v2912
    %vm2919 = vmor %vm2917, %vm2918
    %v2920 = vsel %vm2919, %v2912, %v2916
    %v2921 = vand.u32 2147483647, %v2910
    %vm2922 = vcmp.eq.f32.partialorder %v2921, 8.507059e+37
    %v2923 = vand.u32 %v2910, 2147483648
    %v2924 = vor.u32 1.1754944e-38, %v2923
    %v2925 = vsel %vm2922, %v2924, %v2920
    %v2926 = vmul.f32 0.0625, %v2925
    %v2928 = vsel %vm494, %v2926, 0
    %2930 = vmatpush.msra.mxu0 0.0
    %2931 = vmatpush.msra.mxu0 0.0
    %2932 = vmatpush.msra.mxu0 0.0
    %2933 = vmatpush.msra.mxu0 0.0
    %2934 = vmatpush.msra.mxu0 0.0
    %2935 = vmatpush.msra.mxu0 0.0
    %2936 = vmatpush.msra.mxu0 0.0
    %2937 = vmatpush.msra.mxu0 0.0
    %2938 = vmatpush.msra.mxu0 0.0
    %2939 = vmatpush.msra.mxu0 0.0
    %2940 = vmatpush.msra.mxu0 0.0
    %2941 = vmatpush.msra.mxu0 0.0
    %2942 = vmatpush.msra.mxu0 0.0
    %2943 = vmatpush.msra.mxu0 0.0
    %2944 = vmatpush.msra.mxu0 %v491
    %2945 = vmatpush.msra.mxu0 %v487
    %2946 = vmatmul.f32.gmra.mxu0 %v2928
    %v2947 = vpop.f32.mrf.mxu0
    %v2948 = vadd.f32 1e-16, %v2947
    %2949 = vdwg.mxu0
    %2950 = vmatpush.msra.mxu0 0.0
    %2951 = vmatpush.msra.mxu0 0.0
    %2952 = vmatpush.msra.mxu0 0.0
    %2953 = vmatpush.msra.mxu0 0.0
    %2954 = vmatpush.msra.mxu0 0.0
    %2955 = vmatpush.msra.mxu0 0.0
    %2956 = vmatpush.msra.mxu0 0.0
    %2957 = vmatpush.msra.mxu0 0.0
    %2958 = vmatpush.msra.mxu0 0.0
    %2959 = vmatpush.msra.mxu0 0.0
    %2960 = vmatpush.msra.mxu0 0.0
    %2961 = vmatpush.msra.mxu0 0.0
    %2962 = vmatpush.msra.mxu0 0.0
    %2963 = vmatpush.msra.mxu0 0.0
    %2964 = vmatpush.msra.mxu0 %v493
    %2965 = vmatpush.msra.mxu0 %v489
    %2966 = vmatmul.f32.gmra.mxu0 %v2928
    %v2967 = vpop.f32.mrf.mxu0
    %v2968 = vadd.f32 1e-16, %v2967
    %2969 = vdwg.mxu0
    %v2970 = vrcp.pop %v2948
    %v2971 = vmul.f32 %v2948, %v2970
    %v2972 = vsub.f32 1.0, %v2971
    %v2973 = vmul.f32 %v2970, %v2972
    %v2974 = vadd.f32 %v2970, %v2973
    %vm2975 = vweird.f32 %v2948
    %vm2976 = vweird.f32 %v2970
    %vm2977 = vmor %vm2975, %vm2976
    %v2978 = vsel %vm2977, %v2970, %v2974
    %v2979 = vand.u32 2147483647, %v2948
    %vm2980 = vcmp.eq.f32.partialorder %v2979, 8.507059e+37
    %v2981 = vand.u32 %v2948, 2147483648
    %v2982 = vor.u32 1.1754944e-38, %v2981
    %v2983 = vsel %vm2980, %v2982, %v2978
    %v2984 = vmul.f32 0.00390625, %v2983
    %v2985 = vrcp.pop %v2968
    %v2986 = vmul.f32 %v2968, %v2985
    %v2987 = vsub.f32 1.0, %v2986
    %v2988 = vmul.f32 %v2985, %v2987
    %v2989 = vadd.f32 %v2985, %v2988
    %vm2990 = vweird.f32 %v2968
    %vm2991 = vweird.f32 %v2985
    %vm2992 = vmor %vm2990, %vm2991
    %v2993 = vsel %vm2992, %v2985, %v2989
    %v2994 = vand.u32 2147483647, %v2968
    %vm2995 = vcmp.eq.f32.partialorder %v2994, 8.507059e+37
    %v2996 = vand.u32 %v2968, 2147483648
    %v2997 = vor.u32 1.1754944e-38, %v2996
    %v2998 = vsel %vm2995, %v2997, %v2993
    %v2999 = vmul.f32 0.00390625, %v2998
    %3000 = vmatpush.xpose.msra.mxu0 0.0
    %3001 = vmatpush.xpose.msra.mxu0 0.0
    %3002 = vmatpush.xpose.msra.mxu0 0.0
    %3003 = vmatpush.xpose.msra.mxu0 0.0
    %3004 = vmatpush.xpose.msra.mxu0 0.0
    %3005 = vmatpush.xpose.msra.mxu0 0.0
    %3006 = vmatpush.xpose.msra.mxu0 0.0
    %3007 = vmatpush.xpose.msra.mxu0 0.0
    %3008 = vmatpush.xpose.msra.mxu0 0.0
    %3009 = vmatpush.xpose.msra.mxu0 0.0
    %3010 = vmatpush.xpose.msra.mxu0 0.0
    %3011 = vmatpush.xpose.msra.mxu0 0.0
    %3012 = vmatpush.xpose.msra.mxu0 0.0
    %3013 = vmatpush.xpose.msra.mxu0 0.0
    %3014 = vmatpush.xpose.msra.mxu0 %v491
    %3015 = vmatpush.xpose.msra.mxu0 %v487
    %3016 = vmatmul.f32.gmra.mxu0 %v2984
    %v3017 = vpop.f32.mrf.mxu0
    %v3018 = vadd.f32 1e-16, %v3017
    %3019 = vdwg.mxu0
    %3020 = vmatpush.xpose.msra.mxu0 0.0
    %3021 = vmatpush.xpose.msra.mxu0 0.0
    %3022 = vmatpush.xpose.msra.mxu0 0.0
    %3023 = vmatpush.xpose.msra.mxu0 0.0
    %3024 = vmatpush.xpose.msra.mxu0 0.0
    %3025 = vmatpush.xpose.msra.mxu0 0.0
    %3026 = vmatpush.xpose.msra.mxu0 0.0
    %3027 = vmatpush.xpose.msra.mxu0 0.0
    %3028 = vmatpush.xpose.msra.mxu0 0.0
    %3029 = vmatpush.xpose.msra.mxu0 0.0
    %3030 = vmatpush.xpose.msra.mxu0 0.0
    %3031 = vmatpush.xpose.msra.mxu0 0.0
    %3032 = vmatpush.xpose.msra.mxu0 0.0
    %3033 = vmatpush.xpose.msra.mxu0 0.0
    %3034 = vmatpush.xpose.msra.mxu0 %v493
    %3035 = vmatpush.xpose.msra.mxu0 %v489
    %3036 = vmatmul.f32.gmra.mxu0 %v2999
    %v3037 = vpop.f32.mrf.mxu0
    %v3038 = vadd.f32 %v3018, %v3037
    %3039 = vdwg.mxu0
    %v3040 = vrcp.pop %v3038
    %v3041 = vmul.f32 %v3038, %v3040
    %v3042 = vsub.f32 1.0, %v3041
    %v3043 = vmul.f32 %v3040, %v3042
    %v3044 = vadd.f32 %v3040, %v3043
    %vm3045 = vweird.f32 %v3038
    %vm3046 = vweird.f32 %v3040
    %vm3047 = vmor %vm3045, %vm3046
    %v3048 = vsel %vm3047, %v3040, %v3044
    %v3049 = vand.u32 2147483647, %v3038
    %vm3050 = vcmp.eq.f32.partialorder %v3049, 8.507059e+37
    %v3051 = vand.u32 %v3038, 2147483648
    %v3052 = vor.u32 1.1754944e-38, %v3051
    %v3053 = vsel %vm3050, %v3052, %v3048
    %v3054 = vmul.f32 0.0625, %v3053
    %v3056 = vsel %vm494, %v3054, 0
    %3058 = vmatpush.msra.mxu0 0.0
    %3059 = vmatpush.msra.mxu0 0.0
    %3060 = vmatpush.msra.mxu0 0.0
    %3061 = vmatpush.msra.mxu0 0.0
    %3062 = vmatpush.msra.mxu0 0.0
    %3063 = vmatpush.msra.mxu0 0.0
    %3064 = vmatpush.msra.mxu0 0.0
    %3065 = vmatpush.msra.mxu0 0.0
    %3066 = vmatpush.msra.mxu0 0.0
    %3067 = vmatpush.msra.mxu0 0.0
    %3068 = vmatpush.msra.mxu0 0.0
    %3069 = vmatpush.msra.mxu0 0.0
    %3070 = vmatpush.msra.mxu0 0.0
    %3071 = vmatpush.msra.mxu0 0.0
    %3072 = vmatpush.msra.mxu0 %v491
    %3073 = vmatpush.msra.mxu0 %v487
    %3074 = vmatmul.f32.gmra.mxu0 %v3056
    %v3075 = vpop.f32.mrf.mxu0
    %v3076 = vadd.f32 1e-16, %v3075
    %3077 = vdwg.mxu0
    %3078 = vmatpush.msra.mxu0 0.0
    %3079 = vmatpush.msra.mxu0 0.0
    %3080 = vmatpush.msra.mxu0 0.0
    %3081 = vmatpush.msra.mxu0 0.0
    %3082 = vmatpush.msra.mxu0 0.0
    %3083 = vmatpush.msra.mxu0 0.0
    %3084 = vmatpush.msra.mxu0 0.0
    %3085 = vmatpush.msra.mxu0 0.0
    %3086 = vmatpush.msra.mxu0 0.0
    %3087 = vmatpush.msra.mxu0 0.0
    %3088 = vmatpush.msra.mxu0 0.0
    %3089 = vmatpush.msra.mxu0 0.0
    %3090 = vmatpush.msra.mxu0 0.0
    %3091 = vmatpush.msra.mxu0 0.0
    %3092 = vmatpush.msra.mxu0 %v493
    %3093 = vmatpush.msra.mxu0 %v489
    %3094 = vmatmul.f32.gmra.mxu0 %v3056
    %v3095 = vpop.f32.mrf.mxu0
    %v3096 = vadd.f32 1e-16, %v3095
    %3097 = vdwg.mxu0
    %v3098 = vrcp.pop %v3076
    %v3099 = vmul.f32 %v3076, %v3098
    %v3100 = vsub.f32 1.0, %v3099
    %v3101 = vmul.f32 %v3098, %v3100
    %v3102 = vadd.f32 %v3098, %v3101
    %vm3103 = vweird.f32 %v3076
    %vm3104 = vweird.f32 %v3098
    %vm3105 = vmor %vm3103, %vm3104
    %v3106 = vsel %vm3105, %v3098, %v3102
    %v3107 = vand.u32 2147483647, %v3076
    %vm3108 = vcmp.eq.f32.partialorder %v3107, 8.507059e+37
    %v3109 = vand.u32 %v3076, 2147483648
    %v3110 = vor.u32 1.1754944e-38, %v3109
    %v3111 = vsel %vm3108, %v3110, %v3106
    %v3112 = vmul.f32 0.00390625, %v3111
    %v3113 = vrcp.pop %v3096
    %v3114 = vmul.f32 %v3096, %v3113
    %v3115 = vsub.f32 1.0, %v3114
    %v3116 = vmul.f32 %v3113, %v3115
    %v3117 = vadd.f32 %v3113, %v3116
    %vm3118 = vweird.f32 %v3096
    %vm3119 = vweird.f32 %v3113
    %vm3120 = vmor %vm3118, %vm3119
    %v3121 = vsel %vm3120, %v3113, %v3117
    %v3122 = vand.u32 2147483647, %v3096
    %vm3123 = vcmp.eq.f32.partialorder %v3122, 8.507059e+37
    %v3124 = vand.u32 %v3096, 2147483648
    %v3125 = vor.u32 1.1754944e-38, %v3124
    %v3126 = vsel %vm3123, %v3125, %v3121
    %v3127 = vmul.f32 0.00390625, %v3126
    %3128 = vmatpush.xpose.msra.mxu0 0.0
    %3129 = vmatpush.xpose.msra.mxu0 0.0
    %3130 = vmatpush.xpose.msra.mxu0 0.0
    %3131 = vmatpush.xpose.msra.mxu0 0.0
    %3132 = vmatpush.xpose.msra.mxu0 0.0
    %3133 = vmatpush.xpose.msra.mxu0 0.0
    %3134 = vmatpush.xpose.msra.mxu0 0.0
    %3135 = vmatpush.xpose.msra.mxu0 0.0
    %3136 = vmatpush.xpose.msra.mxu0 0.0
    %3137 = vmatpush.xpose.msra.mxu0 0.0
    %3138 = vmatpush.xpose.msra.mxu0 0.0
    %3139 = vmatpush.xpose.msra.mxu0 0.0
    %3140 = vmatpush.xpose.msra.mxu0 0.0
    %3141 = vmatpush.xpose.msra.mxu0 0.0
    %3142 = vmatpush.xpose.msra.mxu0 %v491
    %3143 = vmatpush.xpose.msra.mxu0 %v487
    %3144 = vmatmul.f32.gmra.mxu0 %v3112
    %v3145 = vpop.f32.mrf.mxu0
    %v3146 = vadd.f32 1e-16, %v3145
    %3147 = vdwg.mxu0
    %3148 = vmatpush.xpose.msra.mxu0 0.0
    %3149 = vmatpush.xpose.msra.mxu0 0.0
    %3150 = vmatpush.xpose.msra.mxu0 0.0
    %3151 = vmatpush.xpose.msra.mxu0 0.0
    %3152 = vmatpush.xpose.msra.mxu0 0.0
    %3153 = vmatpush.xpose.msra.mxu0 0.0
    %3154 = vmatpush.xpose.msra.mxu0 0.0
    %3155 = vmatpush.xpose.msra.mxu0 0.0
    %3156 = vmatpush.xpose.msra.mxu0 0.0
    %3157 = vmatpush.xpose.msra.mxu0 0.0
    %3158 = vmatpush.xpose.msra.mxu0 0.0
    %3159 = vmatpush.xpose.msra.mxu0 0.0
    %3160 = vmatpush.xpose.msra.mxu0 0.0
    %3161 = vmatpush.xpose.msra.mxu0 0.0
    %3162 = vmatpush.xpose.msra.mxu0 %v493
    %3163 = vmatpush.xpose.msra.mxu0 %v489
    %3164 = vmatmul.f32.gmra.mxu0 %v3127
    %v3165 = vpop.f32.mrf.mxu0
    %v3166 = vadd.f32 %v3146, %v3165
    %3167 = vdwg.mxu0
    %v3168 = vrcp.pop %v3166
    %v3169 = vmul.f32 %v3166, %v3168
    %v3170 = vsub.f32 1.0, %v3169
    %v3171 = vmul.f32 %v3168, %v3170
    %v3172 = vadd.f32 %v3168, %v3171
    %vm3173 = vweird.f32 %v3166
    %vm3174 = vweird.f32 %v3168
    %vm3175 = vmor %vm3173, %vm3174
    %v3176 = vsel %vm3175, %v3168, %v3172
    %v3177 = vand.u32 2147483647, %v3166
    %vm3178 = vcmp.eq.f32.partialorder %v3177, 8.507059e+37
    %v3179 = vand.u32 %v3166, 2147483648
    %v3180 = vor.u32 1.1754944e-38, %v3179
    %v3181 = vsel %vm3178, %v3180, %v3176
    %v3182 = vmul.f32 0.0625, %v3181
    %v3184 = vsel %vm494, %v3182, 0
    %3186 = vmatpush.msra.mxu0 0.0
    %3187 = vmatpush.msra.mxu0 0.0
    %3188 = vmatpush.msra.mxu0 0.0
    %3189 = vmatpush.msra.mxu0 0.0
    %3190 = vmatpush.msra.mxu0 0.0
    %3191 = vmatpush.msra.mxu0 0.0
    %3192 = vmatpush.msra.mxu0 0.0
    %3193 = vmatpush.msra.mxu0 0.0
    %3194 = vmatpush.msra.mxu0 0.0
    %3195 = vmatpush.msra.mxu0 0.0
    %3196 = vmatpush.msra.mxu0 0.0
    %3197 = vmatpush.msra.mxu0 0.0
    %3198 = vmatpush.msra.mxu0 0.0
    %3199 = vmatpush.msra.mxu0 0.0
    %3200 = vmatpush.msra.mxu0 %v491
    %3201 = vmatpush.msra.mxu0 %v487
    %3202 = vmatmul.f32.gmra.mxu0 %v3184
    %v3203 = vpop.f32.mrf.mxu0
    %v3204 = vadd.f32 1e-16, %v3203
    %3205 = vdwg.mxu0
    %3206 = vmatpush.msra.mxu0 0.0
    %3207 = vmatpush.msra.mxu0 0.0
    %3208 = vmatpush.msra.mxu0 0.0
    %3209 = vmatpush.msra.mxu0 0.0
    %3210 = vmatpush.msra.mxu0 0.0
    %3211 = vmatpush.msra.mxu0 0.0
    %3212 = vmatpush.msra.mxu0 0.0
    %3213 = vmatpush.msra.mxu0 0.0
    %3214 = vmatpush.msra.mxu0 0.0
    %3215 = vmatpush.msra.mxu0 0.0
    %3216 = vmatpush.msra.mxu0 0.0
    %3217 = vmatpush.msra.mxu0 0.0
    %3218 = vmatpush.msra.mxu0 0.0
    %3219 = vmatpush.msra.mxu0 0.0
    %3220 = vmatpush.msra.mxu0 %v493
    %3221 = vmatpush.msra.mxu0 %v489
    %3222 = vmatmul.f32.gmra.mxu0 %v3184
    %v3223 = vpop.f32.mrf.mxu0
    %v3224 = vadd.f32 1e-16, %v3223
    %3225 = vdwg.mxu0
    %v3226 = vrcp.pop %v3204
    %v3227 = vmul.f32 %v3204, %v3226
    %v3228 = vsub.f32 1.0, %v3227
    %v3229 = vmul.f32 %v3226, %v3228
    %v3230 = vadd.f32 %v3226, %v3229
    %vm3231 = vweird.f32 %v3204
    %vm3232 = vweird.f32 %v3226
    %vm3233 = vmor %vm3231, %vm3232
    %v3234 = vsel %vm3233, %v3226, %v3230
    %v3235 = vand.u32 2147483647, %v3204
    %vm3236 = vcmp.eq.f32.partialorder %v3235, 8.507059e+37
    %v3237 = vand.u32 %v3204, 2147483648
    %v3238 = vor.u32 1.1754944e-38, %v3237
    %v3239 = vsel %vm3236, %v3238, %v3234
    %v3240 = vmul.f32 0.00390625, %v3239
    %v3241 = vrcp.pop %v3224
    %v3242 = vmul.f32 %v3224, %v3241
    %v3243 = vsub.f32 1.0, %v3242
    %v3244 = vmul.f32 %v3241, %v3243
    %v3245 = vadd.f32 %v3241, %v3244
    %vm3246 = vweird.f32 %v3224
    %vm3247 = vweird.f32 %v3241
    %vm3248 = vmor %vm3246, %vm3247
    %v3249 = vsel %vm3248, %v3241, %v3245
    %v3250 = vand.u32 2147483647, %v3224
    %vm3251 = vcmp.eq.f32.partialorder %v3250, 8.507059e+37
    %v3252 = vand.u32 %v3224, 2147483648
    %v3253 = vor.u32 1.1754944e-38, %v3252
    %v3254 = vsel %vm3251, %v3253, %v3249
    %v3255 = vmul.f32 0.00390625, %v3254
    %3256 = vmatpush.xpose.msra.mxu0 0.0
    %3257 = vmatpush.xpose.msra.mxu0 0.0
    %3258 = vmatpush.xpose.msra.mxu0 0.0
    %3259 = vmatpush.xpose.msra.mxu0 0.0
    %3260 = vmatpush.xpose.msra.mxu0 0.0
    %3261 = vmatpush.xpose.msra.mxu0 0.0
    %3262 = vmatpush.xpose.msra.mxu0 0.0
    %3263 = vmatpush.xpose.msra.mxu0 0.0
    %3264 = vmatpush.xpose.msra.mxu0 0.0
    %3265 = vmatpush.xpose.msra.mxu0 0.0
    %3266 = vmatpush.xpose.msra.mxu0 0.0
    %3267 = vmatpush.xpose.msra.mxu0 0.0
    %3268 = vmatpush.xpose.msra.mxu0 0.0
    %3269 = vmatpush.xpose.msra.mxu0 0.0
    %3270 = vmatpush.xpose.msra.mxu0 %v491
    %3271 = vmatpush.xpose.msra.mxu0 %v487
    %3272 = vmatmul.f32.gmra.mxu0 %v3240
    %v3273 = vpop.f32.mrf.mxu0
    %v3274 = vadd.f32 1e-16, %v3273
    %3275 = vdwg.mxu0
    %3276 = vmatpush.xpose.msra.mxu0 0.0
    %3277 = vmatpush.xpose.msra.mxu0 0.0
    %3278 = vmatpush.xpose.msra.mxu0 0.0
    %3279 = vmatpush.xpose.msra.mxu0 0.0
    %3280 = vmatpush.xpose.msra.mxu0 0.0
    %3281 = vmatpush.xpose.msra.mxu0 0.0
    %3282 = vmatpush.xpose.msra.mxu0 0.0
    %3283 = vmatpush.xpose.msra.mxu0 0.0
    %3284 = vmatpush.xpose.msra.mxu0 0.0
    %3285 = vmatpush.xpose.msra.mxu0 0.0
    %3286 = vmatpush.xpose.msra.mxu0 0.0
    %3287 = vmatpush.xpose.msra.mxu0 0.0
    %3288 = vmatpush.xpose.msra.mxu0 0.0
    %3289 = vmatpush.xpose.msra.mxu0 0.0
    %3290 = vmatpush.xpose.msra.mxu0 %v493
    %3291 = vmatpush.xpose.msra.mxu0 %v489
    %3292 = vmatmul.f32.gmra.mxu0 %v3255
    %v3293 = vpop.f32.mrf.mxu0
    %v3294 = vadd.f32 %v3274, %v3293
    %3295 = vdwg.mxu0
    %v3296 = vrcp.pop %v3294
    %v3297 = vmul.f32 %v3294, %v3296
    %v3298 = vsub.f32 1.0, %v3297
    %v3299 = vmul.f32 %v3296, %v3298
    %v3300 = vadd.f32 %v3296, %v3299
    %vm3301 = vweird.f32 %v3294
    %vm3302 = vweird.f32 %v3296
    %vm3303 = vmor %vm3301, %vm3302
    %v3304 = vsel %vm3303, %v3296, %v3300
    %v3305 = vand.u32 2147483647, %v3294
    %vm3306 = vcmp.eq.f32.partialorder %v3305, 8.507059e+37
    %v3307 = vand.u32 %v3294, 2147483648
    %v3308 = vor.u32 1.1754944e-38, %v3307
    %v3309 = vsel %vm3306, %v3308, %v3304
    %v3310 = vmul.f32 0.0625, %v3309
    %v3312 = vsel %vm494, %v3310, 0
    %3314 = vmatpush.msra.mxu0 0.0
    %3315 = vmatpush.msra.mxu0 0.0
    %3316 = vmatpush.msra.mxu0 0.0
    %3317 = vmatpush.msra.mxu0 0.0
    %3318 = vmatpush.msra.mxu0 0.0
    %3319 = vmatpush.msra.mxu0 0.0
    %3320 = vmatpush.msra.mxu0 0.0
    %3321 = vmatpush.msra.mxu0 0.0
    %3322 = vmatpush.msra.mxu0 0.0
    %3323 = vmatpush.msra.mxu0 0.0
    %3324 = vmatpush.msra.mxu0 0.0
    %3325 = vmatpush.msra.mxu0 0.0
    %3326 = vmatpush.msra.mxu0 0.0
    %3327 = vmatpush.msra.mxu0 0.0
    %3328 = vmatpush.msra.mxu0 %v491
    %3329 = vmatpush.msra.mxu0 %v487
    %3330 = vmatmul.f32.gmra.mxu0 %v3312
    %v3331 = vpop.f32.mrf.mxu0
    %v3332 = vadd.f32 1e-16, %v3331
    %3333 = vdwg.mxu0
    %3334 = vmatpush.msra.mxu0 0.0
    %3335 = vmatpush.msra.mxu0 0.0
    %3336 = vmatpush.msra.mxu0 0.0
    %3337 = vmatpush.msra.mxu0 0.0
    %3338 = vmatpush.msra.mxu0 0.0
    %3339 = vmatpush.msra.mxu0 0.0
    %3340 = vmatpush.msra.mxu0 0.0
    %3341 = vmatpush.msra.mxu0 0.0
    %3342 = vmatpush.msra.mxu0 0.0
    %3343 = vmatpush.msra.mxu0 0.0
    %3344 = vmatpush.msra.mxu0 0.0
    %3345 = vmatpush.msra.mxu0 0.0
    %3346 = vmatpush.msra.mxu0 0.0
    %3347 = vmatpush.msra.mxu0 0.0
    %3348 = vmatpush.msra.mxu0 %v493
    %3349 = vmatpush.msra.mxu0 %v489
    %3350 = vmatmul.f32.gmra.mxu0 %v3312
    %v3351 = vpop.f32.mrf.mxu0
    %v3352 = vadd.f32 1e-16, %v3351
    %3353 = vdwg.mxu0
    %v3354 = vrcp.pop %v3332
    %v3355 = vmul.f32 %v3332, %v3354
    %v3356 = vsub.f32 1.0, %v3355
    %v3357 = vmul.f32 %v3354, %v3356
    %v3358 = vadd.f32 %v3354, %v3357
    %vm3359 = vweird.f32 %v3332
    %vm3360 = vweird.f32 %v3354
    %vm3361 = vmor %vm3359, %vm3360
    %v3362 = vsel %vm3361, %v3354, %v3358
    %v3363 = vand.u32 2147483647, %v3332
    %vm3364 = vcmp.eq.f32.partialorder %v3363, 8.507059e+37
    %v3365 = vand.u32 %v3332, 2147483648
    %v3366 = vor.u32 1.1754944e-38, %v3365
    %v3367 = vsel %vm3364, %v3366, %v3362
    %v3368 = vmul.f32 0.00390625, %v3367
    %v3369 = vrcp.pop %v3352
    %v3370 = vmul.f32 %v3352, %v3369
    %v3371 = vsub.f32 1.0, %v3370
    %v3372 = vmul.f32 %v3369, %v3371
    %v3373 = vadd.f32 %v3369, %v3372
    %vm3374 = vweird.f32 %v3352
    %vm3375 = vweird.f32 %v3369
    %vm3376 = vmor %vm3374, %vm3375
    %v3377 = vsel %vm3376, %v3369, %v3373
    %v3378 = vand.u32 2147483647, %v3352
    %vm3379 = vcmp.eq.f32.partialorder %v3378, 8.507059e+37
    %v3380 = vand.u32 %v3352, 2147483648
    %v3381 = vor.u32 1.1754944e-38, %v3380
    %v3382 = vsel %vm3379, %v3381, %v3377
    %v3383 = vmul.f32 0.00390625, %v3382
    %3384 = vmatpush.xpose.msra.mxu0 0.0
    %3385 = vmatpush.xpose.msra.mxu0 0.0
    %3386 = vmatpush.xpose.msra.mxu0 0.0
    %3387 = vmatpush.xpose.msra.mxu0 0.0
    %3388 = vmatpush.xpose.msra.mxu0 0.0
    %3389 = vmatpush.xpose.msra.mxu0 0.0
    %3390 = vmatpush.xpose.msra.mxu0 0.0
    %3391 = vmatpush.xpose.msra.mxu0 0.0
    %3392 = vmatpush.xpose.msra.mxu0 0.0
    %3393 = vmatpush.xpose.msra.mxu0 0.0
    %3394 = vmatpush.xpose.msra.mxu0 0.0
    %3395 = vmatpush.xpose.msra.mxu0 0.0
    %3396 = vmatpush.xpose.msra.mxu0 0.0
    %3397 = vmatpush.xpose.msra.mxu0 0.0
    %3398 = vmatpush.xpose.msra.mxu0 %v491
    %3399 = vmatpush.xpose.msra.mxu0 %v487
    %3400 = vmatmul.f32.gmra.mxu0 %v3368
    %v3401 = vpop.f32.mrf.mxu0
    %v3402 = vadd.f32 1e-16, %v3401
    %3403 = vdwg.mxu0
    %3404 = vmatpush.xpose.msra.mxu0 0.0
    %3405 = vmatpush.xpose.msra.mxu0 0.0
    %3406 = vmatpush.xpose.msra.mxu0 0.0
    %3407 = vmatpush.xpose.msra.mxu0 0.0
    %3408 = vmatpush.xpose.msra.mxu0 0.0
    %3409 = vmatpush.xpose.msra.mxu0 0.0
    %3410 = vmatpush.xpose.msra.mxu0 0.0
    %3411 = vmatpush.xpose.msra.mxu0 0.0
    %3412 = vmatpush.xpose.msra.mxu0 0.0
    %3413 = vmatpush.xpose.msra.mxu0 0.0
    %3414 = vmatpush.xpose.msra.mxu0 0.0
    %3415 = vmatpush.xpose.msra.mxu0 0.0
    %3416 = vmatpush.xpose.msra.mxu0 0.0
    %3417 = vmatpush.xpose.msra.mxu0 0.0
    %3418 = vmatpush.xpose.msra.mxu0 %v493
    %3419 = vmatpush.xpose.msra.mxu0 %v489
    %3420 = vmatmul.f32.gmra.mxu0 %v3383
    %v3421 = vpop.f32.mrf.mxu0
    %v3422 = vadd.f32 %v3402, %v3421
    %3423 = vdwg.mxu0
    %v3424 = vrcp.pop %v3422
    %v3425 = vmul.f32 %v3422, %v3424
    %v3426 = vsub.f32 1.0, %v3425
    %v3427 = vmul.f32 %v3424, %v3426
    %v3428 = vadd.f32 %v3424, %v3427
    %vm3429 = vweird.f32 %v3422
    %vm3430 = vweird.f32 %v3424
    %vm3431 = vmor %vm3429, %vm3430
    %v3432 = vsel %vm3431, %v3424, %v3428
    %v3433 = vand.u32 2147483647, %v3422
    %vm3434 = vcmp.eq.f32.partialorder %v3433, 8.507059e+37
    %v3435 = vand.u32 %v3422, 2147483648
    %v3436 = vor.u32 1.1754944e-38, %v3435
    %v3437 = vsel %vm3434, %v3436, %v3432
    %v3438 = vmul.f32 0.0625, %v3437
    %v3440 = vsel %vm494, %v3438, 0
    %3442 = vmatpush.msra.mxu0 0.0
    %3443 = vmatpush.msra.mxu0 0.0
    %3444 = vmatpush.msra.mxu0 0.0
    %3445 = vmatpush.msra.mxu0 0.0
    %3446 = vmatpush.msra.mxu0 0.0
    %3447 = vmatpush.msra.mxu0 0.0
    %3448 = vmatpush.msra.mxu0 0.0
    %3449 = vmatpush.msra.mxu0 0.0
    %3450 = vmatpush.msra.mxu0 0.0
    %3451 = vmatpush.msra.mxu0 0.0
    %3452 = vmatpush.msra.mxu0 0.0
    %3453 = vmatpush.msra.mxu0 0.0
    %3454 = vmatpush.msra.mxu0 0.0
    %3455 = vmatpush.msra.mxu0 0.0
    %3456 = vmatpush.msra.mxu0 %v491
    %3457 = vmatpush.msra.mxu0 %v487
    %3458 = vmatmul.f32.gmra.mxu0 %v3440
    %v3459 = vpop.f32.mrf.mxu0
    %v3460 = vadd.f32 1e-16, %v3459
    %3461 = vdwg.mxu0
    %3462 = vmatpush.msra.mxu0 0.0
    %3463 = vmatpush.msra.mxu0 0.0
    %3464 = vmatpush.msra.mxu0 0.0
    %3465 = vmatpush.msra.mxu0 0.0
    %3466 = vmatpush.msra.mxu0 0.0
    %3467 = vmatpush.msra.mxu0 0.0
    %3468 = vmatpush.msra.mxu0 0.0
    %3469 = vmatpush.msra.mxu0 0.0
    %3470 = vmatpush.msra.mxu0 0.0
    %3471 = vmatpush.msra.mxu0 0.0
    %3472 = vmatpush.msra.mxu0 0.0
    %3473 = vmatpush.msra.mxu0 0.0
    %3474 = vmatpush.msra.mxu0 0.0
    %3475 = vmatpush.msra.mxu0 0.0
    %3476 = vmatpush.msra.mxu0 %v493
    %3477 = vmatpush.msra.mxu0 %v489
    %3478 = vmatmul.f32.gmra.mxu0 %v3440
    %v3479 = vpop.f32.mrf.mxu0
    %v3480 = vadd.f32 1e-16, %v3479
    %3481 = vdwg.mxu0
    %v3482 = vrcp.pop %v3460
    %v3483 = vmul.f32 %v3460, %v3482
    %v3484 = vsub.f32 1.0, %v3483
    %v3485 = vmul.f32 %v3482, %v3484
    %v3486 = vadd.f32 %v3482, %v3485
    %vm3487 = vweird.f32 %v3460
    %vm3488 = vweird.f32 %v3482
    %vm3489 = vmor %vm3487, %vm3488
    %v3490 = vsel %vm3489, %v3482, %v3486
    %v3491 = vand.u32 2147483647, %v3460
    %vm3492 = vcmp.eq.f32.partialorder %v3491, 8.507059e+37
    %v3493 = vand.u32 %v3460, 2147483648
    %v3494 = vor.u32 1.1754944e-38, %v3493
    %v3495 = vsel %vm3492, %v3494, %v3490
    %v3496 = vmul.f32 0.00390625, %v3495
    %v3497 = vrcp.pop %v3480
    %v3498 = vmul.f32 %v3480, %v3497
    %v3499 = vsub.f32 1.0, %v3498
    %v3500 = vmul.f32 %v3497, %v3499
    %v3501 = vadd.f32 %v3497, %v3500
    %vm3502 = vweird.f32 %v3480
    %vm3503 = vweird.f32 %v3497
    %vm3504 = vmor %vm3502, %vm3503
    %v3505 = vsel %vm3504, %v3497, %v3501
    %v3506 = vand.u32 2147483647, %v3480
    %vm3507 = vcmp.eq.f32.partialorder %v3506, 8.507059e+37
    %v3508 = vand.u32 %v3480, 2147483648
    %v3509 = vor.u32 1.1754944e-38, %v3508
    %v3510 = vsel %vm3507, %v3509, %v3505
    %v3511 = vmul.f32 0.00390625, %v3510
    %3512 = vmatpush.xpose.msra.mxu0 0.0
    %3513 = vmatpush.xpose.msra.mxu0 0.0
    %3514 = vmatpush.xpose.msra.mxu0 0.0
    %3515 = vmatpush.xpose.msra.mxu0 0.0
    %3516 = vmatpush.xpose.msra.mxu0 0.0
    %3517 = vmatpush.xpose.msra.mxu0 0.0
    %3518 = vmatpush.xpose.msra.mxu0 0.0
    %3519 = vmatpush.xpose.msra.mxu0 0.0
    %3520 = vmatpush.xpose.msra.mxu0 0.0
    %3521 = vmatpush.xpose.msra.mxu0 0.0
    %3522 = vmatpush.xpose.msra.mxu0 0.0
    %3523 = vmatpush.xpose.msra.mxu0 0.0
    %3524 = vmatpush.xpose.msra.mxu0 0.0
    %3525 = vmatpush.xpose.msra.mxu0 0.0
    %3526 = vmatpush.xpose.msra.mxu0 %v491
    %3527 = vmatpush.xpose.msra.mxu0 %v487
    %3528 = vmatmul.f32.gmra.mxu0 %v3496
    %v3529 = vpop.f32.mrf.mxu0
    %v3530 = vadd.f32 1e-16, %v3529
    %3531 = vdwg.mxu0
    %3532 = vmatpush.xpose.msra.mxu0 0.0
    %3533 = vmatpush.xpose.msra.mxu0 0.0
    %3534 = vmatpush.xpose.msra.mxu0 0.0
    %3535 = vmatpush.xpose.msra.mxu0 0.0
    %3536 = vmatpush.xpose.msra.mxu0 0.0
    %3537 = vmatpush.xpose.msra.mxu0 0.0
    %3538 = vmatpush.xpose.msra.mxu0 0.0
    %3539 = vmatpush.xpose.msra.mxu0 0.0
    %3540 = vmatpush.xpose.msra.mxu0 0.0
    %3541 = vmatpush.xpose.msra.mxu0 0.0
    %3542 = vmatpush.xpose.msra.mxu0 0.0
    %3543 = vmatpush.xpose.msra.mxu0 0.0
    %3544 = vmatpush.xpose.msra.mxu0 0.0
    %3545 = vmatpush.xpose.msra.mxu0 0.0
    %3546 = vmatpush.xpose.msra.mxu0 %v493
    %3547 = vmatpush.xpose.msra.mxu0 %v489
    %3548 = vmatmul.f32.gmra.mxu0 %v3511
    %v3549 = vpop.f32.mrf.mxu0
    %v3550 = vadd.f32 %v3530, %v3549
    %3551 = vdwg.mxu0
    %v3552 = vrcp.pop %v3550
    %v3553 = vmul.f32 %v3550, %v3552
    %v3554 = vsub.f32 1.0, %v3553
    %v3555 = vmul.f32 %v3552, %v3554
    %v3556 = vadd.f32 %v3552, %v3555
    %vm3557 = vweird.f32 %v3550
    %vm3558 = vweird.f32 %v3552
    %vm3559 = vmor %vm3557, %vm3558
    %v3560 = vsel %vm3559, %v3552, %v3556
    %v3561 = vand.u32 2147483647, %v3550
    %vm3562 = vcmp.eq.f32.partialorder %v3561, 8.507059e+37
    %v3563 = vand.u32 %v3550, 2147483648
    %v3564 = vor.u32 1.1754944e-38, %v3563
    %v3565 = vsel %vm3562, %v3564, %v3560
    %v3566 = vmul.f32 0.0625, %v3565
    %v3568 = vsel %vm494, %v3566, 0
    %3570 = vmatpush.msra.mxu0 0.0
    %3571 = vmatpush.msra.mxu0 0.0
    %3572 = vmatpush.msra.mxu0 0.0
    %3573 = vmatpush.msra.mxu0 0.0
    %3574 = vmatpush.msra.mxu0 0.0
    %3575 = vmatpush.msra.mxu0 0.0
    %3576 = vmatpush.msra.mxu0 0.0
    %3577 = vmatpush.msra.mxu0 0.0
    %3578 = vmatpush.msra.mxu0 0.0
    %3579 = vmatpush.msra.mxu0 0.0
    %3580 = vmatpush.msra.mxu0 0.0
    %3581 = vmatpush.msra.mxu0 0.0
    %3582 = vmatpush.msra.mxu0 0.0
    %3583 = vmatpush.msra.mxu0 0.0
    %3584 = vmatpush.msra.mxu0 %v491
    %3585 = vmatpush.msra.mxu0 %v487
    %3586 = vmatmul.f32.gmra.mxu0 %v3568
    %v3587 = vpop.f32.mrf.mxu0
    %v3588 = vadd.f32 1e-16, %v3587
    %3589 = vdwg.mxu0
    %3590 = vmatpush.msra.mxu0 0.0
    %3591 = vmatpush.msra.mxu0 0.0
    %3592 = vmatpush.msra.mxu0 0.0
    %3593 = vmatpush.msra.mxu0 0.0
    %3594 = vmatpush.msra.mxu0 0.0
    %3595 = vmatpush.msra.mxu0 0.0
    %3596 = vmatpush.msra.mxu0 0.0
    %3597 = vmatpush.msra.mxu0 0.0
    %3598 = vmatpush.msra.mxu0 0.0
    %3599 = vmatpush.msra.mxu0 0.0
    %3600 = vmatpush.msra.mxu0 0.0
    %3601 = vmatpush.msra.mxu0 0.0
    %3602 = vmatpush.msra.mxu0 0.0
    %3603 = vmatpush.msra.mxu0 0.0
    %3604 = vmatpush.msra.mxu0 %v493
    %3605 = vmatpush.msra.mxu0 %v489
    %3606 = vmatmul.f32.gmra.mxu0 %v3568
    %v3607 = vpop.f32.mrf.mxu0
    %v3608 = vadd.f32 1e-16, %v3607
    %3609 = vdwg.mxu0
    %v3610 = vrcp.pop %v3588
    %v3611 = vmul.f32 %v3588, %v3610
    %v3612 = vsub.f32 1.0, %v3611
    %v3613 = vmul.f32 %v3610, %v3612
    %v3614 = vadd.f32 %v3610, %v3613
    %vm3615 = vweird.f32 %v3588
    %vm3616 = vweird.f32 %v3610
    %vm3617 = vmor %vm3615, %vm3616
    %v3618 = vsel %vm3617, %v3610, %v3614
    %v3619 = vand.u32 2147483647, %v3588
    %vm3620 = vcmp.eq.f32.partialorder %v3619, 8.507059e+37
    %v3621 = vand.u32 %v3588, 2147483648
    %v3622 = vor.u32 1.1754944e-38, %v3621
    %v3623 = vsel %vm3620, %v3622, %v3618
    %v3624 = vmul.f32 0.00390625, %v3623
    %v3625 = vrcp.pop %v3608
    %v3626 = vmul.f32 %v3608, %v3625
    %v3627 = vsub.f32 1.0, %v3626
    %v3628 = vmul.f32 %v3625, %v3627
    %v3629 = vadd.f32 %v3625, %v3628
    %vm3630 = vweird.f32 %v3608
    %vm3631 = vweird.f32 %v3625
    %vm3632 = vmor %vm3630, %vm3631
    %v3633 = vsel %vm3632, %v3625, %v3629
    %v3634 = vand.u32 2147483647, %v3608
    %vm3635 = vcmp.eq.f32.partialorder %v3634, 8.507059e+37
    %v3636 = vand.u32 %v3608, 2147483648
    %v3637 = vor.u32 1.1754944e-38, %v3636
    %v3638 = vsel %vm3635, %v3637, %v3633
    %v3639 = vmul.f32 0.00390625, %v3638
    %3640 = vmatpush.xpose.msra.mxu0 0.0
    %3641 = vmatpush.xpose.msra.mxu0 0.0
    %3642 = vmatpush.xpose.msra.mxu0 0.0
    %3643 = vmatpush.xpose.msra.mxu0 0.0
    %3644 = vmatpush.xpose.msra.mxu0 0.0
    %3645 = vmatpush.xpose.msra.mxu0 0.0
    %3646 = vmatpush.xpose.msra.mxu0 0.0
    %3647 = vmatpush.xpose.msra.mxu0 0.0
    %3648 = vmatpush.xpose.msra.mxu0 0.0
    %3649 = vmatpush.xpose.msra.mxu0 0.0
    %3650 = vmatpush.xpose.msra.mxu0 0.0
    %3651 = vmatpush.xpose.msra.mxu0 0.0
    %3652 = vmatpush.xpose.msra.mxu0 0.0
    %3653 = vmatpush.xpose.msra.mxu0 0.0
    %3654 = vmatpush.xpose.msra.mxu0 %v491
    %3655 = vmatpush.xpose.msra.mxu0 %v487
    %3656 = vmatmul.f32.gmra.mxu0 %v3624
    %v3657 = vpop.f32.mrf.mxu0
    %v3658 = vadd.f32 1e-16, %v3657
    %3659 = vdwg.mxu0
    %3660 = vmatpush.xpose.msra.mxu0 0.0
    %3661 = vmatpush.xpose.msra.mxu0 0.0
    %3662 = vmatpush.xpose.msra.mxu0 0.0
    %3663 = vmatpush.xpose.msra.mxu0 0.0
    %3664 = vmatpush.xpose.msra.mxu0 0.0
    %3665 = vmatpush.xpose.msra.mxu0 0.0
    %3666 = vmatpush.xpose.msra.mxu0 0.0
    %3667 = vmatpush.xpose.msra.mxu0 0.0
    %3668 = vmatpush.xpose.msra.mxu0 0.0
    %3669 = vmatpush.xpose.msra.mxu0 0.0
    %3670 = vmatpush.xpose.msra.mxu0 0.0
    %3671 = vmatpush.xpose.msra.mxu0 0.0
    %3672 = vmatpush.xpose.msra.mxu0 0.0
    %3673 = vmatpush.xpose.msra.mxu0 0.0
    %3674 = vmatpush.xpose.msra.mxu0 %v493
    %3675 = vmatpush.xpose.msra.mxu0 %v489
    %3676 = vmatmul.f32.gmra.mxu0 %v3639
    %v3677 = vpop.f32.mrf.mxu0
    %v3678 = vadd.f32 %v3658, %v3677
    %3679 = vdwg.mxu0
    %v3680 = vrcp.pop %v3678
    %v3681 = vmul.f32 %v3678, %v3680
    %v3682 = vsub.f32 1.0, %v3681
    %v3683 = vmul.f32 %v3680, %v3682
    %v3684 = vadd.f32 %v3680, %v3683
    %vm3685 = vweird.f32 %v3678
    %vm3686 = vweird.f32 %v3680
    %vm3687 = vmor %vm3685, %vm3686
    %v3688 = vsel %vm3687, %v3680, %v3684
    %v3689 = vand.u32 2147483647, %v3678
    %vm3690 = vcmp.eq.f32.partialorder %v3689, 8.507059e+37
    %v3691 = vand.u32 %v3678, 2147483648
    %v3692 = vor.u32 1.1754944e-38, %v3691
    %v3693 = vsel %vm3690, %v3692, %v3688
    %v3694 = vmul.f32 0.0625, %v3693
    %v3696 = vsel %vm494, %v3694, 0
    %3698 = vmatpush.msra.mxu0 0.0
    %3699 = vmatpush.msra.mxu0 0.0
    %3700 = vmatpush.msra.mxu0 0.0
    %3701 = vmatpush.msra.mxu0 0.0
    %3702 = vmatpush.msra.mxu0 0.0
    %3703 = vmatpush.msra.mxu0 0.0
    %3704 = vmatpush.msra.mxu0 0.0
    %3705 = vmatpush.msra.mxu0 0.0
    %3706 = vmatpush.msra.mxu0 0.0
    %3707 = vmatpush.msra.mxu0 0.0
    %3708 = vmatpush.msra.mxu0 0.0
    %3709 = vmatpush.msra.mxu0 0.0
    %3710 = vmatpush.msra.mxu0 0.0
    %3711 = vmatpush.msra.mxu0 0.0
    %3712 = vmatpush.msra.mxu0 %v491
    %3713 = vmatpush.msra.mxu0 %v487
    %3714 = vmatmul.f32.gmra.mxu0 %v3696
    %v3715 = vpop.f32.mrf.mxu0
    %v3716 = vadd.f32 1e-16, %v3715
    %3717 = vdwg.mxu0
    %3718 = vmatpush.msra.mxu0 0.0
    %3719 = vmatpush.msra.mxu0 0.0
    %3720 = vmatpush.msra.mxu0 0.0
    %3721 = vmatpush.msra.mxu0 0.0
    %3722 = vmatpush.msra.mxu0 0.0
    %3723 = vmatpush.msra.mxu0 0.0
    %3724 = vmatpush.msra.mxu0 0.0
    %3725 = vmatpush.msra.mxu0 0.0
    %3726 = vmatpush.msra.mxu0 0.0
    %3727 = vmatpush.msra.mxu0 0.0
    %3728 = vmatpush.msra.mxu0 0.0
    %3729 = vmatpush.msra.mxu0 0.0
    %3730 = vmatpush.msra.mxu0 0.0
    %3731 = vmatpush.msra.mxu0 0.0
    %3732 = vmatpush.msra.mxu0 %v493
    %3733 = vmatpush.msra.mxu0 %v489
    %3734 = vmatmul.f32.gmra.mxu0 %v3696
    %v3735 = vpop.f32.mrf.mxu0
    %v3736 = vadd.f32 1e-16, %v3735
    %3737 = vdwg.mxu0
    %v3738 = vrcp.pop %v3716
    %v3739 = vmul.f32 %v3716, %v3738
    %v3740 = vsub.f32 1.0, %v3739
    %v3741 = vmul.f32 %v3738, %v3740
    %v3742 = vadd.f32 %v3738, %v3741
    %vm3743 = vweird.f32 %v3716
    %vm3744 = vweird.f32 %v3738
    %vm3745 = vmor %vm3743, %vm3744
    %v3746 = vsel %vm3745, %v3738, %v3742
    %v3747 = vand.u32 2147483647, %v3716
    %vm3748 = vcmp.eq.f32.partialorder %v3747, 8.507059e+37
    %v3749 = vand.u32 %v3716, 2147483648
    %v3750 = vor.u32 1.1754944e-38, %v3749
    %v3751 = vsel %vm3748, %v3750, %v3746
    %v3752 = vmul.f32 0.00390625, %v3751
    %v3753 = vrcp.pop %v3736
    %v3754 = vmul.f32 %v3736, %v3753
    %v3755 = vsub.f32 1.0, %v3754
    %v3756 = vmul.f32 %v3753, %v3755
    %v3757 = vadd.f32 %v3753, %v3756
    %vm3758 = vweird.f32 %v3736
    %vm3759 = vweird.f32 %v3753
    %vm3760 = vmor %vm3758, %vm3759
    %v3761 = vsel %vm3760, %v3753, %v3757
    %v3762 = vand.u32 2147483647, %v3736
    %vm3763 = vcmp.eq.f32.partialorder %v3762, 8.507059e+37
    %v3764 = vand.u32 %v3736, 2147483648
    %v3765 = vor.u32 1.1754944e-38, %v3764
    %v3766 = vsel %vm3763, %v3765, %v3761
    %v3767 = vmul.f32 0.00390625, %v3766
    %3768 = vmatpush.xpose.msra.mxu0 0.0
    %3769 = vmatpush.xpose.msra.mxu0 0.0
    %3770 = vmatpush.xpose.msra.mxu0 0.0
    %3771 = vmatpush.xpose.msra.mxu0 0.0
    %3772 = vmatpush.xpose.msra.mxu0 0.0
    %3773 = vmatpush.xpose.msra.mxu0 0.0
    %3774 = vmatpush.xpose.msra.mxu0 0.0
    %3775 = vmatpush.xpose.msra.mxu0 0.0
    %3776 = vmatpush.xpose.msra.mxu0 0.0
    %3777 = vmatpush.xpose.msra.mxu0 0.0
    %3778 = vmatpush.xpose.msra.mxu0 0.0
    %3779 = vmatpush.xpose.msra.mxu0 0.0
    %3780 = vmatpush.xpose.msra.mxu0 0.0
    %3781 = vmatpush.xpose.msra.mxu0 0.0
    %3782 = vmatpush.xpose.msra.mxu0 %v491
    %3783 = vmatpush.xpose.msra.mxu0 %v487
    %3784 = vmatmul.f32.gmra.mxu0 %v3752
    %v3785 = vpop.f32.mrf.mxu0
    %v3786 = vadd.f32 1e-16, %v3785
    %3787 = vdwg.mxu0
    %3788 = vmatpush.xpose.msra.mxu0 0.0
    %3789 = vmatpush.xpose.msra.mxu0 0.0
    %3790 = vmatpush.xpose.msra.mxu0 0.0
    %3791 = vmatpush.xpose.msra.mxu0 0.0
    %3792 = vmatpush.xpose.msra.mxu0 0.0
    %3793 = vmatpush.xpose.msra.mxu0 0.0
    %3794 = vmatpush.xpose.msra.mxu0 0.0
    %3795 = vmatpush.xpose.msra.mxu0 0.0
    %3796 = vmatpush.xpose.msra.mxu0 0.0
    %3797 = vmatpush.xpose.msra.mxu0 0.0
    %3798 = vmatpush.xpose.msra.mxu0 0.0
    %3799 = vmatpush.xpose.msra.mxu0 0.0
    %3800 = vmatpush.xpose.msra.mxu0 0.0
    %3801 = vmatpush.xpose.msra.mxu0 0.0
    %3802 = vmatpush.xpose.msra.mxu0 %v493
    %3803 = vmatpush.xpose.msra.mxu0 %v489
    %3804 = vmatmul.f32.gmra.mxu0 %v3767
    %v3805 = vpop.f32.mrf.mxu0
    %v3806 = vadd.f32 %v3786, %v3805
    %3807 = vdwg.mxu0
    %v3808 = vrcp.pop %v3806
    %v3809 = vmul.f32 %v3806, %v3808
    %v3810 = vsub.f32 1.0, %v3809
    %v3811 = vmul.f32 %v3808, %v3810
    %v3812 = vadd.f32 %v3808, %v3811
    %vm3813 = vweird.f32 %v3806
    %vm3814 = vweird.f32 %v3808
    %vm3815 = vmor %vm3813, %vm3814
    %v3816 = vsel %vm3815, %v3808, %v3812
    %v3817 = vand.u32 2147483647, %v3806
    %vm3818 = vcmp.eq.f32.partialorder %v3817, 8.507059e+37
    %v3819 = vand.u32 %v3806, 2147483648
    %v3820 = vor.u32 1.1754944e-38, %v3819
    %v3821 = vsel %vm3818, %v3820, %v3816
    %v3822 = vmul.f32 0.0625, %v3821
    %v3824 = vsel %vm494, %v3822, 0
    %3826 = vmatpush.msra.mxu0 0.0
    %3827 = vmatpush.msra.mxu0 0.0
    %3828 = vmatpush.msra.mxu0 0.0
    %3829 = vmatpush.msra.mxu0 0.0
    %3830 = vmatpush.msra.mxu0 0.0
    %3831 = vmatpush.msra.mxu0 0.0
    %3832 = vmatpush.msra.mxu0 0.0
    %3833 = vmatpush.msra.mxu0 0.0
    %3834 = vmatpush.msra.mxu0 0.0
    %3835 = vmatpush.msra.mxu0 0.0
    %3836 = vmatpush.msra.mxu0 0.0
    %3837 = vmatpush.msra.mxu0 0.0
    %3838 = vmatpush.msra.mxu0 0.0
    %3839 = vmatpush.msra.mxu0 0.0
    %3840 = vmatpush.msra.mxu0 %v491
    %3841 = vmatpush.msra.mxu0 %v487
    %3842 = vmatmul.f32.gmra.mxu0 %v3824
    %v3843 = vpop.f32.mrf.mxu0
    %v3844 = vadd.f32 1e-16, %v3843
    %3845 = vdwg.mxu0
    %3846 = vmatpush.msra.mxu0 0.0
    %3847 = vmatpush.msra.mxu0 0.0
    %3848 = vmatpush.msra.mxu0 0.0
    %3849 = vmatpush.msra.mxu0 0.0
    %3850 = vmatpush.msra.mxu0 0.0
    %3851 = vmatpush.msra.mxu0 0.0
    %3852 = vmatpush.msra.mxu0 0.0
    %3853 = vmatpush.msra.mxu0 0.0
    %3854 = vmatpush.msra.mxu0 0.0
    %3855 = vmatpush.msra.mxu0 0.0
    %3856 = vmatpush.msra.mxu0 0.0
    %3857 = vmatpush.msra.mxu0 0.0
    %3858 = vmatpush.msra.mxu0 0.0
    %3859 = vmatpush.msra.mxu0 0.0
    %3860 = vmatpush.msra.mxu0 %v493
    %3861 = vmatpush.msra.mxu0 %v489
    %3862 = vmatmul.f32.gmra.mxu0 %v3824
    %v3863 = vpop.f32.mrf.mxu0
    %v3864 = vadd.f32 1e-16, %v3863
    %3865 = vdwg.mxu0
    %v3866 = vrcp.pop %v3844
    %v3867 = vmul.f32 %v3844, %v3866
    %v3868 = vsub.f32 1.0, %v3867
    %v3869 = vmul.f32 %v3866, %v3868
    %v3870 = vadd.f32 %v3866, %v3869
    %vm3871 = vweird.f32 %v3844
    %vm3872 = vweird.f32 %v3866
    %vm3873 = vmor %vm3871, %vm3872
    %v3874 = vsel %vm3873, %v3866, %v3870
    %v3875 = vand.u32 2147483647, %v3844
    %vm3876 = vcmp.eq.f32.partialorder %v3875, 8.507059e+37
    %v3877 = vand.u32 %v3844, 2147483648
    %v3878 = vor.u32 1.1754944e-38, %v3877
    %v3879 = vsel %vm3876, %v3878, %v3874
    %v3880 = vmul.f32 0.00390625, %v3879
    %v3881 = vrcp.pop %v3864
    %v3882 = vmul.f32 %v3864, %v3881
    %v3883 = vsub.f32 1.0, %v3882
    %v3884 = vmul.f32 %v3881, %v3883
    %v3885 = vadd.f32 %v3881, %v3884
    %vm3886 = vweird.f32 %v3864
    %vm3887 = vweird.f32 %v3881
    %vm3888 = vmor %vm3886, %vm3887
    %v3889 = vsel %vm3888, %v3881, %v3885
    %v3890 = vand.u32 2147483647, %v3864
    %vm3891 = vcmp.eq.f32.partialorder %v3890, 8.507059e+37
    %v3892 = vand.u32 %v3864, 2147483648
    %v3893 = vor.u32 1.1754944e-38, %v3892
    %v3894 = vsel %vm3891, %v3893, %v3889
    %v3895 = vmul.f32 0.00390625, %v3894
    %3896 = vmatpush.xpose.msra.mxu0 0.0
    %3897 = vmatpush.xpose.msra.mxu0 0.0
    %3898 = vmatpush.xpose.msra.mxu0 0.0
    %3899 = vmatpush.xpose.msra.mxu0 0.0
    %3900 = vmatpush.xpose.msra.mxu0 0.0
    %3901 = vmatpush.xpose.msra.mxu0 0.0
    %3902 = vmatpush.xpose.msra.mxu0 0.0
    %3903 = vmatpush.xpose.msra.mxu0 0.0
    %3904 = vmatpush.xpose.msra.mxu0 0.0
    %3905 = vmatpush.xpose.msra.mxu0 0.0
    %3906 = vmatpush.xpose.msra.mxu0 0.0
    %3907 = vmatpush.xpose.msra.mxu0 0.0
    %3908 = vmatpush.xpose.msra.mxu0 0.0
    %3909 = vmatpush.xpose.msra.mxu0 0.0
    %3910 = vmatpush.xpose.msra.mxu0 %v491
    %3911 = vmatpush.xpose.msra.mxu0 %v487
    %3912 = vmatmul.f32.gmra.mxu0 %v3880
    %v3913 = vpop.f32.mrf.mxu0
    %v3914 = vadd.f32 1e-16, %v3913
    %3915 = vdwg.mxu0
    %3916 = vmatpush.xpose.msra.mxu0 0.0
    %3917 = vmatpush.xpose.msra.mxu0 0.0
    %3918 = vmatpush.xpose.msra.mxu0 0.0
    %3919 = vmatpush.xpose.msra.mxu0 0.0
    %3920 = vmatpush.xpose.msra.mxu0 0.0
    %3921 = vmatpush.xpose.msra.mxu0 0.0
    %3922 = vmatpush.xpose.msra.mxu0 0.0
    %3923 = vmatpush.xpose.msra.mxu0 0.0
    %3924 = vmatpush.xpose.msra.mxu0 0.0
    %3925 = vmatpush.xpose.msra.mxu0 0.0
    %3926 = vmatpush.xpose.msra.mxu0 0.0
    %3927 = vmatpush.xpose.msra.mxu0 0.0
    %3928 = vmatpush.xpose.msra.mxu0 0.0
    %3929 = vmatpush.xpose.msra.mxu0 0.0
    %3930 = vmatpush.xpose.msra.mxu0 %v493
    %3931 = vmatpush.xpose.msra.mxu0 %v489
    %3932 = vmatmul.f32.gmra.mxu0 %v3895
    %v3933 = vpop.f32.mrf.mxu0
    %v3934 = vadd.f32 %v3914, %v3933
    %3935 = vdwg.mxu0
    %v3936 = vrcp.pop %v3934
    %v3937 = vmul.f32 %v3934, %v3936
    %v3938 = vsub.f32 1.0, %v3937
    %v3939 = vmul.f32 %v3936, %v3938
    %v3940 = vadd.f32 %v3936, %v3939
    %vm3941 = vweird.f32 %v3934
    %vm3942 = vweird.f32 %v3936
    %vm3943 = vmor %vm3941, %vm3942
    %v3944 = vsel %vm3943, %v3936, %v3940
    %v3945 = vand.u32 2147483647, %v3934
    %vm3946 = vcmp.eq.f32.partialorder %v3945, 8.507059e+37
    %v3947 = vand.u32 %v3934, 2147483648
    %v3948 = vor.u32 1.1754944e-38, %v3947
    %v3949 = vsel %vm3946, %v3948, %v3944
    %v3950 = vmul.f32 0.0625, %v3949
    %v3952 = vsel %vm494, %v3950, 0
    %3954 = vmatpush.msra.mxu0 0.0
    %3955 = vmatpush.msra.mxu0 0.0
    %3956 = vmatpush.msra.mxu0 0.0
    %3957 = vmatpush.msra.mxu0 0.0
    %3958 = vmatpush.msra.mxu0 0.0
    %3959 = vmatpush.msra.mxu0 0.0
    %3960 = vmatpush.msra.mxu0 0.0
    %3961 = vmatpush.msra.mxu0 0.0
    %3962 = vmatpush.msra.mxu0 0.0
    %3963 = vmatpush.msra.mxu0 0.0
    %3964 = vmatpush.msra.mxu0 0.0
    %3965 = vmatpush.msra.mxu0 0.0
    %3966 = vmatpush.msra.mxu0 0.0
    %3967 = vmatpush.msra.mxu0 0.0
    %3968 = vmatpush.msra.mxu0 %v491
    %3969 = vmatpush.msra.mxu0 %v487
    %3970 = vmatmul.f32.gmra.mxu0 %v3952
    %v3971 = vpop.f32.mrf.mxu0
    %v3972 = vadd.f32 1e-16, %v3971
    %3973 = vdwg.mxu0
    %3974 = vmatpush.msra.mxu0 0.0
    %3975 = vmatpush.msra.mxu0 0.0
    %3976 = vmatpush.msra.mxu0 0.0
    %3977 = vmatpush.msra.mxu0 0.0
    %3978 = vmatpush.msra.mxu0 0.0
    %3979 = vmatpush.msra.mxu0 0.0
    %3980 = vmatpush.msra.mxu0 0.0
    %3981 = vmatpush.msra.mxu0 0.0
    %3982 = vmatpush.msra.mxu0 0.0
    %3983 = vmatpush.msra.mxu0 0.0
    %3984 = vmatpush.msra.mxu0 0.0
    %3985 = vmatpush.msra.mxu0 0.0
    %3986 = vmatpush.msra.mxu0 0.0
    %3987 = vmatpush.msra.mxu0 0.0
    %3988 = vmatpush.msra.mxu0 %v493
    %3989 = vmatpush.msra.mxu0 %v489
    %3990 = vmatmul.f32.gmra.mxu0 %v3952
    %v3991 = vpop.f32.mrf.mxu0
    %v3992 = vadd.f32 1e-16, %v3991
    %3993 = vdwg.mxu0
    %v3994 = vrcp.pop %v3972
    %v3995 = vmul.f32 %v3972, %v3994
    %v3996 = vsub.f32 1.0, %v3995
    %v3997 = vmul.f32 %v3994, %v3996
    %v3998 = vadd.f32 %v3994, %v3997
    %vm3999 = vweird.f32 %v3972
    %vm4000 = vweird.f32 %v3994
    %vm4001 = vmor %vm3999, %vm4000
    %v4002 = vsel %vm4001, %v3994, %v3998
    %v4003 = vand.u32 2147483647, %v3972
    %vm4004 = vcmp.eq.f32.partialorder %v4003, 8.507059e+37
    %v4005 = vand.u32 %v3972, 2147483648
    %v4006 = vor.u32 1.1754944e-38, %v4005
    %v4007 = vsel %vm4004, %v4006, %v4002
    %v4008 = vmul.f32 0.00390625, %v4007
    %v4009 = vrcp.pop %v3992
    %v4010 = vmul.f32 %v3992, %v4009
    %v4011 = vsub.f32 1.0, %v4010
    %v4012 = vmul.f32 %v4009, %v4011
    %v4013 = vadd.f32 %v4009, %v4012
    %vm4014 = vweird.f32 %v3992
    %vm4015 = vweird.f32 %v4009
    %vm4016 = vmor %vm4014, %vm4015
    %v4017 = vsel %vm4016, %v4009, %v4013
    %v4018 = vand.u32 2147483647, %v3992
    %vm4019 = vcmp.eq.f32.partialorder %v4018, 8.507059e+37
    %v4020 = vand.u32 %v3992, 2147483648
    %v4021 = vor.u32 1.1754944e-38, %v4020
    %v4022 = vsel %vm4019, %v4021, %v4017
    %v4023 = vmul.f32 0.00390625, %v4022
    %4024 = vmatpush.xpose.msra.mxu0 0.0
    %4025 = vmatpush.xpose.msra.mxu0 0.0
    %4026 = vmatpush.xpose.msra.mxu0 0.0
    %4027 = vmatpush.xpose.msra.mxu0 0.0
    %4028 = vmatpush.xpose.msra.mxu0 0.0
    %4029 = vmatpush.xpose.msra.mxu0 0.0
    %4030 = vmatpush.xpose.msra.mxu0 0.0
    %4031 = vmatpush.xpose.msra.mxu0 0.0
    %4032 = vmatpush.xpose.msra.mxu0 0.0
    %4033 = vmatpush.xpose.msra.mxu0 0.0
    %4034 = vmatpush.xpose.msra.mxu0 0.0
    %4035 = vmatpush.xpose.msra.mxu0 0.0
    %4036 = vmatpush.xpose.msra.mxu0 0.0
    %4037 = vmatpush.xpose.msra.mxu0 0.0
    %4038 = vmatpush.xpose.msra.mxu0 %v491
    %4039 = vmatpush.xpose.msra.mxu0 %v487
    %4040 = vmatmul.f32.gmra.mxu0 %v4008
    %v4041 = vpop.f32.mrf.mxu0
    %v4042 = vadd.f32 1e-16, %v4041
    %4043 = vdwg.mxu0
    %4044 = vmatpush.xpose.msra.mxu0 0.0
    %4045 = vmatpush.xpose.msra.mxu0 0.0
    %4046 = vmatpush.xpose.msra.mxu0 0.0
    %4047 = vmatpush.xpose.msra.mxu0 0.0
    %4048 = vmatpush.xpose.msra.mxu0 0.0
    %4049 = vmatpush.xpose.msra.mxu0 0.0
    %4050 = vmatpush.xpose.msra.mxu0 0.0
    %4051 = vmatpush.xpose.msra.mxu0 0.0
    %4052 = vmatpush.xpose.msra.mxu0 0.0
    %4053 = vmatpush.xpose.msra.mxu0 0.0
    %4054 = vmatpush.xpose.msra.mxu0 0.0
    %4055 = vmatpush.xpose.msra.mxu0 0.0
    %4056 = vmatpush.xpose.msra.mxu0 0.0
    %4057 = vmatpush.xpose.msra.mxu0 0.0
    %4058 = vmatpush.xpose.msra.mxu0 %v493
    %4059 = vmatpush.xpose.msra.mxu0 %v489
    %4060 = vmatmul.f32.gmra.mxu0 %v4023
    %v4061 = vpop.f32.mrf.mxu0
    %v4062 = vadd.f32 %v4042, %v4061
    %4063 = vdwg.mxu0
    %v4064 = vrcp.pop %v4062
    %v4065 = vmul.f32 %v4062, %v4064
    %v4066 = vsub.f32 1.0, %v4065
    %v4067 = vmul.f32 %v4064, %v4066
    %v4068 = vadd.f32 %v4064, %v4067
    %vm4069 = vweird.f32 %v4062
    %vm4070 = vweird.f32 %v4064
    %vm4071 = vmor %vm4069, %vm4070
    %v4072 = vsel %vm4071, %v4064, %v4068
    %v4073 = vand.u32 2147483647, %v4062
    %vm4074 = vcmp.eq.f32.partialorder %v4073, 8.507059e+37
    %v4075 = vand.u32 %v4062, 2147483648
    %v4076 = vor.u32 1.1754944e-38, %v4075
    %v4077 = vsel %vm4074, %v4076, %v4072
    %v4078 = vmul.f32 0.0625, %v4077
    %v4080 = vsel %vm494, %v4078, 0
    %4082 = vmatpush.msra.mxu0 0.0
    %4083 = vmatpush.msra.mxu0 0.0
    %4084 = vmatpush.msra.mxu0 0.0
    %4085 = vmatpush.msra.mxu0 0.0
    %4086 = vmatpush.msra.mxu0 0.0
    %4087 = vmatpush.msra.mxu0 0.0
    %4088 = vmatpush.msra.mxu0 0.0
    %4089 = vmatpush.msra.mxu0 0.0
    %4090 = vmatpush.msra.mxu0 0.0
    %4091 = vmatpush.msra.mxu0 0.0
    %4092 = vmatpush.msra.mxu0 0.0
    %4093 = vmatpush.msra.mxu0 0.0
    %4094 = vmatpush.msra.mxu0 0.0
    %4095 = vmatpush.msra.mxu0 0.0
    %4096 = vmatpush.msra.mxu0 %v491
    %4097 = vmatpush.msra.mxu0 %v487
    %4098 = vmatmul.f32.gmra.mxu0 %v4080
    %v4099 = vpop.f32.mrf.mxu0
    %v4100 = vadd.f32 1e-16, %v4099
    %4101 = vdwg.mxu0
    %4102 = vmatpush.msra.mxu0 0.0
    %4103 = vmatpush.msra.mxu0 0.0
    %4104 = vmatpush.msra.mxu0 0.0
    %4105 = vmatpush.msra.mxu0 0.0
    %4106 = vmatpush.msra.mxu0 0.0
    %4107 = vmatpush.msra.mxu0 0.0
    %4108 = vmatpush.msra.mxu0 0.0
    %4109 = vmatpush.msra.mxu0 0.0
    %4110 = vmatpush.msra.mxu0 0.0
    %4111 = vmatpush.msra.mxu0 0.0
    %4112 = vmatpush.msra.mxu0 0.0
    %4113 = vmatpush.msra.mxu0 0.0
    %4114 = vmatpush.msra.mxu0 0.0
    %4115 = vmatpush.msra.mxu0 0.0
    %4116 = vmatpush.msra.mxu0 %v493
    %4117 = vmatpush.msra.mxu0 %v489
    %4118 = vmatmul.f32.gmra.mxu0 %v4080
    %v4119 = vpop.f32.mrf.mxu0
    %v4120 = vadd.f32 1e-16, %v4119
    %4121 = vdwg.mxu0
    %v4122 = vrcp.pop %v4100
    %v4123 = vmul.f32 %v4100, %v4122
    %v4124 = vsub.f32 1.0, %v4123
    %v4125 = vmul.f32 %v4122, %v4124
    %v4126 = vadd.f32 %v4122, %v4125
    %vm4127 = vweird.f32 %v4100
    %vm4128 = vweird.f32 %v4122
    %vm4129 = vmor %vm4127, %vm4128
    %v4130 = vsel %vm4129, %v4122, %v4126
    %v4131 = vand.u32 2147483647, %v4100
    %vm4132 = vcmp.eq.f32.partialorder %v4131, 8.507059e+37
    %v4133 = vand.u32 %v4100, 2147483648
    %v4134 = vor.u32 1.1754944e-38, %v4133
    %v4135 = vsel %vm4132, %v4134, %v4130
    %v4136 = vmul.f32 0.00390625, %v4135
    %v4137 = vrcp.pop %v4120
    %v4138 = vmul.f32 %v4120, %v4137
    %v4139 = vsub.f32 1.0, %v4138
    %v4140 = vmul.f32 %v4137, %v4139
    %v4141 = vadd.f32 %v4137, %v4140
    %vm4142 = vweird.f32 %v4120
    %vm4143 = vweird.f32 %v4137
    %vm4144 = vmor %vm4142, %vm4143
    %v4145 = vsel %vm4144, %v4137, %v4141
    %v4146 = vand.u32 2147483647, %v4120
    %vm4147 = vcmp.eq.f32.partialorder %v4146, 8.507059e+37
    %v4148 = vand.u32 %v4120, 2147483648
    %v4149 = vor.u32 1.1754944e-38, %v4148
    %v4150 = vsel %vm4147, %v4149, %v4145
    %v4151 = vmul.f32 0.00390625, %v4150
    %4152 = vmatpush.xpose.msra.mxu0 0.0
    %4153 = vmatpush.xpose.msra.mxu0 0.0
    %4154 = vmatpush.xpose.msra.mxu0 0.0
    %4155 = vmatpush.xpose.msra.mxu0 0.0
    %4156 = vmatpush.xpose.msra.mxu0 0.0
    %4157 = vmatpush.xpose.msra.mxu0 0.0
    %4158 = vmatpush.xpose.msra.mxu0 0.0
    %4159 = vmatpush.xpose.msra.mxu0 0.0
    %4160 = vmatpush.xpose.msra.mxu0 0.0
    %4161 = vmatpush.xpose.msra.mxu0 0.0
    %4162 = vmatpush.xpose.msra.mxu0 0.0
    %4163 = vmatpush.xpose.msra.mxu0 0.0
    %4164 = vmatpush.xpose.msra.mxu0 0.0
    %4165 = vmatpush.xpose.msra.mxu0 0.0
    %4166 = vmatpush.xpose.msra.mxu0 %v491
    %4167 = vmatpush.xpose.msra.mxu0 %v487
    %4168 = vmatmul.f32.gmra.mxu0 %v4136
    %v4169 = vpop.f32.mrf.mxu0
    %v4170 = vadd.f32 1e-16, %v4169
    %4171 = vdwg.mxu0
    %4172 = vmatpush.xpose.msra.mxu0 0.0
    %4173 = vmatpush.xpose.msra.mxu0 0.0
    %4174 = vmatpush.xpose.msra.mxu0 0.0
    %4175 = vmatpush.xpose.msra.mxu0 0.0
    %4176 = vmatpush.xpose.msra.mxu0 0.0
    %4177 = vmatpush.xpose.msra.mxu0 0.0
    %4178 = vmatpush.xpose.msra.mxu0 0.0
    %4179 = vmatpush.xpose.msra.mxu0 0.0
    %4180 = vmatpush.xpose.msra.mxu0 0.0
    %4181 = vmatpush.xpose.msra.mxu0 0.0
    %4182 = vmatpush.xpose.msra.mxu0 0.0
    %4183 = vmatpush.xpose.msra.mxu0 0.0
    %4184 = vmatpush.xpose.msra.mxu0 0.0
    %4185 = vmatpush.xpose.msra.mxu0 0.0
    %4186 = vmatpush.xpose.msra.mxu0 %v493
    %4187 = vmatpush.xpose.msra.mxu0 %v489
    %4188 = vmatmul.f32.gmra.mxu0 %v4151
    %v4189 = vpop.f32.mrf.mxu0
    %v4190 = vadd.f32 %v4170, %v4189
    %4191 = vdwg.mxu0
    %v4192 = vrcp.pop %v4190
    %v4193 = vmul.f32 %v4190, %v4192
    %v4194 = vsub.f32 1.0, %v4193
    %v4195 = vmul.f32 %v4192, %v4194
    %v4196 = vadd.f32 %v4192, %v4195
    %vm4197 = vweird.f32 %v4190
    %vm4198 = vweird.f32 %v4192
    %vm4199 = vmor %vm4197, %vm4198
    %v4200 = vsel %vm4199, %v4192, %v4196
    %v4201 = vand.u32 2147483647, %v4190
    %vm4202 = vcmp.eq.f32.partialorder %v4201, 8.507059e+37
    %v4203 = vand.u32 %v4190, 2147483648
    %v4204 = vor.u32 1.1754944e-38, %v4203
    %v4205 = vsel %vm4202, %v4204, %v4200
    %v4206 = vmul.f32 0.0625, %v4205
    %v4208 = vsel %vm494, %v4206, 0
    %4210 = vmatpush.msra.mxu0 0.0
    %4211 = vmatpush.msra.mxu0 0.0
    %4212 = vmatpush.msra.mxu0 0.0
    %4213 = vmatpush.msra.mxu0 0.0
    %4214 = vmatpush.msra.mxu0 0.0
    %4215 = vmatpush.msra.mxu0 0.0
    %4216 = vmatpush.msra.mxu0 0.0
    %4217 = vmatpush.msra.mxu0 0.0
    %4218 = vmatpush.msra.mxu0 0.0
    %4219 = vmatpush.msra.mxu0 0.0
    %4220 = vmatpush.msra.mxu0 0.0
    %4221 = vmatpush.msra.mxu0 0.0
    %4222 = vmatpush.msra.mxu0 0.0
    %4223 = vmatpush.msra.mxu0 0.0
    %4224 = vmatpush.msra.mxu0 %v491
    %4225 = vmatpush.msra.mxu0 %v487
    %4226 = vmatmul.f32.gmra.mxu0 %v4208
    %v4227 = vpop.f32.mrf.mxu0
    %v4228 = vadd.f32 1e-16, %v4227
    %4229 = vdwg.mxu0
    %4230 = vmatpush.msra.mxu0 0.0
    %4231 = vmatpush.msra.mxu0 0.0
    %4232 = vmatpush.msra.mxu0 0.0
    %4233 = vmatpush.msra.mxu0 0.0
    %4234 = vmatpush.msra.mxu0 0.0
    %4235 = vmatpush.msra.mxu0 0.0
    %4236 = vmatpush.msra.mxu0 0.0
    %4237 = vmatpush.msra.mxu0 0.0
    %4238 = vmatpush.msra.mxu0 0.0
    %4239 = vmatpush.msra.mxu0 0.0
    %4240 = vmatpush.msra.mxu0 0.0
    %4241 = vmatpush.msra.mxu0 0.0
    %4242 = vmatpush.msra.mxu0 0.0
    %4243 = vmatpush.msra.mxu0 0.0
    %4244 = vmatpush.msra.mxu0 %v493
    %4245 = vmatpush.msra.mxu0 %v489
    %4246 = vmatmul.f32.gmra.mxu0 %v4208
    %v4247 = vpop.f32.mrf.mxu0
    %v4248 = vadd.f32 1e-16, %v4247
    %4249 = vdwg.mxu0
    %v4250 = vrcp.pop %v4228
    %v4251 = vmul.f32 %v4228, %v4250
    %v4252 = vsub.f32 1.0, %v4251
    %v4253 = vmul.f32 %v4250, %v4252
    %v4254 = vadd.f32 %v4250, %v4253
    %vm4255 = vweird.f32 %v4228
    %vm4256 = vweird.f32 %v4250
    %vm4257 = vmor %vm4255, %vm4256
    %v4258 = vsel %vm4257, %v4250, %v4254
    %v4259 = vand.u32 2147483647, %v4228
    %vm4260 = vcmp.eq.f32.partialorder %v4259, 8.507059e+37
    %v4261 = vand.u32 %v4228, 2147483648
    %v4262 = vor.u32 1.1754944e-38, %v4261
    %v4263 = vsel %vm4260, %v4262, %v4258
    %v4264 = vmul.f32 0.00390625, %v4263
    %v4265 = vrcp.pop %v4248
    %v4266 = vmul.f32 %v4248, %v4265
    %v4267 = vsub.f32 1.0, %v4266
    %v4268 = vmul.f32 %v4265, %v4267
    %v4269 = vadd.f32 %v4265, %v4268
    %vm4270 = vweird.f32 %v4248
    %vm4271 = vweird.f32 %v4265
    %vm4272 = vmor %vm4270, %vm4271
    %v4273 = vsel %vm4272, %v4265, %v4269
    %v4274 = vand.u32 2147483647, %v4248
    %vm4275 = vcmp.eq.f32.partialorder %v4274, 8.507059e+37
    %v4276 = vand.u32 %v4248, 2147483648
    %v4277 = vor.u32 1.1754944e-38, %v4276
    %v4278 = vsel %vm4275, %v4277, %v4273
    %v4279 = vmul.f32 0.00390625, %v4278
    %4280 = vmatpush.xpose.msra.mxu0 0.0
    %4281 = vmatpush.xpose.msra.mxu0 0.0
    %4282 = vmatpush.xpose.msra.mxu0 0.0
    %4283 = vmatpush.xpose.msra.mxu0 0.0
    %4284 = vmatpush.xpose.msra.mxu0 0.0
    %4285 = vmatpush.xpose.msra.mxu0 0.0
    %4286 = vmatpush.xpose.msra.mxu0 0.0
    %4287 = vmatpush.xpose.msra.mxu0 0.0
    %4288 = vmatpush.xpose.msra.mxu0 0.0
    %4289 = vmatpush.xpose.msra.mxu0 0.0
    %4290 = vmatpush.xpose.msra.mxu0 0.0
    %4291 = vmatpush.xpose.msra.mxu0 0.0
    %4292 = vmatpush.xpose.msra.mxu0 0.0
    %4293 = vmatpush.xpose.msra.mxu0 0.0
    %4294 = vmatpush.xpose.msra.mxu0 %v491
    %4295 = vmatpush.xpose.msra.mxu0 %v487
    %4296 = vmatmul.f32.gmra.mxu0 %v4264
    %v4297 = vpop.f32.mrf.mxu0
    %v4298 = vadd.f32 1e-16, %v4297
    %4299 = vdwg.mxu0
    %4300 = vmatpush.xpose.msra.mxu0 0.0
    %4301 = vmatpush.xpose.msra.mxu0 0.0
    %4302 = vmatpush.xpose.msra.mxu0 0.0
    %4303 = vmatpush.xpose.msra.mxu0 0.0
    %4304 = vmatpush.xpose.msra.mxu0 0.0
    %4305 = vmatpush.xpose.msra.mxu0 0.0
    %4306 = vmatpush.xpose.msra.mxu0 0.0
    %4307 = vmatpush.xpose.msra.mxu0 0.0
    %4308 = vmatpush.xpose.msra.mxu0 0.0
    %4309 = vmatpush.xpose.msra.mxu0 0.0
    %4310 = vmatpush.xpose.msra.mxu0 0.0
    %4311 = vmatpush.xpose.msra.mxu0 0.0
    %4312 = vmatpush.xpose.msra.mxu0 0.0
    %4313 = vmatpush.xpose.msra.mxu0 0.0
    %4314 = vmatpush.xpose.msra.mxu0 %v493
    %4315 = vmatpush.xpose.msra.mxu0 %v489
    %4316 = vmatmul.f32.gmra.mxu0 %v4279
    %v4317 = vpop.f32.mrf.mxu0
    %v4318 = vadd.f32 %v4298, %v4317
    %4319 = vdwg.mxu0
    %v4320 = vrcp.pop %v4318
    %v4321 = vmul.f32 %v4318, %v4320
    %v4322 = vsub.f32 1.0, %v4321
    %v4323 = vmul.f32 %v4320, %v4322
    %v4324 = vadd.f32 %v4320, %v4323
    %vm4325 = vweird.f32 %v4318
    %vm4326 = vweird.f32 %v4320
    %vm4327 = vmor %vm4325, %vm4326
    %v4328 = vsel %vm4327, %v4320, %v4324
    %v4329 = vand.u32 2147483647, %v4318
    %vm4330 = vcmp.eq.f32.partialorder %v4329, 8.507059e+37
    %v4331 = vand.u32 %v4318, 2147483648
    %v4332 = vor.u32 1.1754944e-38, %v4331
    %v4333 = vsel %vm4330, %v4332, %v4328
    %v4334 = vmul.f32 0.0625, %v4333
    %v4335 = vmul.f32 %v487, %v387
    %v4336 = vmul.f32 %v489, %v388
    %v4337 = vmul.f32 %v491, %v389
    %v4338 = vmul.f32 %v493, %v390
    %v4340 = vsel %vm494, %v4334, 0
    %4342 = vmatpush.msra.mxu0 0.0
    %4343 = vmatpush.msra.mxu0 0.0
    %4344 = vmatpush.msra.mxu0 0.0
    %4345 = vmatpush.msra.mxu0 0.0
    %4346 = vmatpush.msra.mxu0 0.0
    %4347 = vmatpush.msra.mxu0 0.0
    %4348 = vmatpush.msra.mxu0 0.0
    %4349 = vmatpush.msra.mxu0 0.0
    %4350 = vmatpush.msra.mxu0 0.0
    %4351 = vmatpush.msra.mxu0 0.0
    %4352 = vmatpush.msra.mxu0 0.0
    %4353 = vmatpush.msra.mxu0 0.0
    %4354 = vmatpush.msra.mxu0 0.0
    %4355 = vmatpush.msra.mxu0 0.0
    %4356 = vmatpush.msra.mxu0 %v4337
    %4357 = vmatpush.msra.mxu0 %v4335
    %4358 = vmatmul.f32.gmra.mxu0 %v4340
    %v4359 = vpop.f32.mrf.mxu0
    %v4360 = vadd.f32 0.0, %v4359
    %4361 = vdwg.mxu0
    %4362 = vmatpush.msra.mxu0 0.0
    %4363 = vmatpush.msra.mxu0 0.0
    %4364 = vmatpush.msra.mxu0 0.0
    %4365 = vmatpush.msra.mxu0 0.0
    %4366 = vmatpush.msra.mxu0 0.0
    %4367 = vmatpush.msra.mxu0 0.0
    %4368 = vmatpush.msra.mxu0 0.0
    %4369 = vmatpush.msra.mxu0 0.0
    %4370 = vmatpush.msra.mxu0 0.0
    %4371 = vmatpush.msra.mxu0 0.0
    %4372 = vmatpush.msra.mxu0 0.0
    %4373 = vmatpush.msra.mxu0 0.0
    %4374 = vmatpush.msra.mxu0 0.0
    %4375 = vmatpush.msra.mxu0 0.0
    %4376 = vmatpush.msra.mxu0 %v4338
    %4377 = vmatpush.msra.mxu0 %v4336
    %4378 = vmatmul.f32.gmra.mxu0 %v4340
    %v4379 = vpop.f32.mrf.mxu0
    %v4380 = vadd.f32 0.0, %v4379
    %4381 = vdwg.mxu0
    %v4382 = vmul.f32 %v4360, %v4264
    %v4383 = vmul.f32 %v4380, %v4279
    %vm4384 = vcmask 1040384
    %v4385 = vsel %vm4384, %v4382, 0.0
    %v4386 = vsel %vm4384, %v4383, 0.0
    %v4387 = vadd.f32 %v4385, %v4386
    %4388 = vadd.xlane.f32.xlu0 %v4387
    %v4389 = vpop.xlane.xlu0 %4388
    %v4390 = vmul.f32 %v4389, 100.0
    %v4391 = vperm.slane %v4390, 0
    %v4392 = vadd.f32 %v4391, 0.0
    %4393 = vst [vmem:[#allocation4] sm:$0xff] %v4392
    // Predicated region
    $region10: #{tpu_custom_call.1} parent=1 // pred_check
      _
    $region11: #{tpu_custom_call.1} parent=1 // pred_check_branch
      %4395 = sbr.rel (0) target = $region13
    $region12: #{tpu_custom_call.1} parent=1 // pred_region
      %4397 = vsyncadd [#allocation3], 0
      %s4398 = sshll.u32 [#allocation2], 4
      %s4399 = int_to_ptr.vmem [resolvable:$true] %s4398
      %s4400 = sshll.u32 %s2, 4
      %s4401 = int_to_ptr.hbm [resolvable:$true] %s4400
      %4406 = dma.vmem_to_hbm [thread:$0]  %s4399, 256, %s4401, [#allocation3], 128, 128, 8
    $region13: #{tpu_custom_call.1} parent=1 // pred_fallthru
      _
    // Predicated region
    $region14: #{tpu_custom_call.1} parent=1 // pred_check
      _
    $region15: #{tpu_custom_call.1} parent=1 // pred_check_branch
      %4408 = sbr.rel (0) target = $region17
    $region16: #{tpu_custom_call.1} parent=1 // pred_region
      %4410 = vsyncadd [#allocation5], 0
      %s4412 = sshll.u32 [#allocation4], 4
      %s4413 = int_to_ptr.vmem [resolvable:$true] %s4412
      %s4414 = sshll.u32 %s3, 4
      %s4415 = int_to_ptr.hbm [resolvable:$true] %s4414
      %4417 = dma.vmem_to_hbm [thread:$0]  %s4413, 128, %s4415, [#allocation5]
    $region17: #{tpu_custom_call.1} parent=1 // pred_fallthru
      _
    // Predicated region
    $region18: #{tpu_custom_call.1} parent=1 // pred_check
      _
    $region19: #{tpu_custom_call.1} parent=1 // pred_check_branch
      %4419 = sbr.rel (0) target = $region21
    $region20: #{tpu_custom_call.1} parent=1 // pred_region
      %4421 = dma.done [#allocation3], 256
    $region21: #{tpu_custom_call.1} parent=1 // pred_fallthru
      _
    // Predicated region
    $region22: #{tpu_custom_call.1} parent=1 // pred_check
      _
    $region23: #{tpu_custom_call.1} parent=1 // pred_check_branch
      %4423 = sbr.rel (0) target = $region25
    $region24: #{tpu_custom_call.1} parent=1 // pred_region
      %4425 = dma.done [#allocation5], 128
    $region25: #{tpu_custom_call.1} parent=1 // pred_fallthru
      _
    %4426 = vsyncpa [#allocation3], 1
    %4427 = vsyncpa [#allocation5], 1

</llo_original>
